<compile_context>
chip_gen: v7x
topology: tpu7x:2x2x1
jax: 0.10.0
libtpu: 0.0.40
codegen_flags: <defaults>
</compile_context>

<pallas_src>
import functools

import jax
import jax.numpy as jnp
from jax import lax
from jax.experimental import pallas as pl
from jax.experimental.pallas import tpu as pltpu

B = 2          # batch
T = 20         # num_frames (hard-wired to 20 by the reshape in AttentionBase.forward)
F_IN = 10      # AttentionBase num_inputs
E = 11         # num_inputs + 1 == num_outputs (embed dim of attention block)
H = 32         # LSTM hidden size / MLP width
A = 4          # action dim of the MLP policy head
EPS = 1e-5     # LayerNorm eps (PyTorch default)
G = 4 * H      # LSTM gate width


def _layernorm(x, w, b):
    mu = jnp.mean(x, axis=-1, keepdims=True)
    var = jnp.mean((x - mu) ** 2, axis=-1, keepdims=True)
    return (x - mu) * lax.rsqrt(var + EPS) * w + b


def policy_kernel(
    x_ref,          # (B*T, E) pos-augmented state, TIME-major rows (row = t*B + b)
    attn_ref,       # (3E+7, 3E)  packed attention params
    lstm_ref,       # (E+1+H, 4H) packed LSTM params (w_ih | b_ih+b_hh | w_hh)
    mlp_ref,        # (3H+3, H)   packed MLP / head params
    out_ref,        # (B, 2A): [mean | std]
    gates_ref,      # VMEM scratch (B*T, 4H): time-major LSTM gate slab
    *, batch,
):
    f32 = jnp.float32
    n = batch * T
    x = x_ref[...]                                                    # (n, E)

    # ---- unpack packed parameter slabs (static slices, loaded once) ----
    r = 0
    wqkv = attn_ref[r:r + E, :];        r += E                        # (E, 3E)
    bqkv = attn_ref[r:r + 1, :];        r += 1                        # (1, 3E)
    wo   = attn_ref[r:r + E, 0:E];      r += E
    bo   = attn_ref[r:r + 1, 0:E];      r += 1
    ln1w = attn_ref[r:r + 1, 0:E];      r += 1
    ln1b = attn_ref[r:r + 1, 0:E];      r += 1
    wp   = attn_ref[r:r + E, 0:E];      r += E
    bp   = attn_ref[r:r + 1, 0:E];      r += 1
    ln2w = attn_ref[r:r + 1, 0:E];      r += 1
    ln2b = attn_ref[r:r + 1, 0:E];      r += 1

    w_ih = lstm_ref[0:E, :]                                           # (E, 4H)
    b_l  = lstm_ref[E:E + 1, :]                                       # (1, 4H)
    w_hh = lstm_ref[E + 1:E + 1 + H, :]                               # (H, 4H) hoisted

    r = 0
    w1 = mlp_ref[r:r + H, :];           r += H
    b1 = mlp_ref[r:r + 1, :];           r += 1
    w2 = mlp_ref[r:r + H, :];           r += H
    b2 = mlp_ref[r:r + 1, :];           r += 1
    wh = mlp_ref[r:r + H, 0:2 * A];     r += H
    bh = mlp_ref[r:r + 1, 0:2 * A];     r += 1

    # ---- attention front-end: one fused (n, E) @ (E, 3E) projection ----
    qkv = jnp.dot(x, wqkv, preferred_element_type=f32) + bqkv         # (n, 3E)
    q = qkv[:, 0:E]
    k = qkv[:, E:2 * E]
    v = qkv[:, 2 * E:3 * E]

    # single block-diagonal (same-batch) masked attention over all rows: both
    # batches share one score matmul, one softmax pass and one P@V matmul.
    scale = 1.0 / float(E) ** 0.5
    s = lax.dot_general(q, k, (((1,), (1,)), ((), ())),
                        preferred_element_type=f32) * scale           # (n, n)
    if batch > 1:
        ri = lax.broadcasted_iota(jnp.int32, (n, n), 0)
        ci = lax.broadcasted_iota(jnp.int32, (n, n), 1)
        same = lax.rem(ri, jnp.int32(batch)) == lax.rem(ci, jnp.int32(batch))
        s = jnp.where(same, s, -1e30)
    s = s - jnp.max(s, axis=-1, keepdims=True)
    p = jnp.exp(s)
    inv = pl.reciprocal(jnp.sum(p, axis=-1, keepdims=True), approx=True)
    ctx = jnp.dot(p * inv, v, preferred_element_type=f32)             # (n, E)

    ctx = jnp.dot(ctx, wo, preferred_element_type=f32) + bo
    ctx = _layernorm(ctx + x, ln1w, ln1b)
    lin = jnp.dot(ctx, wp, preferred_element_type=f32) + bp
    seq = _layernorm(ctx + lin, ln2w, ln2b)                           # (n, E)

    # ---- LSTM: input projection hoisted out of the time loop, staged in VMEM ----
    gates_ref[...] = jnp.dot(seq, w_ih, preferred_element_type=f32) + b_l  # (n, 4H)

    def step(t, carry):
        hb, cb = carry
        g_x = gates_ref[pl.ds(t * batch, batch), :]                   # (B, 4H) vld
        gates = g_x + jnp.dot(hb, w_hh, preferred_element_type=f32)
        sig = jax.nn.sigmoid(gates)          # one EUP pass over the full gate vreg
        i_g = sig[:, 0:H]
        f_g = sig[:, H:2 * H]
        g_g = jnp.tanh(gates[:, 2 * H:3 * H])
        o_g = sig[:, 3 * H:4 * H]
        cb = f_g * cb + i_g * g_g
        hb = o_g * jnp.tanh(cb)
        return hb, cb

    zeros = jnp.zeros((batch, H), f32)
    hb, _ = lax.fori_loop(0, T, step, (zeros, zeros), unroll=True)    # (B, H)

    # ---- MLP policy head (mean and log-std heads fused into one matmul) ----
    # TODO(synk): MLPPolicyModel source was not provided; implemented as the
    # standard mysac MLP policy: 2x (Linear+ReLU) -> mean head and clamped
    # log-std head, std = exp(clamp(log_std, -20, 2)).
    z = jnp.maximum(jnp.dot(hb, w1, preferred_element_type=f32) + b1, 0.0)
    z = jnp.maximum(jnp.dot(z, w2, preferred_element_type=f32) + b2, 0.0)
    head = jnp.dot(z, wh, preferred_element_type=f32) + bh            # (B, 2A)
    std_all = jnp.exp(jnp.clip(head, -20.0, 2.0))
    lane = lax.broadcasted_iota(jnp.int32, (batch, 2 * A), 1)
    out_ref[...] = jnp.where(lane >= A, std_all, head)


def init_params(key):
    ks = jax.random.split(key, 25)
    n = lambda k, shp, s=0.1: (jax.random.normal(k, shp, jnp.float32) * s)
    return dict(
        wq=n(ks[0], (E, E)), wk=n(ks[1], (E, E)), wv=n(ks[2], (E, E)),
        mha_w=n(ks[3], (E, 3 * E)), mha_b=n(ks[4], (1, 3 * E)),
        wo=n(ks[5], (E, E)), bo=n(ks[6], (1, E)),
        ln1_w=1.0 + n(ks[7], (1, E)), ln1_b=n(ks[8], (1, E)),
        wp=n(ks[9], (E, E)), bp=n(ks[10], (1, E)),
        ln2_w=1.0 + n(ks[11], (1, E)), ln2_b=n(ks[12], (1, E)),
        w_ih=n(ks[13], (E, 4 * H)), w_hh=n(ks[14], (H, 4 * H)),
        b_ih=n(ks[15], (1, 4 * H)), b_hh=n(ks[16], (1, 4 * H)),
        w1=n(ks[17], (H, H)), b1=n(ks[18], (1, H)),
        w2=n(ks[19], (H, H)), b2=n(ks[20], (1, H)),
        wm=n(ks[21], (H, A)), bm=n(ks[22], (1, A)),
        ws=n(ks[23], (H, A)), bs=n(ks[24], (1, A)),
    )


def _pack_rows(items, width):
    """Stack 2-D params row-wise into one (rows, width) slab (lane-padded)."""
    rows = []
    for a in items:
        a = a.astype(jnp.float32)
        if a.shape[1] < width:
            a = jnp.pad(a, ((0, 0), (0, width - a.shape[1])))
        rows.append(a)
    return jnp.concatenate(rows, axis=0)


@jax.jit
def policy_forward(state, params):
    # PolicyModel.forward: unsqueeze 2-D inputs, squeeze batch-1 outputs.
    if state.ndim == 2:
        state = state[None]
    batch = state.shape[0]
    f32 = jnp.float32

    # position "encoding": arange(T) * T appended as an extra feature column
    # (done on the host so the kernel never does a lane-dim concat).
    pos = (jnp.arange(T, dtype=f32) * float(T)).reshape(1, T, 1)
    x = jnp.concatenate(
        [state.astype(f32), jnp.broadcast_to(pos, (batch, T, 1))], axis=-1)
    # TIME-major rows (row = t*batch + b): keeps the LSTM gate slab contiguous
    # per step while leaving all row-wise linears unchanged.
    x_tm = jnp.swapaxes(x, 0, 1).reshape(T * batch, E)

    # fold the bias-free Q/K/V Linears into the MHA in_proj (exact; weights here
    # are stored input-major, i.e. y = x @ W).
    wi = params["mha_w"]
    w_qkv = jnp.concatenate([params["wq"] @ wi[:, 0:E],
                             params["wk"] @ wi[:, E:2 * E],
                             params["wv"] @ wi[:, 2 * E:3 * E]], axis=1)   # (E, 3E)
    b_lstm = params["b_ih"] + params["b_hh"]
    w_head = jnp.concatenate([params["wm"], params["ws"]], axis=1)         # (H, 2A)
    b_head = jnp.concatenate([params["bm"], params["bs"]], axis=1)         # (1, 2A)

    # pack the ~20 small params into 3 slabs -> 5 input DMAs total.
    attn_slab = _pack_rows([w_qkv, params["mha_b"], params["wo"], params["bo"],
                            params["ln1_w"], params["ln1_b"],
                            params["wp"], params["bp"],
                            params["ln2_w"], params["ln2_b"]], 3 * E)      # (40, 33)
    lstm_slab = _pack_rows([params["w_ih"], b_lstm, params["w_hh"]], G)    # (44, 128)
    mlp_slab = _pack_rows([params["w1"], params["b1"], params["w2"],
                           params["b2"], w_head, b_head], H)               # (99, 32)

    kernel = functools.partial(policy_kernel, batch=batch)
    out = pl.pallas_call(
        kernel,
        out_shape=jax.ShapeDtypeStruct((batch, 2 * A), jnp.float32),
        in_specs=[pl.BlockSpec(memory_space=pltpu.MemorySpace.VMEM)] * 4,
        out_specs=pl.BlockSpec(memory_space=pltpu.MemorySpace.VMEM),
        scratch_shapes=[pltpu.VMEM((batch * T, G), jnp.float32)],
    )(x_tm, attn_slab, lstm_slab, mlp_slab)

    mean = out[:, :A]
    std = out[:, A:]
    if batch == 1:
        mean = jnp.squeeze(mean, 0)
        std = jnp.squeeze(std, 0)
    return mean, std


if __name__ == "__main__":
    key = jax.random.PRNGKey(0)
    pkey, xkey = jax.random.split(key)
    params = init_params(pkey)
    state = jax.random.normal(xkey, (B, T, F_IN), jnp.float32)

    mean, std = policy_forward(state, params)
    jax.block_until_ready((mean, std))

    assert mean.shape == (B, A) and std.shape == (B, A)
    assert bool(jnp.all(jnp.isfinite(mean))) and bool(jnp.all(std > 0.0))
    print("KERNEL_OK")
</pallas_src>

<mosaic_0001>
module attributes {stable_mosaic.version = 11 : i64} {
  func.func @policy_kernel(%arg0: memref<40x11xf32, #tpu.memory_space<vmem>>, %arg1: memref<40x33xf32, #tpu.memory_space<vmem>>, %arg2: memref<44x128xf32, #tpu.memory_space<vmem>>, %arg3: memref<99x32xf32, #tpu.memory_space<vmem>>, %arg4: memref<2x8xf32, #tpu.memory_space<vmem>>, %arg5: memref<40x128xf32, #tpu.memory_space<vmem>>) attributes {dimension_semantics = [], scalar_prefetch = 0 : i64, scratch_operands = 1 : i64, tpu.core_type = #tpu.core_type<tc>} {
    %c0 = arith.constant 0 : index
    %c0_0 = arith.constant 0 : index
    %0 = vector.load %arg0[%c0, %c0_0] : memref<40x11xf32, #tpu.memory_space<vmem>>, vector<40x11xf32>
    %c0_1 = arith.constant 0 : index
    %c0_2 = arith.constant 0 : index
    %1 = vector.load %arg1[%c0_1, %c0_2] : memref<40x33xf32, #tpu.memory_space<vmem>>, vector<11x33xf32>
    %c11 = arith.constant 11 : index
    %c0_3 = arith.constant 0 : index
    %2 = vector.load %arg1[%c11, %c0_3] : memref<40x33xf32, #tpu.memory_space<vmem>>, vector<1x33xf32>
    %c12 = arith.constant 12 : index
    %c0_4 = arith.constant 0 : index
    %3 = vector.load %arg1[%c12, %c0_4] : memref<40x33xf32, #tpu.memory_space<vmem>>, vector<11x11xf32>
    %c23 = arith.constant 23 : index
    %c0_5 = arith.constant 0 : index
    %4 = vector.load %arg1[%c23, %c0_5] : memref<40x33xf32, #tpu.memory_space<vmem>>, vector<1x11xf32>
    %c24 = arith.constant 24 : index
    %c0_6 = arith.constant 0 : index
    %5 = vector.load %arg1[%c24, %c0_6] : memref<40x33xf32, #tpu.memory_space<vmem>>, vector<1x11xf32>
    %c25 = arith.constant 25 : index
    %c0_7 = arith.constant 0 : index
    %6 = vector.load %arg1[%c25, %c0_7] : memref<40x33xf32, #tpu.memory_space<vmem>>, vector<1x11xf32>
    %c26 = arith.constant 26 : index
    %c0_8 = arith.constant 0 : index
    %7 = vector.load %arg1[%c26, %c0_8] : memref<40x33xf32, #tpu.memory_space<vmem>>, vector<11x11xf32>
    %c37 = arith.constant 37 : index
    %c0_9 = arith.constant 0 : index
    %8 = vector.load %arg1[%c37, %c0_9] : memref<40x33xf32, #tpu.memory_space<vmem>>, vector<1x11xf32>
    %c38 = arith.constant 38 : index
    %c0_10 = arith.constant 0 : index
    %9 = vector.load %arg1[%c38, %c0_10] : memref<40x33xf32, #tpu.memory_space<vmem>>, vector<1x11xf32>
    %c39 = arith.constant 39 : index
    %c0_11 = arith.constant 0 : index
    %10 = vector.load %arg1[%c39, %c0_11] : memref<40x33xf32, #tpu.memory_space<vmem>>, vector<1x11xf32>
    %c0_12 = arith.constant 0 : index
    %c0_13 = arith.constant 0 : index
    %11 = vector.load %arg2[%c0_12, %c0_13] : memref<44x128xf32, #tpu.memory_space<vmem>>, vector<11x128xf32>
    %c11_14 = arith.constant 11 : index
    %c0_15 = arith.constant 0 : index
    %12 = vector.load %arg2[%c11_14, %c0_15] : memref<44x128xf32, #tpu.memory_space<vmem>>, vector<1x128xf32>
    %c12_16 = arith.constant 12 : index
    %c0_17 = arith.constant 0 : index
    %13 = vector.load %arg2[%c12_16, %c0_17] : memref<44x128xf32, #tpu.memory_space<vmem>>, vector<32x128xf32>
    %c0_18 = arith.constant 0 : index
    %c0_19 = arith.constant 0 : index
    %14 = vector.load %arg3[%c0_18, %c0_19] : memref<99x32xf32, #tpu.memory_space<vmem>>, vector<32x32xf32>
    %c32 = arith.constant 32 : index
    %c0_20 = arith.constant 0 : index
    %15 = vector.load %arg3[%c32, %c0_20] : memref<99x32xf32, #tpu.memory_space<vmem>>, vector<1x32xf32>
    %c33 = arith.constant 33 : index
    %c0_21 = arith.constant 0 : index
    %16 = vector.load %arg3[%c33, %c0_21] : memref<99x32xf32, #tpu.memory_space<vmem>>, vector<32x32xf32>
    %c65 = arith.constant 65 : index
    %c0_22 = arith.constant 0 : index
    %17 = vector.load %arg3[%c65, %c0_22] : memref<99x32xf32, #tpu.memory_space<vmem>>, vector<1x32xf32>
    %c66 = arith.constant 66 : index
    %c0_23 = arith.constant 0 : index
    %18 = vector.load %arg3[%c66, %c0_23] : memref<99x32xf32, #tpu.memory_space<vmem>>, vector<32x8xf32>
    %c98 = arith.constant 98 : index
    %c0_24 = arith.constant 0 : index
    %19 = vector.load %arg3[%c98, %c0_24] : memref<99x32xf32, #tpu.memory_space<vmem>>, vector<1x8xf32>
    %cst = arith.constant dense<0.000000e+00> : vector<40x33xf32>
    %20 = tpu.matmul %0, %1, %cst {dimension_numbers = #tpu.dot_dimension_numbers<[1], [0], [0], [1], [0, 0, 1, 1], [], []>} : vector<40x11xf32>, vector<11x33xf32>, vector<40x33xf32> -> vector<40x33xf32>
    %21 = vector.broadcast %2 : vector<1x33xf32> to vector<40x33xf32>
    %22 = arith.addf %20, %21 : vector<40x33xf32>
    %23 = vector.extract_strided_slice %22 {offsets = [0, 0], sizes = [40, 11], strides = [1, 1]} : vector<40x33xf32> to vector<40x11xf32>
    %24 = vector.extract_strided_slice %22 {offsets = [0, 11], sizes = [40, 11], strides = [1, 1]} : vector<40x33xf32> to vector<40x11xf32>
    %25 = vector.extract_strided_slice %22 {offsets = [0, 22], sizes = [40, 11], strides = [1, 1]} : vector<40x33xf32> to vector<40x11xf32>
    %cst_25 = arith.constant dense<0.000000e+00> : vector<40x40xf32>
    %26 = tpu.matmul %23, %24, %cst_25 {dimension_numbers = #tpu.dot_dimension_numbers<[1], [1], [0], [0], [0, 0, 1, 0], [], []>} : vector<40x11xf32>, vector<40x11xf32>, vector<40x40xf32> -> vector<40x40xf32>
    %cst_26 = arith.constant 0.301511347 : f32
    %27 = vector.broadcast %cst_26 : f32 to vector<40x40xf32>
    %28 = arith.mulf %26, %27 : vector<40x40xf32>
    %29 = tpu.iota {dimensions = array<i32: 0>} : vector<40x40xi32>
    %30 = tpu.iota {dimensions = array<i32: 1>} : vector<40x40xi32>
    %c2_i32 = arith.constant 2 : i32
    %31 = vector.broadcast %c2_i32 : i32 to vector<40x40xi32>
    %32 = arith.remsi %29, %31 : vector<40x40xi32>
    %c2_i32_27 = arith.constant 2 : i32
    %33 = vector.broadcast %c2_i32_27 : i32 to vector<40x40xi32>
    %34 = arith.remsi %30, %33 : vector<40x40xi32>
    %35 = arith.cmpi eq, %32, %34 : vector<40x40xi32>
    %cst_28 = arith.constant -1.000000e+30 : f32
    %36 = vector.broadcast %cst_28 : f32 to vector<40x40xf32>
    %37 = arith.select %35, %28, %36 : vector<40x40xi1>, vector<40x40xf32>
    %cst_29 = arith.constant dense<0xFF800000> : vector<40xf32>
    %38 = vector.multi_reduction <maximumf>, %37, %cst_29 [1] : vector<40x40xf32> to vector<40xf32>
    %39 = vector.shape_cast %38 : vector<40xf32> to vector<40x1xf32>
    %40 = vector.broadcast %39 : vector<40x1xf32> to vector<40x40xf32>
    %41 = arith.subf %37, %40 : vector<40x40xf32>
    %42 = math.exp %41 : vector<40x40xf32>
    %cst_30 = arith.constant dense<0.000000e+00> : vector<40xf32>
    %43 = vector.multi_reduction <add>, %42, %cst_30 [1] : vector<40x40xf32> to vector<40xf32>
    %44 = vector.shape_cast %43 : vector<40xf32> to vector<40x1xf32>
    %45 = tpu.reciprocal %44 {approx = true} : vector<40x1xf32> -> vector<40x1xf32>
    %46 = vector.broadcast %45 : vector<40x1xf32> to vector<40x40xf32>
    %47 = arith.mulf %42, %46 : vector<40x40xf32>
    %cst_31 = arith.constant dense<0.000000e+00> : vector<40x11xf32>
    %48 = tpu.matmul %47, %25, %cst_31 {dimension_numbers = #tpu.dot_dimension_numbers<[1], [0], [0], [1], [0, 0, 1, 1], [], []>} : vector<40x40xf32>, vector<40x11xf32>, vector<40x11xf32> -> vector<40x11xf32>
    %cst_32 = arith.constant dense<0.000000e+00> : vector<40x11xf32>
    %49 = tpu.matmul %48, %3, %cst_32 {dimension_numbers = #tpu.dot_dimension_numbers<[1], [0], [0], [1], [0, 0, 1, 1], [], []>} : vector<40x11xf32>, vector<11x11xf32>, vector<40x11xf32> -> vector<40x11xf32>
    %50 = vector.broadcast %4 : vector<1x11xf32> to vector<40x11xf32>
    %51 = arith.addf %49, %50 : vector<40x11xf32>
    %52 = arith.addf %51, %0 : vector<40x11xf32>
    %cst_33 = arith.constant dense<0.000000e+00> : vector<40xf32>
    %53 = vector.multi_reduction <add>, %52, %cst_33 [1] : vector<40x11xf32> to vector<40xf32>
    %54 = vector.shape_cast %53 : vector<40xf32> to vector<40x1xf32>
    %cst_34 = arith.constant 1.100000e+01 : f32
    %55 = vector.broadcast %cst_34 : f32 to vector<40x1xf32>
    %56 = arith.divf %54, %55 : vector<40x1xf32>
    %57 = vector.broadcast %56 : vector<40x1xf32> to vector<40x11xf32>
    %58 = arith.subf %52, %57 : vector<40x11xf32>
    %59 = arith.mulf %58, %58 : vector<40x11xf32>
    %cst_35 = arith.constant dense<0.000000e+00> : vector<40xf32>
    %60 = vector.multi_reduction <add>, %59, %cst_35 [1] : vector<40x11xf32> to vector<40xf32>
    %61 = vector.shape_cast %60 : vector<40xf32> to vector<40x1xf32>
    %cst_36 = arith.constant 1.100000e+01 : f32
    %62 = vector.broadcast %cst_36 : f32 to vector<40x1xf32>
    %63 = arith.divf %61, %62 : vector<40x1xf32>
    %64 = vector.broadcast %56 : vector<40x1xf32> to vector<40x11xf32>
    %65 = arith.subf %52, %64 : vector<40x11xf32>
    %cst_37 = arith.constant 9.99999974E-6 : f32
    %66 = vector.broadcast %cst_37 : f32 to vector<40x1xf32>
    %67 = arith.addf %63, %66 : vector<40x1xf32>
    %68 = math.rsqrt %67 : vector<40x1xf32>
    %69 = vector.broadcast %68 : vector<40x1xf32> to vector<40x11xf32>
    %70 = arith.mulf %65, %69 : vector<40x11xf32>
    %71 = vector.broadcast %5 : vector<1x11xf32> to vector<40x11xf32>
    %72 = arith.mulf %70, %71 : vector<40x11xf32>
    %73 = vector.broadcast %6 : vector<1x11xf32> to vector<40x11xf32>
    %74 = arith.addf %72, %73 : vector<40x11xf32>
    %cst_38 = arith.constant dense<0.000000e+00> : vector<40x11xf32>
    %75 = tpu.matmul %74, %7, %cst_38 {dimension_numbers = #tpu.dot_dimension_numbers<[1], [0], [0], [1], [0, 0, 1, 1], [], []>} : vector<40x11xf32>, vector<11x11xf32>, vector<40x11xf32> -> vector<40x11xf32>
    %76 = vector.broadcast %8 : vector<1x11xf32> to vector<40x11xf32>
    %77 = arith.addf %75, %76 : vector<40x11xf32>
    %78 = arith.addf %74, %77 : vector<40x11xf32>
    %cst_39 = arith.constant dense<0.000000e+00> : vector<40xf32>
    %79 = vector.multi_reduction <add>, %78, %cst_39 [1] : vector<40x11xf32> to vector<40xf32>
    %80 = vector.shape_cast %79 : vector<40xf32> to vector<40x1xf32>
    %cst_40 = arith.constant 1.100000e+01 : f32
    %81 = vector.broadcast %cst_40 : f32 to vector<40x1xf32>
    %82 = arith.divf %80, %81 : vector<40x1xf32>
    %83 = vector.broadcast %82 : vector<40x1xf32> to vector<40x11xf32>
    %84 = arith.subf %78, %83 : vector<40x11xf32>
    %85 = arith.mulf %84, %84 : vector<40x11xf32>
    %cst_41 = arith.constant dense<0.000000e+00> : vector<40xf32>
    %86 = vector.multi_reduction <add>, %85, %cst_41 [1] : vector<40x11xf32> to vector<40xf32>
    %87 = vector.shape_cast %86 : vector<40xf32> to vector<40x1xf32>
    %cst_42 = arith.constant 1.100000e+01 : f32
    %88 = vector.broadcast %cst_42 : f32 to vector<40x1xf32>
    %89 = arith.divf %87, %88 : vector<40x1xf32>
    %90 = vector.broadcast %82 : vector<40x1xf32> to vector<40x11xf32>
    %91 = arith.subf %78, %90 : vector<40x11xf32>
    %cst_43 = arith.constant 9.99999974E-6 : f32
    %92 = vector.broadcast %cst_43 : f32 to vector<40x1xf32>
    %93 = arith.addf %89, %92 : vector<40x1xf32>
    %94 = math.rsqrt %93 : vector<40x1xf32>
    %95 = vector.broadcast %94 : vector<40x1xf32> to vector<40x11xf32>
    %96 = arith.mulf %91, %95 : vector<40x11xf32>
    %97 = vector.broadcast %9 : vector<1x11xf32> to vector<40x11xf32>
    %98 = arith.mulf %96, %97 : vector<40x11xf32>
    %99 = vector.broadcast %10 : vector<1x11xf32> to vector<40x11xf32>
    %100 = arith.addf %98, %99 : vector<40x11xf32>
    %cst_44 = arith.constant dense<0.000000e+00> : vector<40x128xf32>
    %101 = tpu.matmul %100, %11, %cst_44 {dimension_numbers = #tpu.dot_dimension_numbers<[1], [0], [0], [1], [0, 0, 1, 1], [], []>} : vector<40x11xf32>, vector<11x128xf32>, vector<40x128xf32> -> vector<40x128xf32>
    %102 = vector.broadcast %12 : vector<1x128xf32> to vector<40x128xf32>
    %103 = arith.addf %101, %102 : vector<40x128xf32>
    %c0_45 = arith.constant 0 : index
    %c0_46 = arith.constant 0 : index
    %104 = vector.load %arg5[%c0_45, %c0_46] : memref<40x128xf32, #tpu.memory_space<vmem>>, vector<40x128xf32>
    tpu.vector_store %arg5[%c0_45, %c0_46], %103 {strides = array<i32>} : memref<40x128xf32, #tpu.memory_space<vmem>>, vector<40x128xf32>,
    %cst_47 = arith.constant 0.000000e+00 : f32
    %105 = vector.broadcast %cst_47 : f32 to vector<2x32xf32>
    %c0_i32 = arith.constant 0 : i32
    %c2_i32_48 = arith.constant 2 : i32
    %106 = arith.muli %c0_i32, %c2_i32_48 : i32
    %107 = arith.index_cast %106 : i32 to index
    %c0_49 = arith.constant 0 : index
    %108 = vector.load %arg5[%107, %c0_49] : memref<40x128xf32, #tpu.memory_space<vmem>>, vector<2x128xf32>
    %cst_50 = arith.constant dense<0.000000e+00> : vector<2x128xf32>
    %109 = tpu.matmul %105, %13, %cst_50 {dimension_numbers = #tpu.dot_dimension_numbers<[1], [0], [0], [1], [0, 0, 1, 1], [], []>} : vector<2x32xf32>, vector<32x128xf32>, vector<2x128xf32> -> vector<2x128xf32>
    %110 = arith.addf %108, %109 : vector<2x128xf32>
    %111 = arith.negf %110 : vector<2x128xf32>
    %112 = math.exp %111 : vector<2x128xf32>
    %cst_51 = arith.constant 1.000000e+00 : f32
    %113 = vector.broadcast %cst_51 : f32 to vector<2x128xf32>
    %114 = arith.addf %113, %112 : vector<2x128xf32>
    %115 = arith.divf %113, %114 : vector<2x128xf32>
    %116 = vector.extract_strided_slice %115 {offsets = [0, 0], sizes = [2, 32], strides = [1, 1]} : vector<2x128xf32> to vector<2x32xf32>
    %117 = vector.extract_strided_slice %115 {offsets = [0, 32], sizes = [2, 32], strides = [1, 1]} : vector<2x128xf32> to vector<2x32xf32>
    %118 = vector.extract_strided_slice %110 {offsets = [0, 64], sizes = [2, 32], strides = [1, 1]} : vector<2x128xf32> to vector<2x32xf32>
    %119 = math.tanh %118 : vector<2x32xf32>
    %120 = vector.extract_strided_slice %115 {offsets = [0, 96], sizes = [2, 32], strides = [1, 1]} : vector<2x128xf32> to vector<2x32xf32>
    %121 = arith.mulf %117, %105 : vector<2x32xf32>
    %122 = arith.mulf %116, %119 : vector<2x32xf32>
    %123 = arith.addf %121, %122 : vector<2x32xf32>
    %124 = math.tanh %123 : vector<2x32xf32>
    %125 = arith.mulf %120, %124 : vector<2x32xf32>
    %c1_i32 = arith.constant 1 : i32
    %c2_i32_52 = arith.constant 2 : i32
    %126 = arith.muli %c1_i32, %c2_i32_52 : i32
    %127 = arith.index_cast %126 : i32 to index
    %c0_53 = arith.constant 0 : index
    %128 = vector.load %arg5[%127, %c0_53] : memref<40x128xf32, #tpu.memory_space<vmem>>, vector<2x128xf32>
    %cst_54 = arith.constant dense<0.000000e+00> : vector<2x128xf32>
    %129 = tpu.matmul %125, %13, %cst_54 {dimension_numbers = #tpu.dot_dimension_numbers<[1], [0], [0], [1], [0, 0, 1, 1], [], []>} : vector<2x32xf32>, vector<32x128xf32>, vector<2x128xf32> -> vector<2x128xf32>
    %130 = arith.addf %128, %129 : vector<2x128xf32>
    %131 = arith.negf %130 : vector<2x128xf32>
    %132 = math.exp %131 : vector<2x128xf32>
    %cst_55 = arith.constant 1.000000e+00 : f32
    %133 = vector.broadcast %cst_55 : f32 to vector<2x128xf32>
    %134 = arith.addf %133, %132 : vector<2x128xf32>
    %135 = arith.divf %133, %134 : vector<2x128xf32>
    %136 = vector.extract_strided_slice %135 {offsets = [0, 0], sizes = [2, 32], strides = [1, 1]} : vector<2x128xf32> to vector<2x32xf32>
    %137 = vector.extract_strided_slice %135 {offsets = [0, 32], sizes = [2, 32], strides = [1, 1]} : vector<2x128xf32> to vector<2x32xf32>
    %138 = vector.extract_strided_slice %130 {offsets = [0, 64], sizes = [2, 32], strides = [1, 1]} : vector<2x128xf32> to vector<2x32xf32>
    %139 = math.tanh %138 : vector<2x32xf32>
    %140 = vector.extract_strided_slice %135 {offsets = [0, 96], sizes = [2, 32], strides = [1, 1]} : vector<2x128xf32> to vector<2x32xf32>
    %141 = arith.mulf %137, %123 : vector<2x32xf32>
    %142 = arith.mulf %136, %139 : vector<2x32xf32>
    %143 = arith.addf %141, %142 : vector<2x32xf32>
    %144 = math.tanh %143 : vector<2x32xf32>
    %145 = arith.mulf %140, %144 : vector<2x32xf32>
    %c2_i32_56 = arith.constant 2 : i32
    %c2_i32_57 = arith.constant 2 : i32
    %146 = arith.muli %c2_i32_56, %c2_i32_57 : i32
    %147 = arith.index_cast %146 : i32 to index
    %c0_58 = arith.constant 0 : index
    %148 = vector.load %arg5[%147, %c0_58] : memref<40x128xf32, #tpu.memory_space<vmem>>, vector<2x128xf32>
    %cst_59 = arith.constant dense<0.000000e+00> : vector<2x128xf32>
    %149 = tpu.matmul %145, %13, %cst_59 {dimension_numbers = #tpu.dot_dimension_numbers<[1], [0], [0], [1], [0, 0, 1, 1], [], []>} : vector<2x32xf32>, vector<32x128xf32>, vector<2x128xf32> -> vector<2x128xf32>
    %150 = arith.addf %148, %149 : vector<2x128xf32>
    %151 = arith.negf %150 : vector<2x128xf32>
    %152 = math.exp %151 : vector<2x128xf32>
    %cst_60 = arith.constant 1.000000e+00 : f32
    %153 = vector.broadcast %cst_60 : f32 to vector<2x128xf32>
    %154 = arith.addf %153, %152 : vector<2x128xf32>
    %155 = arith.divf %153, %154 : vector<2x128xf32>
    %156 = vector.extract_strided_slice %155 {offsets = [0, 0], sizes = [2, 32], strides = [1, 1]} : vector<2x128xf32> to vector<2x32xf32>
    %157 = vector.extract_strided_slice %155 {offsets = [0, 32], sizes = [2, 32], strides = [1, 1]} : vector<2x128xf32> to vector<2x32xf32>
    %158 = vector.extract_strided_slice %150 {offsets = [0, 64], sizes = [2, 32], strides = [1, 1]} : vector<2x128xf32> to vector<2x32xf32>
    %159 = math.tanh %158 : vector<2x32xf32>
    %160 = vector.extract_strided_slice %155 {offsets = [0, 96], sizes = [2, 32], strides = [1, 1]} : vector<2x128xf32> to vector<2x32xf32>
    %161 = arith.mulf %157, %143 : vector<2x32xf32>
    %162 = arith.mulf %156, %159 : vector<2x32xf32>
    %163 = arith.addf %161, %162 : vector<2x32xf32>
    %164 = math.tanh %163 : vector<2x32xf32>
    %165 = arith.mulf %160, %164 : vector<2x32xf32>
    %c3_i32 = arith.constant 3 : i32
    %c2_i32_61 = arith.constant 2 : i32
    %166 = arith.muli %c3_i32, %c2_i32_61 : i32
    %167 = arith.index_cast %166 : i32 to index
    %c0_62 = arith.constant 0 : index
    %168 = vector.load %arg5[%167, %c0_62] : memref<40x128xf32, #tpu.memory_space<vmem>>, vector<2x128xf32>
    %cst_63 = arith.constant dense<0.000000e+00> : vector<2x128xf32>
    %169 = tpu.matmul %165, %13, %cst_63 {dimension_numbers = #tpu.dot_dimension_numbers<[1], [0], [0], [1], [0, 0, 1, 1], [], []>} : vector<2x32xf32>, vector<32x128xf32>, vector<2x128xf32> -> vector<2x128xf32>
    %170 = arith.addf %168, %169 : vector<2x128xf32>
    %171 = arith.negf %170 : vector<2x128xf32>
    %172 = math.exp %171 : vector<2x128xf32>
    %cst_64 = arith.constant 1.000000e+00 : f32
    %173 = vector.broadcast %cst_64 : f32 to vector<2x128xf32>
    %174 = arith.addf %173, %172 : vector<2x128xf32>
    %175 = arith.divf %173, %174 : vector<2x128xf32>
    %176 = vector.extract_strided_slice %175 {offsets = [0, 0], sizes = [2, 32], strides = [1, 1]} : vector<2x128xf32> to vector<2x32xf32>
    %177 = vector.extract_strided_slice %175 {offsets = [0, 32], sizes = [2, 32], strides = [1, 1]} : vector<2x128xf32> to vector<2x32xf32>
    %178 = vector.extract_strided_slice %170 {offsets = [0, 64], sizes = [2, 32], strides = [1, 1]} : vector<2x128xf32> to vector<2x32xf32>
    %179 = math.tanh %178 : vector<2x32xf32>
    %180 = vector.extract_strided_slice %175 {offsets = [0, 96], sizes = [2, 32], strides = [1, 1]} : vector<2x128xf32> to vector<2x32xf32>
    %181 = arith.mulf %177, %163 : vector<2x32xf32>
    %182 = arith.mulf %176, %179 : vector<2x32xf32>
    %183 = arith.addf %181, %182 : vector<2x32xf32>
    %184 = math.tanh %183 : vector<2x32xf32>
    %185 = arith.mulf %180, %184 : vector<2x32xf32>
    %c4_i32 = arith.constant 4 : i32
    %c2_i32_65 = arith.constant 2 : i32
    %186 = arith.muli %c4_i32, %c2_i32_65 : i32
    %187 = arith.index_cast %186 : i32 to index
    %c0_66 = arith.constant 0 : index
    %188 = vector.load %arg5[%187, %c0_66] : memref<40x128xf32, #tpu.memory_space<vmem>>, vector<2x128xf32>
    %cst_67 = arith.constant dense<0.000000e+00> : vector<2x128xf32>
    %189 = tpu.matmul %185, %13, %cst_67 {dimension_numbers = #tpu.dot_dimension_numbers<[1], [0], [0], [1], [0, 0, 1, 1], [], []>} : vector<2x32xf32>, vector<32x128xf32>, vector<2x128xf32> -> vector<2x128xf32>
    %190 = arith.addf %188, %189 : vector<2x128xf32>
    %191 = arith.negf %190 : vector<2x128xf32>
    %192 = math.exp %191 : vector<2x128xf32>
    %cst_68 = arith.constant 1.000000e+00 : f32
    %193 = vector.broadcast %cst_68 : f32 to vector<2x128xf32>
    %194 = arith.addf %193, %192 : vector<2x128xf32>
    %195 = arith.divf %193, %194 : vector<2x128xf32>
    %196 = vector.extract_strided_slice %195 {offsets = [0, 0], sizes = [2, 32], strides = [1, 1]} : vector<2x128xf32> to vector<2x32xf32>
    %197 = vector.extract_strided_slice %195 {offsets = [0, 32], sizes = [2, 32], strides = [1, 1]} : vector<2x128xf32> to vector<2x32xf32>
    %198 = vector.extract_strided_slice %190 {offsets = [0, 64], sizes = [2, 32], strides = [1, 1]} : vector<2x128xf32> to vector<2x32xf32>
    %199 = math.tanh %198 : vector<2x32xf32>
    %200 = vector.extract_strided_slice %195 {offsets = [0, 96], sizes = [2, 32], strides = [1, 1]} : vector<2x128xf32> to vector<2x32xf32>
    %201 = arith.mulf %197, %183 : vector<2x32xf32>
    %202 = arith.mulf %196, %199 : vector<2x32xf32>
    %203 = arith.addf %201, %202 : vector<2x32xf32>
    %204 = math.tanh %203 : vector<2x32xf32>
    %205 = arith.mulf %200, %204 : vector<2x32xf32>
    %c5_i32 = arith.constant 5 : i32
    %c2_i32_69 = arith.constant 2 : i32
    %206 = arith.muli %c5_i32, %c2_i32_69 : i32
    %207 = arith.index_cast %206 : i32 to index
    %c0_70 = arith.constant 0 : index
    %208 = vector.load %arg5[%207, %c0_70] : memref<40x128xf32, #tpu.memory_space<vmem>>, vector<2x128xf32>
    %cst_71 = arith.constant dense<0.000000e+00> : vector<2x128xf32>
    %209 = tpu.matmul %205, %13, %cst_71 {dimension_numbers = #tpu.dot_dimension_numbers<[1], [0], [0], [1], [0, 0, 1, 1], [], []>} : vector<2x32xf32>, vector<32x128xf32>, vector<2x128xf32> -> vector<2x128xf32>
    %210 = arith.addf %208, %209 : vector<2x128xf32>
    %211 = arith.negf %210 : vector<2x128xf32>
    %212 = math.exp %211 : vector<2x128xf32>
    %cst_72 = arith.constant 1.000000e+00 : f32
    %213 = vector.broadcast %cst_72 : f32 to vector<2x128xf32>
    %214 = arith.addf %213, %212 : vector<2x128xf32>
    %215 = arith.divf %213, %214 : vector<2x128xf32>
    %216 = vector.extract_strided_slice %215 {offsets = [0, 0], sizes = [2, 32], strides = [1, 1]} : vector<2x128xf32> to vector<2x32xf32>
    %217 = vector.extract_strided_slice %215 {offsets = [0, 32], sizes = [2, 32], strides = [1, 1]} : vector<2x128xf32> to vector<2x32xf32>
    %218 = vector.extract_strided_slice %210 {offsets = [0, 64], sizes = [2, 32], strides = [1, 1]} : vector<2x128xf32> to vector<2x32xf32>
    %219 = math.tanh %218 : vector<2x32xf32>
    %220 = vector.extract_strided_slice %215 {offsets = [0, 96], sizes = [2, 32], strides = [1, 1]} : vector<2x128xf32> to vector<2x32xf32>
    %221 = arith.mulf %217, %203 : vector<2x32xf32>
    %222 = arith.mulf %216, %219 : vector<2x32xf32>
    %223 = arith.addf %221, %222 : vector<2x32xf32>
    %224 = math.tanh %223 : vector<2x32xf32>
    %225 = arith.mulf %220, %224 : vector<2x32xf32>
    %c6_i32 = arith.constant 6 : i32
    %c2_i32_73 = arith.constant 2 : i32
    %226 = arith.muli %c6_i32, %c2_i32_73 : i32
    %227 = arith.index_cast %226 : i32 to index
    %c0_74 = arith.constant 0 : index
    %228 = vector.load %arg5[%227, %c0_74] : memref<40x128xf32, #tpu.memory_space<vmem>>, vector<2x128xf32>
    %cst_75 = arith.constant dense<0.000000e+00> : vector<2x128xf32>
    %229 = tpu.matmul %225, %13, %cst_75 {dimension_numbers = #tpu.dot_dimension_numbers<[1], [0], [0], [1], [0, 0, 1, 1], [], []>} : vector<2x32xf32>, vector<32x128xf32>, vector<2x128xf32> -> vector<2x128xf32>
    %230 = arith.addf %228, %229 : vector<2x128xf32>
    %231 = arith.negf %230 : vector<2x128xf32>
    %232 = math.exp %231 : vector<2x128xf32>
    %cst_76 = arith.constant 1.000000e+00 : f32
    %233 = vector.broadcast %cst_76 : f32 to vector<2x128xf32>
    %234 = arith.addf %233, %232 : vector<2x128xf32>
    %235 = arith.divf %233, %234 : vector<2x128xf32>
    %236 = vector.extract_strided_slice %235 {offsets = [0, 0], sizes = [2, 32], strides = [1, 1]} : vector<2x128xf32> to vector<2x32xf32>
    %237 = vector.extract_strided_slice %235 {offsets = [0, 32], sizes = [2, 32], strides = [1, 1]} : vector<2x128xf32> to vector<2x32xf32>
    %238 = vector.extract_strided_slice %230 {offsets = [0, 64], sizes = [2, 32], strides = [1, 1]} : vector<2x128xf32> to vector<2x32xf32>
    %239 = math.tanh %238 : vector<2x32xf32>
    %240 = vector.extract_strided_slice %235 {offsets = [0, 96], sizes = [2, 32], strides = [1, 1]} : vector<2x128xf32> to vector<2x32xf32>
    %241 = arith.mulf %237, %223 : vector<2x32xf32>
    %242 = arith.mulf %236, %239 : vector<2x32xf32>
    %243 = arith.addf %241, %242 : vector<2x32xf32>
    %244 = math.tanh %243 : vector<2x32xf32>
    %245 = arith.mulf %240, %244 : vector<2x32xf32>
    %c7_i32 = arith.constant 7 : i32
    %c2_i32_77 = arith.constant 2 : i32
    %246 = arith.muli %c7_i32, %c2_i32_77 : i32
    %247 = arith.index_cast %246 : i32 to index
    %c0_78 = arith.constant 0 : index
    %248 = vector.load %arg5[%247, %c0_78] : memref<40x128xf32, #tpu.memory_space<vmem>>, vector<2x128xf32>
    %cst_79 = arith.constant dense<0.000000e+00> : vector<2x128xf32>
    %249 = tpu.matmul %245, %13, %cst_79 {dimension_numbers = #tpu.dot_dimension_numbers<[1], [0], [0], [1], [0, 0, 1, 1], [], []>} : vector<2x32xf32>, vector<32x128xf32>, vector<2x128xf32> -> vector<2x128xf32>
    %250 = arith.addf %248, %249 : vector<2x128xf32>
    %251 = arith.negf %250 : vector<2x128xf32>
    %252 = math.exp %251 : vector<2x128xf32>
    %cst_80 = arith.constant 1.000000e+00 : f32
    %253 = vector.broadcast %cst_80 : f32 to vector<2x128xf32>
    %254 = arith.addf %253, %252 : vector<2x128xf32>
    %255 = arith.divf %253, %254 : vector<2x128xf32>
    %256 = vector.extract_strided_slice %255 {offsets = [0, 0], sizes = [2, 32], strides = [1, 1]} : vector<2x128xf32> to vector<2x32xf32>
    %257 = vector.extract_strided_slice %255 {offsets = [0, 32], sizes = [2, 32], strides = [1, 1]} : vector<2x128xf32> to vector<2x32xf32>
    %258 = vector.extract_strided_slice %250 {offsets = [0, 64], sizes = [2, 32], strides = [1, 1]} : vector<2x128xf32> to vector<2x32xf32>
    %259 = math.tanh %258 : vector<2x32xf32>
    %260 = vector.extract_strided_slice %255 {offsets = [0, 96], sizes = [2, 32], strides = [1, 1]} : vector<2x128xf32> to vector<2x32xf32>
    %261 = arith.mulf %257, %243 : vector<2x32xf32>
    %262 = arith.mulf %256, %259 : vector<2x32xf32>
    %263 = arith.addf %261, %262 : vector<2x32xf32>
    %264 = math.tanh %263 : vector<2x32xf32>
    %265 = arith.mulf %260, %264 : vector<2x32xf32>
    %c8_i32 = arith.constant 8 : i32
    %c2_i32_81 = arith.constant 2 : i32
    %266 = arith.muli %c8_i32, %c2_i32_81 : i32
    %267 = arith.index_cast %266 : i32 to index
    %c0_82 = arith.constant 0 : index
    %268 = vector.load %arg5[%267, %c0_82] : memref<40x128xf32, #tpu.memory_space<vmem>>, vector<2x128xf32>
    %cst_83 = arith.constant dense<0.000000e+00> : vector<2x128xf32>
    %269 = tpu.matmul %265, %13, %cst_83 {dimension_numbers = #tpu.dot_dimension_numbers<[1], [0], [0], [1], [0, 0, 1, 1], [], []>} : vector<2x32xf32>, vector<32x128xf32>, vector<2x128xf32> -> vector<2x128xf32>
    %270 = arith.addf %268, %269 : vector<2x128xf32>
    %271 = arith.negf %270 : vector<2x128xf32>
    %272 = math.exp %271 : vector<2x128xf32>
    %cst_84 = arith.constant 1.000000e+00 : f32
    %273 = vector.broadcast %cst_84 : f32 to vector<2x128xf32>
    %274 = arith.addf %273, %272 : vector<2x128xf32>
    %275 = arith.divf %273, %274 : vector<2x128xf32>
    %276 = vector.extract_strided_slice %275 {offsets = [0, 0], sizes = [2, 32], strides = [1, 1]} : vector<2x128xf32> to vector<2x32xf32>
    %277 = vector.extract_strided_slice %275 {offsets = [0, 32], sizes = [2, 32], strides = [1, 1]} : vector<2x128xf32> to vector<2x32xf32>
    %278 = vector.extract_strided_slice %270 {offsets = [0, 64], sizes = [2, 32], strides = [1, 1]} : vector<2x128xf32> to vector<2x32xf32>
    %279 = math.tanh %278 : vector<2x32xf32>
    %280 = vector.extract_strided_slice %275 {offsets = [0, 96], sizes = [2, 32], strides = [1, 1]} : vector<2x128xf32> to vector<2x32xf32>
    %281 = arith.mulf %277, %263 : vector<2x32xf32>
    %282 = arith.mulf %276, %279 : vector<2x32xf32>
    %283 = arith.addf %281, %282 : vector<2x32xf32>
    %284 = math.tanh %283 : vector<2x32xf32>
    %285 = arith.mulf %280, %284 : vector<2x32xf32>
    %c9_i32 = arith.constant 9 : i32
    %c2_i32_85 = arith.constant 2 : i32
    %286 = arith.muli %c9_i32, %c2_i32_85 : i32
    %287 = arith.index_cast %286 : i32 to index
    %c0_86 = arith.constant 0 : index
    %288 = vector.load %arg5[%287, %c0_86] : memref<40x128xf32, #tpu.memory_space<vmem>>, vector<2x128xf32>
    %cst_87 = arith.constant dense<0.000000e+00> : vector<2x128xf32>
    %289 = tpu.matmul %285, %13, %cst_87 {dimension_numbers = #tpu.dot_dimension_numbers<[1], [0], [0], [1], [0, 0, 1, 1], [], []>} : vector<2x32xf32>, vector<32x128xf32>, vector<2x128xf32> -> vector<2x128xf32>
    %290 = arith.addf %288, %289 : vector<2x128xf32>
    %291 = arith.negf %290 : vector<2x128xf32>
    %292 = math.exp %291 : vector<2x128xf32>
    %cst_88 = arith.constant 1.000000e+00 : f32
    %293 = vector.broadcast %cst_88 : f32 to vector<2x128xf32>
    %294 = arith.addf %293, %292 : vector<2x128xf32>
    %295 = arith.divf %293, %294 : vector<2x128xf32>
    %296 = vector.extract_strided_slice %295 {offsets = [0, 0], sizes = [2, 32], strides = [1, 1]} : vector<2x128xf32> to vector<2x32xf32>
    %297 = vector.extract_strided_slice %295 {offsets = [0, 32], sizes = [2, 32], strides = [1, 1]} : vector<2x128xf32> to vector<2x32xf32>
    %298 = vector.extract_strided_slice %290 {offsets = [0, 64], sizes = [2, 32], strides = [1, 1]} : vector<2x128xf32> to vector<2x32xf32>
    %299 = math.tanh %298 : vector<2x32xf32>
    %300 = vector.extract_strided_slice %295 {offsets = [0, 96], sizes = [2, 32], strides = [1, 1]} : vector<2x128xf32> to vector<2x32xf32>
    %301 = arith.mulf %297, %283 : vector<2x32xf32>
    %302 = arith.mulf %296, %299 : vector<2x32xf32>
    %303 = arith.addf %301, %302 : vector<2x32xf32>
    %304 = math.tanh %303 : vector<2x32xf32>
    %305 = arith.mulf %300, %304 : vector<2x32xf32>
    %c10_i32 = arith.constant 10 : i32
    %c2_i32_89 = arith.constant 2 : i32
    %306 = arith.muli %c10_i32, %c2_i32_89 : i32
    %307 = arith.index_cast %306 : i32 to index
    %c0_90 = arith.constant 0 : index
    %308 = vector.load %arg5[%307, %c0_90] : memref<40x128xf32, #tpu.memory_space<vmem>>, vector<2x128xf32>
    %cst_91 = arith.constant dense<0.000000e+00> : vector<2x128xf32>
    %309 = tpu.matmul %305, %13, %cst_91 {dimension_numbers = #tpu.dot_dimension_numbers<[1], [0], [0], [1], [0, 0, 1, 1], [], []>} : vector<2x32xf32>, vector<32x128xf32>, vector<2x128xf32> -> vector<2x128xf32>
    %310 = arith.addf %308, %309 : vector<2x128xf32>
    %311 = arith.negf %310 : vector<2x128xf32>
    %312 = math.exp %311 : vector<2x128xf32>
    %cst_92 = arith.constant 1.000000e+00 : f32
    %313 = vector.broadcast %cst_92 : f32 to vector<2x128xf32>
    %314 = arith.addf %313, %312 : vector<2x128xf32>
    %315 = arith.divf %313, %314 : vector<2x128xf32>
    %316 = vector.extract_strided_slice %315 {offsets = [0, 0], sizes = [2, 32], strides = [1, 1]} : vector<2x128xf32> to vector<2x32xf32>
    %317 = vector.extract_strided_slice %315 {offsets = [0, 32], sizes = [2, 32], strides = [1, 1]} : vector<2x128xf32> to vector<2x32xf32>
    %318 = vector.extract_strided_slice %310 {offsets = [0, 64], sizes = [2, 32], strides = [1, 1]} : vector<2x128xf32> to vector<2x32xf32>
    %319 = math.tanh %318 : vector<2x32xf32>
    %320 = vector.extract_strided_slice %315 {offsets = [0, 96], sizes = [2, 32], strides = [1, 1]} : vector<2x128xf32> to vector<2x32xf32>
    %321 = arith.mulf %317, %303 : vector<2x32xf32>
    %322 = arith.mulf %316, %319 : vector<2x32xf32>
    %323 = arith.addf %321, %322 : vector<2x32xf32>
    %324 = math.tanh %323 : vector<2x32xf32>
    %325 = arith.mulf %320, %324 : vector<2x32xf32>
    %c11_i32 = arith.constant 11 : i32
    %c2_i32_93 = arith.constant 2 : i32
    %326 = arith.muli %c11_i32, %c2_i32_93 : i32
    %327 = arith.index_cast %326 : i32 to index
    %c0_94 = arith.constant 0 : index
    %328 = vector.load %arg5[%327, %c0_94] : memref<40x128xf32, #tpu.memory_space<vmem>>, vector<2x128xf32>
    %cst_95 = arith.constant dense<0.000000e+00> : vector<2x128xf32>
    %329 = tpu.matmul %325, %13, %cst_95 {dimension_numbers = #tpu.dot_dimension_numbers<[1], [0], [0], [1], [0, 0, 1, 1], [], []>} : vector<2x32xf32>, vector<32x128xf32>, vector<2x128xf32> -> vector<2x128xf32>
    %330 = arith.addf %328, %329 : vector<2x128xf32>
    %331 = arith.negf %330 : vector<2x128xf32>
    %332 = math.exp %331 : vector<2x128xf32>
    %cst_96 = arith.constant 1.000000e+00 : f32
    %333 = vector.broadcast %cst_96 : f32 to vector<2x128xf32>
    %334 = arith.addf %333, %332 : vector<2x128xf32>
    %335 = arith.divf %333, %334 : vector<2x128xf32>
    %336 = vector.extract_strided_slice %335 {offsets = [0, 0], sizes = [2, 32], strides = [1, 1]} : vector<2x128xf32> to vector<2x32xf32>
    %337 = vector.extract_strided_slice %335 {offsets = [0, 32], sizes = [2, 32], strides = [1, 1]} : vector<2x128xf32> to vector<2x32xf32>
    %338 = vector.extract_strided_slice %330 {offsets = [0, 64], sizes = [2, 32], strides = [1, 1]} : vector<2x128xf32> to vector<2x32xf32>
    %339 = math.tanh %338 : vector<2x32xf32>
    %340 = vector.extract_strided_slice %335 {offsets = [0, 96], sizes = [2, 32], strides = [1, 1]} : vector<2x128xf32> to vector<2x32xf32>
    %341 = arith.mulf %337, %323 : vector<2x32xf32>
    %342 = arith.mulf %336, %339 : vector<2x32xf32>
    %343 = arith.addf %341, %342 : vector<2x32xf32>
    %344 = math.tanh %343 : vector<2x32xf32>
    %345 = arith.mulf %340, %344 : vector<2x32xf32>
    %c12_i32 = arith.constant 12 : i32
    %c2_i32_97 = arith.constant 2 : i32
    %346 = arith.muli %c12_i32, %c2_i32_97 : i32
    %347 = arith.index_cast %346 : i32 to index
    %c0_98 = arith.constant 0 : index
    %348 = vector.load %arg5[%347, %c0_98] : memref<40x128xf32, #tpu.memory_space<vmem>>, vector<2x128xf32>
    %cst_99 = arith.constant dense<0.000000e+00> : vector<2x128xf32>
    %349 = tpu.matmul %345, %13, %cst_99 {dimension_numbers = #tpu.dot_dimension_numbers<[1], [0], [0], [1], [0, 0, 1, 1], [], []>} : vector<2x32xf32>, vector<32x128xf32>, vector<2x128xf32> -> vector<2x128xf32>
    %350 = arith.addf %348, %349 : vector<2x128xf32>
    %351 = arith.negf %350 : vector<2x128xf32>
    %352 = math.exp %351 : vector<2x128xf32>
    %cst_100 = arith.constant 1.000000e+00 : f32
    %353 = vector.broadcast %cst_100 : f32 to vector<2x128xf32>
    %354 = arith.addf %353, %352 : vector<2x128xf32>
    %355 = arith.divf %353, %354 : vector<2x128xf32>
    %356 = vector.extract_strided_slice %355 {offsets = [0, 0], sizes = [2, 32], strides = [1, 1]} : vector<2x128xf32> to vector<2x32xf32>
    %357 = vector.extract_strided_slice %355 {offsets = [0, 32], sizes = [2, 32], strides = [1, 1]} : vector<2x128xf32> to vector<2x32xf32>
    %358 = vector.extract_strided_slice %350 {offsets = [0, 64], sizes = [2, 32], strides = [1, 1]} : vector<2x128xf32> to vector<2x32xf32>
    %359 = math.tanh %358 : vector<2x32xf32>
    %360 = vector.extract_strided_slice %355 {offsets = [0, 96], sizes = [2, 32], strides = [1, 1]} : vector<2x128xf32> to vector<2x32xf32>
    %361 = arith.mulf %357, %343 : vector<2x32xf32>
    %362 = arith.mulf %356, %359 : vector<2x32xf32>
    %363 = arith.addf %361, %362 : vector<2x32xf32>
    %364 = math.tanh %363 : vector<2x32xf32>
    %365 = arith.mulf %360, %364 : vector<2x32xf32>
    %c13_i32 = arith.constant 13 : i32
    %c2_i32_101 = arith.constant 2 : i32
    %366 = arith.muli %c13_i32, %c2_i32_101 : i32
    %367 = arith.index_cast %366 : i32 to index
    %c0_102 = arith.constant 0 : index
    %368 = vector.load %arg5[%367, %c0_102] : memref<40x128xf32, #tpu.memory_space<vmem>>, vector<2x128xf32>
    %cst_103 = arith.constant dense<0.000000e+00> : vector<2x128xf32>
    %369 = tpu.matmul %365, %13, %cst_103 {dimension_numbers = #tpu.dot_dimension_numbers<[1], [0], [0], [1], [0, 0, 1, 1], [], []>} : vector<2x32xf32>, vector<32x128xf32>, vector<2x128xf32> -> vector<2x128xf32>
    %370 = arith.addf %368, %369 : vector<2x128xf32>
    %371 = arith.negf %370 : vector<2x128xf32>
    %372 = math.exp %371 : vector<2x128xf32>
    %cst_104 = arith.constant 1.000000e+00 : f32
    %373 = vector.broadcast %cst_104 : f32 to vector<2x128xf32>
    %374 = arith.addf %373, %372 : vector<2x128xf32>
    %375 = arith.divf %373, %374 : vector<2x128xf32>
    %376 = vector.extract_strided_slice %375 {offsets = [0, 0], sizes = [2, 32], strides = [1, 1]} : vector<2x128xf32> to vector<2x32xf32>
    %377 = vector.extract_strided_slice %375 {offsets = [0, 32], sizes = [2, 32], strides = [1, 1]} : vector<2x128xf32> to vector<2x32xf32>
    %378 = vector.extract_strided_slice %370 {offsets = [0, 64], sizes = [2, 32], strides = [1, 1]} : vector<2x128xf32> to vector<2x32xf32>
    %379 = math.tanh %378 : vector<2x32xf32>
    %380 = vector.extract_strided_slice %375 {offsets = [0, 96], sizes = [2, 32], strides = [1, 1]} : vector<2x128xf32> to vector<2x32xf32>
    %381 = arith.mulf %377, %363 : vector<2x32xf32>
    %382 = arith.mulf %376, %379 : vector<2x32xf32>
    %383 = arith.addf %381, %382 : vector<2x32xf32>
    %384 = math.tanh %383 : vector<2x32xf32>
    %385 = arith.mulf %380, %384 : vector<2x32xf32>
    %c14_i32 = arith.constant 14 : i32
    %c2_i32_105 = arith.constant 2 : i32
    %386 = arith.muli %c14_i32, %c2_i32_105 : i32
    %387 = arith.index_cast %386 : i32 to index
    %c0_106 = arith.constant 0 : index
    %388 = vector.load %arg5[%387, %c0_106] : memref<40x128xf32, #tpu.memory_space<vmem>>, vector<2x128xf32>
    %cst_107 = arith.constant dense<0.000000e+00> : vector<2x128xf32>
    %389 = tpu.matmul %385, %13, %cst_107 {dimension_numbers = #tpu.dot_dimension_numbers<[1], [0], [0], [1], [0, 0, 1, 1], [], []>} : vector<2x32xf32>, vector<32x128xf32>, vector<2x128xf32> -> vector<2x128xf32>
    %390 = arith.addf %388, %389 : vector<2x128xf32>
    %391 = arith.negf %390 : vector<2x128xf32>
    %392 = math.exp %391 : vector<2x128xf32>
    %cst_108 = arith.constant 1.000000e+00 : f32
    %393 = vector.broadcast %cst_108 : f32 to vector<2x128xf32>
    %394 = arith.addf %393, %392 : vector<2x128xf32>
    %395 = arith.divf %393, %394 : vector<2x128xf32>
    %396 = vector.extract_strided_slice %395 {offsets = [0, 0], sizes = [2, 32], strides = [1, 1]} : vector<2x128xf32> to vector<2x32xf32>
    %397 = vector.extract_strided_slice %395 {offsets = [0, 32], sizes = [2, 32], strides = [1, 1]} : vector<2x128xf32> to vector<2x32xf32>
    %398 = vector.extract_strided_slice %390 {offsets = [0, 64], sizes = [2, 32], strides = [1, 1]} : vector<2x128xf32> to vector<2x32xf32>
    %399 = math.tanh %398 : vector<2x32xf32>
    %400 = vector.extract_strided_slice %395 {offsets = [0, 96], sizes = [2, 32], strides = [1, 1]} : vector<2x128xf32> to vector<2x32xf32>
    %401 = arith.mulf %397, %383 : vector<2x32xf32>
    %402 = arith.mulf %396, %399 : vector<2x32xf32>
    %403 = arith.addf %401, %402 : vector<2x32xf32>
    %404 = math.tanh %403 : vector<2x32xf32>
    %405 = arith.mulf %400, %404 : vector<2x32xf32>
    %c15_i32 = arith.constant 15 : i32
    %c2_i32_109 = arith.constant 2 : i32
    %406 = arith.muli %c15_i32, %c2_i32_109 : i32
    %407 = arith.index_cast %406 : i32 to index
    %c0_110 = arith.constant 0 : index
    %408 = vector.load %arg5[%407, %c0_110] : memref<40x128xf32, #tpu.memory_space<vmem>>, vector<2x128xf32>
    %cst_111 = arith.constant dense<0.000000e+00> : vector<2x128xf32>
    %409 = tpu.matmul %405, %13, %cst_111 {dimension_numbers = #tpu.dot_dimension_numbers<[1], [0], [0], [1], [0, 0, 1, 1], [], []>} : vector<2x32xf32>, vector<32x128xf32>, vector<2x128xf32> -> vector<2x128xf32>
    %410 = arith.addf %408, %409 : vector<2x128xf32>
    %411 = arith.negf %410 : vector<2x128xf32>
    %412 = math.exp %411 : vector<2x128xf32>
    %cst_112 = arith.constant 1.000000e+00 : f32
    %413 = vector.broadcast %cst_112 : f32 to vector<2x128xf32>
    %414 = arith.addf %413, %412 : vector<2x128xf32>
    %415 = arith.divf %413, %414 : vector<2x128xf32>
    %416 = vector.extract_strided_slice %415 {offsets = [0, 0], sizes = [2, 32], strides = [1, 1]} : vector<2x128xf32> to vector<2x32xf32>
    %417 = vector.extract_strided_slice %415 {offsets = [0, 32], sizes = [2, 32], strides = [1, 1]} : vector<2x128xf32> to vector<2x32xf32>
    %418 = vector.extract_strided_slice %410 {offsets = [0, 64], sizes = [2, 32], strides = [1, 1]} : vector<2x128xf32> to vector<2x32xf32>
    %419 = math.tanh %418 : vector<2x32xf32>
    %420 = vector.extract_strided_slice %415 {offsets = [0, 96], sizes = [2, 32], strides = [1, 1]} : vector<2x128xf32> to vector<2x32xf32>
    %421 = arith.mulf %417, %403 : vector<2x32xf32>
    %422 = arith.mulf %416, %419 : vector<2x32xf32>
    %423 = arith.addf %421, %422 : vector<2x32xf32>
    %424 = math.tanh %423 : vector<2x32xf32>
    %425 = arith.mulf %420, %424 : vector<2x32xf32>
    %c16_i32 = arith.constant 16 : i32
    %c2_i32_113 = arith.constant 2 : i32
    %426 = arith.muli %c16_i32, %c2_i32_113 : i32
    %427 = arith.index_cast %426 : i32 to index
    %c0_114 = arith.constant 0 : index
    %428 = vector.load %arg5[%427, %c0_114] : memref<40x128xf32, #tpu.memory_space<vmem>>, vector<2x128xf32>
    %cst_115 = arith.constant dense<0.000000e+00> : vector<2x128xf32>
    %429 = tpu.matmul %425, %13, %cst_115 {dimension_numbers = #tpu.dot_dimension_numbers<[1], [0], [0], [1], [0, 0, 1, 1], [], []>} : vector<2x32xf32>, vector<32x128xf32>, vector<2x128xf32> -> vector<2x128xf32>
    %430 = arith.addf %428, %429 : vector<2x128xf32>
    %431 = arith.negf %430 : vector<2x128xf32>
    %432 = math.exp %431 : vector<2x128xf32>
    %cst_116 = arith.constant 1.000000e+00 : f32
    %433 = vector.broadcast %cst_116 : f32 to vector<2x128xf32>
    %434 = arith.addf %433, %432 : vector<2x128xf32>
    %435 = arith.divf %433, %434 : vector<2x128xf32>
    %436 = vector.extract_strided_slice %435 {offsets = [0, 0], sizes = [2, 32], strides = [1, 1]} : vector<2x128xf32> to vector<2x32xf32>
    %437 = vector.extract_strided_slice %435 {offsets = [0, 32], sizes = [2, 32], strides = [1, 1]} : vector<2x128xf32> to vector<2x32xf32>
    %438 = vector.extract_strided_slice %430 {offsets = [0, 64], sizes = [2, 32], strides = [1, 1]} : vector<2x128xf32> to vector<2x32xf32>
    %439 = math.tanh %438 : vector<2x32xf32>
    %440 = vector.extract_strided_slice %435 {offsets = [0, 96], sizes = [2, 32], strides = [1, 1]} : vector<2x128xf32> to vector<2x32xf32>
    %441 = arith.mulf %437, %423 : vector<2x32xf32>
    %442 = arith.mulf %436, %439 : vector<2x32xf32>
    %443 = arith.addf %441, %442 : vector<2x32xf32>
    %444 = math.tanh %443 : vector<2x32xf32>
    %445 = arith.mulf %440, %444 : vector<2x32xf32>
    %c17_i32 = arith.constant 17 : i32
    %c2_i32_117 = arith.constant 2 : i32
    %446 = arith.muli %c17_i32, %c2_i32_117 : i32
    %447 = arith.index_cast %446 : i32 to index
    %c0_118 = arith.constant 0 : index
    %448 = vector.load %arg5[%447, %c0_118] : memref<40x128xf32, #tpu.memory_space<vmem>>, vector<2x128xf32>
    %cst_119 = arith.constant dense<0.000000e+00> : vector<2x128xf32>
    %449 = tpu.matmul %445, %13, %cst_119 {dimension_numbers = #tpu.dot_dimension_numbers<[1], [0], [0], [1], [0, 0, 1, 1], [], []>} : vector<2x32xf32>, vector<32x128xf32>, vector<2x128xf32> -> vector<2x128xf32>
    %450 = arith.addf %448, %449 : vector<2x128xf32>
    %451 = arith.negf %450 : vector<2x128xf32>
    %452 = math.exp %451 : vector<2x128xf32>
    %cst_120 = arith.constant 1.000000e+00 : f32
    %453 = vector.broadcast %cst_120 : f32 to vector<2x128xf32>
    %454 = arith.addf %453, %452 : vector<2x128xf32>
    %455 = arith.divf %453, %454 : vector<2x128xf32>
    %456 = vector.extract_strided_slice %455 {offsets = [0, 0], sizes = [2, 32], strides = [1, 1]} : vector<2x128xf32> to vector<2x32xf32>
    %457 = vector.extract_strided_slice %455 {offsets = [0, 32], sizes = [2, 32], strides = [1, 1]} : vector<2x128xf32> to vector<2x32xf32>
    %458 = vector.extract_strided_slice %450 {offsets = [0, 64], sizes = [2, 32], strides = [1, 1]} : vector<2x128xf32> to vector<2x32xf32>
    %459 = math.tanh %458 : vector<2x32xf32>
    %460 = vector.extract_strided_slice %455 {offsets = [0, 96], sizes = [2, 32], strides = [1, 1]} : vector<2x128xf32> to vector<2x32xf32>
    %461 = arith.mulf %457, %443 : vector<2x32xf32>
    %462 = arith.mulf %456, %459 : vector<2x32xf32>
    %463 = arith.addf %461, %462 : vector<2x32xf32>
    %464 = math.tanh %463 : vector<2x32xf32>
    %465 = arith.mulf %460, %464 : vector<2x32xf32>
    %c18_i32 = arith.constant 18 : i32
    %c2_i32_121 = arith.constant 2 : i32
    %466 = arith.muli %c18_i32, %c2_i32_121 : i32
    %467 = arith.index_cast %466 : i32 to index
    %c0_122 = arith.constant 0 : index
    %468 = vector.load %arg5[%467, %c0_122] : memref<40x128xf32, #tpu.memory_space<vmem>>, vector<2x128xf32>
    %cst_123 = arith.constant dense<0.000000e+00> : vector<2x128xf32>
    %469 = tpu.matmul %465, %13, %cst_123 {dimension_numbers = #tpu.dot_dimension_numbers<[1], [0], [0], [1], [0, 0, 1, 1], [], []>} : vector<2x32xf32>, vector<32x128xf32>, vector<2x128xf32> -> vector<2x128xf32>
    %470 = arith.addf %468, %469 : vector<2x128xf32>
    %471 = arith.negf %470 : vector<2x128xf32>
    %472 = math.exp %471 : vector<2x128xf32>
    %cst_124 = arith.constant 1.000000e+00 : f32
    %473 = vector.broadcast %cst_124 : f32 to vector<2x128xf32>
    %474 = arith.addf %473, %472 : vector<2x128xf32>
    %475 = arith.divf %473, %474 : vector<2x128xf32>
    %476 = vector.extract_strided_slice %475 {offsets = [0, 0], sizes = [2, 32], strides = [1, 1]} : vector<2x128xf32> to vector<2x32xf32>
    %477 = vector.extract_strided_slice %475 {offsets = [0, 32], sizes = [2, 32], strides = [1, 1]} : vector<2x128xf32> to vector<2x32xf32>
    %478 = vector.extract_strided_slice %470 {offsets = [0, 64], sizes = [2, 32], strides = [1, 1]} : vector<2x128xf32> to vector<2x32xf32>
    %479 = math.tanh %478 : vector<2x32xf32>
    %480 = vector.extract_strided_slice %475 {offsets = [0, 96], sizes = [2, 32], strides = [1, 1]} : vector<2x128xf32> to vector<2x32xf32>
    %481 = arith.mulf %477, %463 : vector<2x32xf32>
    %482 = arith.mulf %476, %479 : vector<2x32xf32>
    %483 = arith.addf %481, %482 : vector<2x32xf32>
    %484 = math.tanh %483 : vector<2x32xf32>
    %485 = arith.mulf %480, %484 : vector<2x32xf32>
    %c19_i32 = arith.constant 19 : i32
    %c2_i32_125 = arith.constant 2 : i32
    %486 = arith.muli %c19_i32, %c2_i32_125 : i32
    %487 = arith.index_cast %486 : i32 to index
    %c0_126 = arith.constant 0 : index
    %488 = vector.load %arg5[%487, %c0_126] : memref<40x128xf32, #tpu.memory_space<vmem>>, vector<2x128xf32>
    %cst_127 = arith.constant dense<0.000000e+00> : vector<2x128xf32>
    %489 = tpu.matmul %485, %13, %cst_127 {dimension_numbers = #tpu.dot_dimension_numbers<[1], [0], [0], [1], [0, 0, 1, 1], [], []>} : vector<2x32xf32>, vector<32x128xf32>, vector<2x128xf32> -> vector<2x128xf32>
    %490 = arith.addf %488, %489 : vector<2x128xf32>
    %491 = arith.negf %490 : vector<2x128xf32>
    %492 = math.exp %491 : vector<2x128xf32>
    %cst_128 = arith.constant 1.000000e+00 : f32
    %493 = vector.broadcast %cst_128 : f32 to vector<2x128xf32>
    %494 = arith.addf %493, %492 : vector<2x128xf32>
    %495 = arith.divf %493, %494 : vector<2x128xf32>
    %496 = vector.extract_strided_slice %495 {offsets = [0, 0], sizes = [2, 32], strides = [1, 1]} : vector<2x128xf32> to vector<2x32xf32>
    %497 = vector.extract_strided_slice %495 {offsets = [0, 32], sizes = [2, 32], strides = [1, 1]} : vector<2x128xf32> to vector<2x32xf32>
    %498 = vector.extract_strided_slice %490 {offsets = [0, 64], sizes = [2, 32], strides = [1, 1]} : vector<2x128xf32> to vector<2x32xf32>
    %499 = math.tanh %498 : vector<2x32xf32>
    %500 = vector.extract_strided_slice %495 {offsets = [0, 96], sizes = [2, 32], strides = [1, 1]} : vector<2x128xf32> to vector<2x32xf32>
    %501 = arith.mulf %497, %483 : vector<2x32xf32>
    %502 = arith.mulf %496, %499 : vector<2x32xf32>
    %503 = arith.addf %501, %502 : vector<2x32xf32>
    %504 = math.tanh %503 : vector<2x32xf32>
    %505 = arith.mulf %500, %504 : vector<2x32xf32>
    %c20_i32 = arith.constant 20 : i32
    %cst_129 = arith.constant dense<0.000000e+00> : vector<2x32xf32>
    %506 = tpu.matmul %505, %14, %cst_129 {dimension_numbers = #tpu.dot_dimension_numbers<[1], [0], [0], [1], [0, 0, 1, 1], [], []>} : vector<2x32xf32>, vector<32x32xf32>, vector<2x32xf32> -> vector<2x32xf32>
    %507 = vector.broadcast %15 : vector<1x32xf32> to vector<2x32xf32>
    %508 = arith.addf %506, %507 : vector<2x32xf32>
    %cst_130 = arith.constant 0.000000e+00 : f32
    %509 = vector.broadcast %cst_130 : f32 to vector<2x32xf32>
    %510 = arith.maximumf %508, %509 : vector<2x32xf32>
    %cst_131 = arith.constant dense<0.000000e+00> : vector<2x32xf32>
    %511 = tpu.matmul %510, %16, %cst_131 {dimension_numbers = #tpu.dot_dimension_numbers<[1], [0], [0], [1], [0, 0, 1, 1], [], []>} : vector<2x32xf32>, vector<32x32xf32>, vector<2x32xf32> -> vector<2x32xf32>
    %512 = vector.broadcast %17 : vector<1x32xf32> to vector<2x32xf32>
    %513 = arith.addf %511, %512 : vector<2x32xf32>
    %cst_132 = arith.constant 0.000000e+00 : f32
    %514 = vector.broadcast %cst_132 : f32 to vector<2x32xf32>
    %515 = arith.maximumf %513, %514 : vector<2x32xf32>
    %cst_133 = arith.constant dense<0.000000e+00> : vector<2x8xf32>
    %516 = tpu.matmul %515, %18, %cst_133 {dimension_numbers = #tpu.dot_dimension_numbers<[1], [0], [0], [1], [0, 0, 1, 1], [], []>} : vector<2x32xf32>, vector<32x8xf32>, vector<2x8xf32> -> vector<2x8xf32>
    %517 = vector.broadcast %19 : vector<1x8xf32> to vector<2x8xf32>
    %518 = arith.addf %516, %517 : vector<2x8xf32>
    %cst_134 = arith.constant -2.000000e+01 : f32
    %cst_135 = arith.constant 2.000000e+00 : f32
    %519 = vector.broadcast %cst_134 : f32 to vector<2x8xf32>
    %520 = arith.maximumf %519, %518 : vector<2x8xf32>
    %521 = vector.broadcast %cst_135 : f32 to vector<2x8xf32>
    %522 = arith.minimumf %521, %520 : vector<2x8xf32>
    %523 = math.exp %522 : vector<2x8xf32>
    %524 = tpu.iota {dimensions = array<i32: 1>} : vector<2x8xi32>
    %c4_i32_136 = arith.constant 4 : i32
    %525 = vector.broadcast %c4_i32_136 : i32 to vector<2x8xi32>
    %526 = arith.cmpi sge, %524, %525 : vector<2x8xi32>
    %527 = arith.select %526, %523, %518 : vector<2x8xi1>, vector<2x8xf32>
    %c0_137 = arith.constant 0 : index
    %c0_138 = arith.constant 0 : index
    %528 = vector.load %arg4[%c0_137, %c0_138] : memref<2x8xf32, #tpu.memory_space<vmem>>, vector<2x8xf32>
    tpu.vector_store %arg4[%c0_137, %c0_138], %527 {strides = array<i32>} : memref<2x8xf32, #tpu.memory_space<vmem>>, vector<2x8xf32>,
    return
  }
}

</mosaic_0001>

<llo_original>
// kernel: policy_forward.1
$region0: #{policy_forward.1}
  #allocation0 [shape = 'u32[]', space=smem, size = 0x4, offset = 0x4, fixed_abs, tag = 'smem constant byte address 0x4 - core index']
  #allocation1 [shape = 'u32[144,128]{1,0:T(1,128)}', space=vmem, size = 0x12000, scoped, tag = 'internal scratch']
  #allocation2 [shape = 'f32[40,128]{1,0:T(8,128)}', space=vmem, size = 0x5000, scoped, tag = 'scratch operand']
  %s0 = inlined_call_operand.vmem [shape: f32[40,11], index: 0, kind: input, shape index: {}]
  %s1 = inlined_call_operand.vmem [shape: f32[40,33], index: 1, kind: input, shape index: {}]
  %s2 = inlined_call_operand.vmem [shape: f32[44,128], index: 2, kind: input, shape index: {}]
  %s3 = inlined_call_operand.vmem [shape: f32[99,32], index: 3, kind: input, shape index: {}]
  %s4 = inlined_call_operand.vmem [shape: f32[2,8], index: 4, kind: output, shape index: {}]
  %s5 = sld [smem:[#allocation0]]
  $region26: #{policy_forward.1} parent=0
    _
  %s7 = ssub.s32 1, %s5
  %s8 = scalar_select 0, %s7, %s5
  // Predicated region
  $region2: #{policy_forward.1} parent=0 // pred_check
    _
  $region3: #{policy_forward.1} parent=0 // pred_check_branch
    %10 = sbr.rel (0) target = $region5
  $region4: #{policy_forward.1} parent=0 // pred_region
    _
  $region5: #{policy_forward.1} parent=0 // pred_fallthru
    _
  // Predicated region
  $region6: #{policy_forward.1} parent=0 // pred_check
    _
  $region7: #{policy_forward.1} parent=0 // pred_check_branch
    %12 = sbr.rel (0) target = $region9
  $region8: #{policy_forward.1} parent=0 // pred_region
    _
  $region9: #{policy_forward.1} parent=0 // pred_fallthru
    _
  // Predicated region
  $region10: #{policy_forward.1} parent=0 // pred_check
    _
  $region11: #{policy_forward.1} parent=0 // pred_check_branch
    %14 = sbr.rel (0) target = $region13
  $region12: #{policy_forward.1} parent=0 // pred_region
    _
  $region13: #{policy_forward.1} parent=0 // pred_fallthru
    _
  // Predicated region
  $region14: #{policy_forward.1} parent=0 // pred_check
    _
  $region15: #{policy_forward.1} parent=0 // pred_check_branch
    %16 = sbr.rel (0) target = $region17
  $region16: #{policy_forward.1} parent=0 // pred_region
    _
  $region17: #{policy_forward.1} parent=0 // pred_fallthru
    _
  %v17 = vld [vmem:[%s0] sm:$0xff]
  %v18 = vld [vmem:[%s0 + $0x8] sm:$0xff]
  %v19 = vld [vmem:[%s0 + $0x10] sm:$0xff]
  %v20 = vld [vmem:[%s0 + $0x18] sm:$0xff]
  %v21 = vld [vmem:[%s0 + $0x20] sm:$0xff]
  %v22 = vld [vmem:[%s1] sm:$0xff]
  %v23 = vld [vmem:[%s1 + $0x8] sm:$0x7]
  %v24 = vld [vmem:[%s1 + $0xb] sm:$0x1]
  %v25 = vld [vmem:[%s1 + $0xc] sm:$0xff]
  %v26 = vld [vmem:[%s1 + $0x14] sm:$0x7]
  %v27 = vld [vmem:[%s1 + $0x17] sm:$0x1]
  %v28 = vld [vmem:[%s1 + $0x18] sm:$0x1]
  %v29 = vld [vmem:[%s1 + $0x19] sm:$0x1]
  %v30 = vld [vmem:[%s1 + $0x1a] sm:$0xff]
  %v31 = vld [vmem:[%s1 + $0x22] sm:$0x7]
  %v32 = vld [vmem:[%s1 + $0x25] sm:$0x1]
  %v33 = vld [vmem:[%s1 + $0x26] sm:$0x1]
  %v34 = vld [vmem:[%s1 + $0x27] sm:$0x1]
  %v35 = vld [vmem:[%s2] sm:$0xff]
  %v36 = vld [vmem:[%s2 + $0x8] sm:$0x7]
  %v37 = vld [vmem:[%s2 + $0xb] sm:$0x1]
  %v38 = vld [vmem:[%s2 + $0xc] sm:$0xff]
  %v39 = vld [vmem:[%s2 + $0x14] sm:$0xff]
  %v40 = vld [vmem:[%s2 + $0x1c] sm:$0xff]
  %v41 = vld [vmem:[%s2 + $0x24] sm:$0xff]
  %v42 = vld [vmem:[%s3] sm:$0xff]
  %v43 = vld [vmem:[%s3 + $0x8] sm:$0xff]
  %v44 = vld [vmem:[%s3 + $0x10] sm:$0xff]
  %v45 = vld [vmem:[%s3 + $0x18] sm:$0xff]
  %v46 = vld [vmem:[%s3 + $0x20] sm:$0x1]
  %v47 = vld [vmem:[%s3 + $0x21] sm:$0xff]
  %v48 = vld [vmem:[%s3 + $0x29] sm:$0xff]
  %v49 = vld [vmem:[%s3 + $0x31] sm:$0xff]
  %v50 = vld [vmem:[%s3 + $0x39] sm:$0xff]
  %v51 = vld [vmem:[%s3 + $0x41] sm:$0x1]
  %v52 = vld [vmem:[%s3 + $0x42] sm:$0xff]
  %v53 = vld [vmem:[%s3 + $0x4a] sm:$0xff]
  %v54 = vld [vmem:[%s3 + $0x52] sm:$0xff]
  %v55 = vld [vmem:[%s3 + $0x5a] sm:$0xff]
  %v56 = vld [vmem:[%s3 + $0x62] sm:$0x1]
  %v57 = vlaneseq
  %v58 = vshrl.u32 %v57, 7
  %v59 = vsub.s32 0, %v58
  %v60 = vrot.slane %v24, %v59
  %vm61 = vcmask 89088
  %v63 = vsel %vm61, %v17, 0
  %v66 = vsel %vm61, %v18, 0
  %v69 = vsel %vm61, %v19, 0
  %v72 = vsel %vm61, %v20, 0
  %v75 = vsel %vm61, %v21, 0
  %vm77 = vcmask 1042432
  %v79 = vsel %vm77, %v23, 0
  %81 = vmatprep.subr.mxu0 0.0
  %82 = vmatpush1.msra.mxu0 %v22
  %83 = vmatprep.subr.mxu0 0.0
  %84 = vmatpush1.msra.mxu0 %v79
  %85 = vmatprep.subr.mxu0 0.0
  %86 = vmatpush1.msra.mxu0 0.0
  %87 = vmatprep.subr.mxu0 0.0
  %88 = vmatpush1.msra.mxu0 0.0
  %89 = vmatprep.subr.mxu0 0.0
  %90 = vmatpush1.msra.mxu0 0.0
  %91 = vmatprep.subr.mxu0 0.0
  %92 = vmatpush1.msra.mxu0 0.0
  %93 = vmatprep.subr.mxu0 0.0
  %94 = vmatpush1.msra.mxu0 0.0
  %95 = vmatprep.subr.mxu0 0.0
  %96 = vmatpush1.msra.mxu0 0.0
  %97 = vmatprep.subr.mxu0 0.0
  %98 = vmatpush1.msra.mxu0 0.0
  %99 = vmatprep.subr.mxu0 0.0
  %100 = vmatpush1.msra.mxu0 0.0
  %101 = vmatprep.subr.mxu0 0.0
  %102 = vmatpush1.msra.mxu0 0.0
  %103 = vmatprep.subr.mxu0 0.0
  %104 = vmatpush1.msra.mxu0 0.0
  %105 = vmatprep.subr.mxu0 0.0
  %106 = vmatpush1.msra.mxu0 0.0
  %107 = vmatprep.subr.mxu0 0.0
  %108 = vmatpush1.msra.mxu0 0.0
  %109 = vmatprep.subr.mxu0 0.0
  %110 = vmatpush1.msra.mxu0 0.0
  %111 = vmatprep.subr.mxu0 0.0
  %112 = vmatpush1.msra.mxu0 0.0
  %113 = vmatprep.subr.mxu0 0.0
  %114 = vmatpush1.msra.mxu0 0.0
  %115 = vmatprep.subr.mxu0 0.0
  %116 = vmatpush1.msra.mxu0 0.0
  %117 = vmatprep.subr.mxu0 0.0
  %118 = vmatpush1.msra.mxu0 0.0
  %119 = vmatprep.subr.mxu0 0.0
  %120 = vmatpush1.msra.mxu0 0.0
  %121 = vmatprep.subr.mxu0 0.0
  %122 = vmatpush1.msra.mxu0 0.0
  %123 = vmatprep.subr.mxu0 0.0
  %124 = vmatpush1.msra.mxu0 0.0
  %125 = vmatprep.subr.mxu0 0.0
  %126 = vmatpush1.msra.mxu0 0.0
  %127 = vmatprep.subr.mxu0 0.0
  %128 = vmatpush1.msra.mxu0 0.0
  %129 = vmatprep.subr.mxu0 0.0
  %130 = vmatpush1.msra.mxu0 0.0
  %131 = vmatprep.subr.mxu0 0.0
  %132 = vmatpush1.msra.mxu0 0.0
  %133 = vmatprep.subr.mxu0 0.0
  %134 = vmatpush1.msra.mxu0 0.0
  %135 = vmatprep.subr.mxu0 0.0
  %136 = vmatpush1.msra.mxu0 0.0
  %137 = vmatprep.subr.mxu0 0.0
  %138 = vmatpush1.msra.mxu0 0.0
  %139 = vmatprep.subr.mxu0 0.0
  %140 = vmatpush1.msra.mxu0 0.0
  %141 = vmatprep.subr.mxu0 0.0
  %142 = vmatpush1.msra.mxu0 0.0
  %143 = vmatprep.subr.mxu0 0.0
  %144 = vmatpush1.msra.mxu0 0.0
  %145 = vmatprep.mubr.f32.mxu0 0.0
  %146 = vmatmul.mubr.f32.gmra.mrb[0].mxu0 %v63
  %v147 = vpop.f32.mrb[0].mxu0
  %v148 = vadd.f32 %v60, %v147
  %v149 = vpop.f32.mrb[0].mxu0
  %150 = vmatprep.mubr.f32.mxu0 0.0
  %151 = vmatmul.mubr.f32.gmra.mrb[0].mxu0 %v66
  %v152 = vpop.f32.mrb[0].mxu0
  %v153 = vadd.f32 %v60, %v152
  %v154 = vpop.f32.mrb[0].mxu0
  %155 = vmatprep.mubr.f32.mxu0 0.0
  %156 = vmatmul.mubr.f32.gmra.mrb[0].mxu0 %v69
  %v157 = vpop.f32.mrb[0].mxu0
  %v158 = vadd.f32 %v60, %v157
  %v159 = vpop.f32.mrb[0].mxu0
  %160 = vmatprep.mubr.f32.mxu0 0.0
  %161 = vmatmul.mubr.f32.gmra.mrb[0].mxu0 %v72
  %v162 = vpop.f32.mrb[0].mxu0
  %v163 = vadd.f32 %v60, %v162
  %v164 = vpop.f32.mrb[0].mxu0
  %165 = vmatprep.mubr.f32.mxu0 0.0
  %166 = vmatmul.mubr.f32.gmra.mrb[0].mxu0 %v75
  %v167 = vpop.f32.mrb[0].mxu0
  %v168 = vadd.f32 %v60, %v167
  %v169 = vpop.f32.mrb[0].mxu0
  %170 = vdwg.mxu0
  %176 = vrot.lane.b32.xlu0 %v148, 117
  %v177 = vpop.permute.xlu0 %176
  %178 = vrot.lane.b32.xlu0 %v153, 117
  %v179 = vpop.permute.xlu0 %178
  %180 = vrot.lane.b32.xlu0 %v158, 117
  %v181 = vpop.permute.xlu0 %180
  %182 = vrot.lane.b32.xlu0 %v163, 117
  %v183 = vpop.permute.xlu0 %182
  %184 = vrot.lane.b32.xlu0 %v168, 117
  %v185 = vpop.permute.xlu0 %184
  %v186 = vsel %vm61, %v148, 0
  %v188 = vsel %vm61, %v153, 0
  %v190 = vsel %vm61, %v158, 0
  %v192 = vsel %vm61, %v163, 0
  %v194 = vsel %vm61, %v168, 0
  %v196 = vsel %vm61, %v177, 0
  %v198 = vsel %vm61, %v179, 0
  %v200 = vsel %vm61, %v181, 0
  %v202 = vsel %vm61, %v183, 0
  %v204 = vsel %vm61, %v185, 0
  %206 = vmatprep.subr.mxu0 0.0
  %207 = vmatpush1.xpose.msra.mxu0 %v196
  %208 = vmatprep.subr.mxu0 0.0
  %209 = vmatpush1.xpose.msra.mxu0 %v198
  %210 = vmatprep.subr.mxu0 0.0
  %211 = vmatpush1.xpose.msra.mxu0 %v200
  %212 = vmatprep.subr.mxu0 0.0
  %213 = vmatpush1.xpose.msra.mxu0 %v202
  %214 = vmatprep.subr.mxu0 0.0
  %215 = vmatpush1.xpose.msra.mxu0 %v204
  %216 = vmatprep.subr.mxu0 0.0
  %217 = vmatpush1.xpose.msra.mxu0 0.0
  %218 = vmatprep.subr.mxu0 0.0
  %219 = vmatpush1.xpose.msra.mxu0 0.0
  %220 = vmatprep.subr.mxu0 0.0
  %221 = vmatpush1.xpose.msra.mxu0 0.0
  %222 = vmatprep.subr.mxu0 0.0
  %223 = vmatpush1.xpose.msra.mxu0 0.0
  %224 = vmatprep.subr.mxu0 0.0
  %225 = vmatpush1.xpose.msra.mxu0 0.0
  %226 = vmatprep.subr.mxu0 0.0
  %227 = vmatpush1.xpose.msra.mxu0 0.0
  %228 = vmatprep.subr.mxu0 0.0
  %229 = vmatpush1.xpose.msra.mxu0 0.0
  %230 = vmatprep.subr.mxu0 0.0
  %231 = vmatpush1.xpose.msra.mxu0 0.0
  %232 = vmatprep.subr.mxu0 0.0
  %233 = vmatpush1.xpose.msra.mxu0 0.0
  %234 = vmatprep.subr.mxu0 0.0
  %235 = vmatpush1.xpose.msra.mxu0 0.0
  %236 = vmatprep.subr.mxu0 0.0
  %237 = vmatpush1.xpose.msra.mxu0 0.0
  %238 = vmatprep.subr.mxu0 0.0
  %239 = vmatpush1.xpose.msra.mxu0 0.0
  %240 = vmatprep.subr.mxu0 0.0
  %241 = vmatpush1.xpose.msra.mxu0 0.0
  %242 = vmatprep.subr.mxu0 0.0
  %243 = vmatpush1.xpose.msra.mxu0 0.0
  %244 = vmatprep.subr.mxu0 0.0
  %245 = vmatpush1.xpose.msra.mxu0 0.0
  %246 = vmatprep.subr.mxu0 0.0
  %247 = vmatpush1.xpose.msra.mxu0 0.0
  %248 = vmatprep.subr.mxu0 0.0
  %249 = vmatpush1.xpose.msra.mxu0 0.0
  %250 = vmatprep.subr.mxu0 0.0
  %251 = vmatpush1.xpose.msra.mxu0 0.0
  %252 = vmatprep.subr.mxu0 0.0
  %253 = vmatpush1.xpose.msra.mxu0 0.0
  %254 = vmatprep.subr.mxu0 0.0
  %255 = vmatpush1.xpose.msra.mxu0 0.0
  %256 = vmatprep.subr.mxu0 0.0
  %257 = vmatpush1.xpose.msra.mxu0 0.0
  %258 = vmatprep.subr.mxu0 0.0
  %259 = vmatpush1.xpose.msra.mxu0 0.0
  %260 = vmatprep.subr.mxu0 0.0
  %261 = vmatpush1.xpose.msra.mxu0 0.0
  %262 = vmatprep.subr.mxu0 0.0
  %263 = vmatpush1.xpose.msra.mxu0 0.0
  %264 = vmatprep.subr.mxu0 0.0
  %265 = vmatpush1.xpose.msra.mxu0 0.0
  %266 = vmatprep.subr.mxu0 0.0
  %267 = vmatpush1.xpose.msra.mxu0 0.0
  %268 = vmatprep.subr.mxu0 0.0
  %269 = vmatpush1.xpose.msra.mxu0 0.0
  %270 = vmatprep.mubr.f32.mxu0 0.0
  %271 = vmatmul.mubr.f32.gmra.mrb[0].mxu0 %v186
  %v272 = vpop.f32.mrb[0].mxu0
  %v273 = vadd.f32 0.0, %v272
  %v274 = vpop.f32.mrb[0].mxu0
  %275 = vmatprep.mubr.f32.mxu0 0.0
  %276 = vmatmul.mubr.f32.gmra.mrb[0].mxu0 %v188
  %v277 = vpop.f32.mrb[0].mxu0
  %v278 = vadd.f32 0.0, %v277
  %v279 = vpop.f32.mrb[0].mxu0
  %280 = vmatprep.mubr.f32.mxu0 0.0
  %281 = vmatmul.mubr.f32.gmra.mrb[0].mxu0 %v190
  %v282 = vpop.f32.mrb[0].mxu0
  %v283 = vadd.f32 0.0, %v282
  %v284 = vpop.f32.mrb[0].mxu0
  %285 = vmatprep.mubr.f32.mxu0 0.0
  %286 = vmatmul.mubr.f32.gmra.mrb[0].mxu0 %v192
  %v287 = vpop.f32.mrb[0].mxu0
  %v288 = vadd.f32 0.0, %v287
  %v289 = vpop.f32.mrb[0].mxu0
  %290 = vmatprep.mubr.f32.mxu0 0.0
  %291 = vmatmul.mubr.f32.gmra.mrb[0].mxu0 %v194
  %v292 = vpop.f32.mrb[0].mxu0
  %v293 = vadd.f32 0.0, %v292
  %v294 = vpop.f32.mrb[0].mxu0
  %295 = vdwg.mxu0
  %v296 = vmul.f32 %v273, 0.30151135
  %v297 = vmul.f32 %v278, 0.30151135
  %v298 = vmul.f32 %v283, 0.30151135
  %v299 = vmul.f32 %v288, 0.30151135
  %v300 = vmul.f32 %v293, 0.30151135
  %v301 = vlaneseq
  %v302 = vshrl.u32 %v301, 7
  %v303 = vadd.s32 %v302, 8
  %v304 = vadd.s32 %v302, 16
  %v305 = vadd.s32 %v302, 24
  %v306 = vadd.s32 %v302, 32
  %v307 = vlaneseq
  %v308 = vand.u32 %v307, 127
  %vm309 = vcmp.lt.s32.totalorder %v302, 0
  %v310 = vsub.s32 0, %v302
  %v311 = vsel %vm309, %v310, %v302
  %v312 = vshrl.u32 %v311, 1
  %v313 = vand.u32 %v311, 1
  %v314 = vsub.s32 0, %v313
  %v315 = vsel %vm309, %v314, %v313
  %vm316 = vcmp.lt.s32.totalorder %v303, 0
  %v317 = vsub.s32 0, %v303
  %v318 = vsel %vm316, %v317, %v303
  %v319 = vshrl.u32 %v318, 1
  %v320 = vand.u32 %v318, 1
  %v321 = vsub.s32 0, %v320
  %v322 = vsel %vm316, %v321, %v320
  %vm323 = vcmp.lt.s32.totalorder %v304, 0
  %v324 = vsub.s32 0, %v304
  %v325 = vsel %vm323, %v324, %v304
  %v326 = vshrl.u32 %v325, 1
  %v327 = vand.u32 %v325, 1
  %v328 = vsub.s32 0, %v327
  %v329 = vsel %vm323, %v328, %v327
  %vm330 = vcmp.lt.s32.totalorder %v305, 0
  %v331 = vsub.s32 0, %v305
  %v332 = vsel %vm330, %v331, %v305
  %v333 = vshrl.u32 %v332, 1
  %v334 = vand.u32 %v332, 1
  %v335 = vsub.s32 0, %v334
  %v336 = vsel %vm330, %v335, %v334
  %vm337 = vcmp.lt.s32.totalorder %v306, 0
  %v338 = vsub.s32 0, %v306
  %v339 = vsel %vm337, %v338, %v306
  %v340 = vshrl.u32 %v339, 1
  %v341 = vand.u32 %v339, 1
  %v342 = vsub.s32 0, %v341
  %v343 = vsel %vm337, %v342, %v341
  %vm344 = vcmp.lt.s32.totalorder %v308, 0
  %v345 = vsub.s32 0, %v308
  %v346 = vsel %vm344, %v345, %v308
  %v347 = vshrl.u32 %v346, 1
  %v348 = vand.u32 %v346, 1
  %v349 = vsub.s32 0, %v348
  %v350 = vsel %vm344, %v349, %v348
  %vm351 = vcmp.eq.s32.totalorder %v315, %v350
  %vm352 = vcmp.eq.s32.totalorder %v322, %v350
  %vm353 = vcmp.eq.s32.totalorder %v329, %v350
  %vm354 = vcmp.eq.s32.totalorder %v336, %v350
  %vm355 = vcmp.eq.s32.totalorder %v343, %v350
  %v356 = vsel %vm351, %v296, -1e+30
  %v357 = vsel %vm352, %v297, -1e+30
  %v358 = vsel %vm353, %v298, -1e+30
  %v359 = vsel %vm354, %v299, -1e+30
  %v360 = vsel %vm355, %v300, -1e+30
  %vm361 = vcmask 326656
  %v362 = vsel %vm361, %v356, -inf
  %363 = vmax.xlane.f32.xlu0 %v362
  %v364 = vpop.xlane.xlu0 %363
  %v365 = vsel %vm361, %v357, -inf
  %366 = vmax.xlane.f32.xlu0 %v365
  %v367 = vpop.xlane.xlu0 %366
  %v368 = vsel %vm361, %v358, -inf
  %369 = vmax.xlane.f32.xlu0 %v368
  %v370 = vpop.xlane.xlu0 %369
  %v371 = vsel %vm361, %v359, -inf
  %372 = vmax.xlane.f32.xlu0 %v371
  %v373 = vpop.xlane.xlu0 %372
  %v374 = vsel %vm361, %v360, -inf
  %375 = vmax.xlane.f32.xlu0 %v374
  %v376 = vpop.xlane.xlu0 %375
  %v377 = vsub.f32 %v356, %v364
  %v378 = vsub.f32 %v357, %v367
  %v379 = vsub.f32 %v358, %v370
  %v380 = vsub.f32 %v359, %v373
  %v381 = vsub.f32 %v360, %v376
  %v382 = vmul.f32 %v377, 1.442695
  %v383 = vpow.pop %v382
  %v384 = vmul.f32 %v378, 1.442695
  %v385 = vpow.pop %v384
  %v386 = vmul.f32 %v379, 1.442695
  %v387 = vpow.pop %v386
  %v388 = vmul.f32 %v380, 1.442695
  %v389 = vpow.pop %v388
  %v390 = vmul.f32 %v381, 1.442695
  %v391 = vpow.pop %v390
  %v392 = vsel %vm361, %v383, 0.0
  %393 = vadd.xlane.f32.xlu0 %v392
  %v394 = vpop.xlane.xlu0 %393
  %v395 = vsel %vm361, %v385, 0.0
  %396 = vadd.xlane.f32.xlu0 %v395
  %v397 = vpop.xlane.xlu0 %396
  %v398 = vsel %vm361, %v387, 0.0
  %399 = vadd.xlane.f32.xlu0 %v398
  %v400 = vpop.xlane.xlu0 %399
  %v401 = vsel %vm361, %v389, 0.0
  %402 = vadd.xlane.f32.xlu0 %v401
  %v403 = vpop.xlane.xlu0 %402
  %v404 = vsel %vm361, %v391, 0.0
  %405 = vadd.xlane.f32.xlu0 %v404
  %v406 = vpop.xlane.xlu0 %405
  %v407 = vrcp.pop %v394
  %v408 = vrcp.pop %v397
  %v409 = vrcp.pop %v400
  %v410 = vrcp.pop %v403
  %v411 = vrcp.pop %v406
  %v412 = vmul.f32 %v383, %v407
  %v413 = vmul.f32 %v385, %v408
  %v414 = vmul.f32 %v387, %v409
  %v415 = vmul.f32 %v389, %v410
  %v416 = vmul.f32 %v391, %v411
  %417 = vrot.lane.b32.xlu0 %v148, 106
  %v418 = vpop.permute.xlu0 %417
  %419 = vrot.lane.b32.xlu0 %v153, 106
  %v420 = vpop.permute.xlu0 %419
  %421 = vrot.lane.b32.xlu0 %v158, 106
  %v422 = vpop.permute.xlu0 %421
  %423 = vrot.lane.b32.xlu0 %v163, 106
  %v424 = vpop.permute.xlu0 %423
  %425 = vrot.lane.b32.xlu0 %v168, 106
  %v426 = vpop.permute.xlu0 %425
  %v433 = vsel %vm361, %v412, 0
  %v436 = vsel %vm361, %v413, 0
  %v439 = vsel %vm361, %v414, 0
  %v442 = vsel %vm361, %v415, 0
  %v445 = vsel %vm361, %v416, 0
  %447 = vmatprep.subr.mxu0 0.0
  %448 = vmatpush1.msra.mxu0 %v418
  %449 = vmatprep.subr.mxu0 0.0
  %450 = vmatpush1.msra.mxu0 %v420
  %451 = vmatprep.subr.mxu0 0.0
  %452 = vmatpush1.msra.mxu0 %v422
  %453 = vmatprep.subr.mxu0 0.0
  %454 = vmatpush1.msra.mxu0 %v424
  %455 = vmatprep.subr.mxu0 0.0
  %456 = vmatpush1.msra.mxu0 %v426
  %457 = vmatprep.subr.mxu0 0.0
  %458 = vmatpush1.msra.mxu0 0.0
  %459 = vmatprep.subr.mxu0 0.0
  %460 = vmatpush1.msra.mxu0 0.0
  %461 = vmatprep.subr.mxu0 0.0
  %462 = vmatpush1.msra.mxu0 0.0
  %463 = vmatprep.subr.mxu0 0.0
  %464 = vmatpush1.msra.mxu0 0.0
  %465 = vmatprep.subr.mxu0 0.0
  %466 = vmatpush1.msra.mxu0 0.0
  %467 = vmatprep.subr.mxu0 0.0
  %468 = vmatpush1.msra.mxu0 0.0
  %469 = vmatprep.subr.mxu0 0.0
  %470 = vmatpush1.msra.mxu0 0.0
  %471 = vmatprep.subr.mxu0 0.0
  %472 = vmatpush1.msra.mxu0 0.0
  %473 = vmatprep.subr.mxu0 0.0
  %474 = vmatpush1.msra.mxu0 0.0
  %475 = vmatprep.subr.mxu0 0.0
  %476 = vmatpush1.msra.mxu0 0.0
  %477 = vmatprep.subr.mxu0 0.0
  %478 = vmatpush1.msra.mxu0 0.0
  %479 = vmatprep.subr.mxu0 0.0
  %480 = vmatpush1.msra.mxu0 0.0
  %481 = vmatprep.subr.mxu0 0.0
  %482 = vmatpush1.msra.mxu0 0.0
  %483 = vmatprep.subr.mxu0 0.0
  %484 = vmatpush1.msra.mxu0 0.0
  %485 = vmatprep.subr.mxu0 0.0
  %486 = vmatpush1.msra.mxu0 0.0
  %487 = vmatprep.subr.mxu0 0.0
  %488 = vmatpush1.msra.mxu0 0.0
  %489 = vmatprep.subr.mxu0 0.0
  %490 = vmatpush1.msra.mxu0 0.0
  %491 = vmatprep.subr.mxu0 0.0
  %492 = vmatpush1.msra.mxu0 0.0
  %493 = vmatprep.subr.mxu0 0.0
  %494 = vmatpush1.msra.mxu0 0.0
  %495 = vmatprep.subr.mxu0 0.0
  %496 = vmatpush1.msra.mxu0 0.0
  %497 = vmatprep.subr.mxu0 0.0
  %498 = vmatpush1.msra.mxu0 0.0
  %499 = vmatprep.subr.mxu0 0.0
  %500 = vmatpush1.msra.mxu0 0.0
  %501 = vmatprep.subr.mxu0 0.0
  %502 = vmatpush1.msra.mxu0 0.0
  %503 = vmatprep.subr.mxu0 0.0
  %504 = vmatpush1.msra.mxu0 0.0
  %505 = vmatprep.subr.mxu0 0.0
  %506 = vmatpush1.msra.mxu0 0.0
  %507 = vmatprep.subr.mxu0 0.0
  %508 = vmatpush1.msra.mxu0 0.0
  %509 = vmatprep.subr.mxu0 0.0
  %510 = vmatpush1.msra.mxu0 0.0
  %511 = vmatprep.mubr.f32.mxu0 0.0
  %512 = vmatmul.mubr.f32.gmra.mrb[0].mxu0 %v433
  %v513 = vpop.f32.mrb[0].mxu0
  %v514 = vadd.f32 0.0, %v513
  %v515 = vpop.f32.mrb[0].mxu0
  %516 = vmatprep.mubr.f32.mxu0 0.0
  %517 = vmatmul.mubr.f32.gmra.mrb[0].mxu0 %v436
  %v518 = vpop.f32.mrb[0].mxu0
  %v519 = vadd.f32 0.0, %v518
  %v520 = vpop.f32.mrb[0].mxu0
  %521 = vmatprep.mubr.f32.mxu0 0.0
  %522 = vmatmul.mubr.f32.gmra.mrb[0].mxu0 %v439
  %v523 = vpop.f32.mrb[0].mxu0
  %v524 = vadd.f32 0.0, %v523
  %v525 = vpop.f32.mrb[0].mxu0
  %526 = vmatprep.mubr.f32.mxu0 0.0
  %527 = vmatmul.mubr.f32.gmra.mrb[0].mxu0 %v442
  %v528 = vpop.f32.mrb[0].mxu0
  %v529 = vadd.f32 0.0, %v528
  %v530 = vpop.f32.mrb[0].mxu0
  %531 = vmatprep.mubr.f32.mxu0 0.0
  %532 = vmatmul.mubr.f32.gmra.mrb[0].mxu0 %v445
  %v533 = vpop.f32.mrb[0].mxu0
  %v534 = vadd.f32 0.0, %v533
  %v535 = vpop.f32.mrb[0].mxu0
  %536 = vdwg.mxu0
  %v537 = vlaneseq
  %v538 = vshrl.u32 %v537, 7
  %v539 = vsub.s32 0, %v538
  %v540 = vrot.slane %v27, %v539
  %v542 = vsel %vm61, %v514, 0
  %v545 = vsel %vm61, %v519, 0
  %v548 = vsel %vm61, %v524, 0
  %v551 = vsel %vm61, %v529, 0
  %v554 = vsel %vm61, %v534, 0
  %v557 = vsel %vm77, %v26, 0
  %559 = vmatprep.subr.mxu0 0.0
  %560 = vmatpush1.msra.mxu0 %v25
  %561 = vmatprep.subr.mxu0 0.0
  %562 = vmatpush1.msra.mxu0 %v557
  %563 = vmatprep.subr.mxu0 0.0
  %564 = vmatpush1.msra.mxu0 0.0
  %565 = vmatprep.subr.mxu0 0.0
  %566 = vmatpush1.msra.mxu0 0.0
  %567 = vmatprep.subr.mxu0 0.0
  %568 = vmatpush1.msra.mxu0 0.0
  %569 = vmatprep.subr.mxu0 0.0
  %570 = vmatpush1.msra.mxu0 0.0
  %571 = vmatprep.subr.mxu0 0.0
  %572 = vmatpush1.msra.mxu0 0.0
  %573 = vmatprep.subr.mxu0 0.0
  %574 = vmatpush1.msra.mxu0 0.0
  %575 = vmatprep.subr.mxu0 0.0
  %576 = vmatpush1.msra.mxu0 0.0
  %577 = vmatprep.subr.mxu0 0.0
  %578 = vmatpush1.msra.mxu0 0.0
  %579 = vmatprep.subr.mxu0 0.0
  %580 = vmatpush1.msra.mxu0 0.0
  %581 = vmatprep.subr.mxu0 0.0
  %582 = vmatpush1.msra.mxu0 0.0
  %583 = vmatprep.subr.mxu0 0.0
  %584 = vmatpush1.msra.mxu0 0.0
  %585 = vmatprep.subr.mxu0 0.0
  %586 = vmatpush1.msra.mxu0 0.0
  %587 = vmatprep.subr.mxu0 0.0
  %588 = vmatpush1.msra.mxu0 0.0
  %589 = vmatprep.subr.mxu0 0.0
  %590 = vmatpush1.msra.mxu0 0.0
  %591 = vmatprep.subr.mxu0 0.0
  %592 = vmatpush1.msra.mxu0 0.0
  %593 = vmatprep.subr.mxu0 0.0
  %594 = vmatpush1.msra.mxu0 0.0
  %595 = vmatprep.subr.mxu0 0.0
  %596 = vmatpush1.msra.mxu0 0.0
  %597 = vmatprep.subr.mxu0 0.0
  %598 = vmatpush1.msra.mxu0 0.0
  %599 = vmatprep.subr.mxu0 0.0
  %600 = vmatpush1.msra.mxu0 0.0
  %601 = vmatprep.subr.mxu0 0.0
  %602 = vmatpush1.msra.mxu0 0.0
  %603 = vmatprep.subr.mxu0 0.0
  %604 = vmatpush1.msra.mxu0 0.0
  %605 = vmatprep.subr.mxu0 0.0
  %606 = vmatpush1.msra.mxu0 0.0
  %607 = vmatprep.subr.mxu0 0.0
  %608 = vmatpush1.msra.mxu0 0.0
  %609 = vmatprep.subr.mxu0 0.0
  %610 = vmatpush1.msra.mxu0 0.0
  %611 = vmatprep.subr.mxu0 0.0
  %612 = vmatpush1.msra.mxu0 0.0
  %613 = vmatprep.subr.mxu0 0.0
  %614 = vmatpush1.msra.mxu0 0.0
  %615 = vmatprep.subr.mxu0 0.0
  %616 = vmatpush1.msra.mxu0 0.0
  %617 = vmatprep.subr.mxu0 0.0
  %618 = vmatpush1.msra.mxu0 0.0
  %619 = vmatprep.subr.mxu0 0.0
  %620 = vmatpush1.msra.mxu0 0.0
  %621 = vmatprep.subr.mxu0 0.0
  %622 = vmatpush1.msra.mxu0 0.0
  %623 = vmatprep.mubr.f32.mxu0 0.0
  %624 = vmatmul.mubr.f32.gmra.mrb[0].mxu0 %v542
  %v625 = vpop.f32.mrb[0].mxu0
  %v626 = vadd.f32 %v540, %v625
  %v627 = vpop.f32.mrb[0].mxu0
  %628 = vmatprep.mubr.f32.mxu0 0.0
  %629 = vmatmul.mubr.f32.gmra.mrb[0].mxu0 %v545
  %v630 = vpop.f32.mrb[0].mxu0
  %v631 = vadd.f32 %v540, %v630
  %v632 = vpop.f32.mrb[0].mxu0
  %633 = vmatprep.mubr.f32.mxu0 0.0
  %634 = vmatmul.mubr.f32.gmra.mrb[0].mxu0 %v548
  %v635 = vpop.f32.mrb[0].mxu0
  %v636 = vadd.f32 %v540, %v635
  %v637 = vpop.f32.mrb[0].mxu0
  %638 = vmatprep.mubr.f32.mxu0 0.0
  %639 = vmatmul.mubr.f32.gmra.mrb[0].mxu0 %v551
  %v640 = vpop.f32.mrb[0].mxu0
  %v641 = vadd.f32 %v540, %v640
  %v642 = vpop.f32.mrb[0].mxu0
  %643 = vmatprep.mubr.f32.mxu0 0.0
  %644 = vmatmul.mubr.f32.gmra.mrb[0].mxu0 %v554
  %v645 = vpop.f32.mrb[0].mxu0
  %v646 = vadd.f32 %v540, %v645
  %v647 = vpop.f32.mrb[0].mxu0
  %648 = vdwg.mxu0
  %v649 = vadd.f32 %v626, %v17
  %v650 = vadd.f32 %v631, %v18
  %v651 = vadd.f32 %v636, %v19
  %v652 = vadd.f32 %v641, %v20
  %v653 = vadd.f32 %v646, %v21
  %v654 = vsel %vm61, %v649, 0.0
  %655 = vadd.xlane.f32.xlu0 %v654
  %v656 = vpop.xlane.xlu0 %655
  %v657 = vsel %vm61, %v650, 0.0
  %658 = vadd.xlane.f32.xlu0 %v657
  %v659 = vpop.xlane.xlu0 %658
  %v660 = vsel %vm61, %v651, 0.0
  %661 = vadd.xlane.f32.xlu0 %v660
  %v662 = vpop.xlane.xlu0 %661
  %v663 = vsel %vm61, %v652, 0.0
  %664 = vadd.xlane.f32.xlu0 %v663
  %v665 = vpop.xlane.xlu0 %664
  %v666 = vsel %vm61, %v653, 0.0
  %667 = vadd.xlane.f32.xlu0 %v666
  %v668 = vpop.xlane.xlu0 %667
  %v669 = vrcp.pop 11.0
  %v670 = vmul.f32 %v656, %v669
  %v671 = vmul.f32 %v659, %v669
  %v672 = vmul.f32 %v662, %v669
  %v673 = vmul.f32 %v665, %v669
  %v674 = vmul.f32 %v668, %v669
  %v675 = vsub.f32 %v649, %v670
  %v676 = vsub.f32 %v650, %v671
  %v677 = vsub.f32 %v651, %v672
  %v678 = vsub.f32 %v652, %v673
  %v679 = vsub.f32 %v653, %v674
  %v680 = vmul.f32 %v675, %v675
  %v681 = vmul.f32 %v676, %v676
  %v682 = vmul.f32 %v677, %v677
  %v683 = vmul.f32 %v678, %v678
  %v684 = vmul.f32 %v679, %v679
  %v685 = vsel %vm61, %v680, 0.0
  %686 = vadd.xlane.f32.xlu0 %v685
  %v687 = vpop.xlane.xlu0 %686
  %v688 = vsel %vm61, %v681, 0.0
  %689 = vadd.xlane.f32.xlu0 %v688
  %v690 = vpop.xlane.xlu0 %689
  %v691 = vsel %vm61, %v682, 0.0
  %692 = vadd.xlane.f32.xlu0 %v691
  %v693 = vpop.xlane.xlu0 %692
  %v694 = vsel %vm61, %v683, 0.0
  %695 = vadd.xlane.f32.xlu0 %v694
  %v696 = vpop.xlane.xlu0 %695
  %v697 = vsel %vm61, %v684, 0.0
  %698 = vadd.xlane.f32.xlu0 %v697
  %v699 = vpop.xlane.xlu0 %698
  %v700 = vmul.f32 %v687, %v669
  %v701 = vmul.f32 %v690, %v669
  %v702 = vmul.f32 %v693, %v669
  %v703 = vmul.f32 %v696, %v669
  %v704 = vmul.f32 %v699, %v669
  %v705 = vadd.f32 %v700, 1e-05
  %v706 = vadd.f32 %v701, 1e-05
  %v707 = vadd.f32 %v702, 1e-05
  %v708 = vadd.f32 %v703, 1e-05
  %v709 = vadd.f32 %v704, 1e-05
  %v710 = vrsqrt.pop %v705
  %v711 = vrsqrt.pop %v706
  %v712 = vrsqrt.pop %v707
  %v713 = vrsqrt.pop %v708
  %v714 = vrsqrt.pop %v709
  %v715 = vmul.f32 %v675, %v710
  %v716 = vmul.f32 %v676, %v711
  %v717 = vmul.f32 %v677, %v712
  %v718 = vmul.f32 %v678, %v713
  %v719 = vmul.f32 %v679, %v714
  %v720 = vlaneseq
  %v721 = vshrl.u32 %v720, 7
  %v722 = vsub.s32 0, %v721
  %v723 = vrot.slane %v28, %v722
  %v724 = vmul.f32 %v715, %v723
  %v725 = vmul.f32 %v716, %v723
  %v726 = vmul.f32 %v717, %v723
  %v727 = vmul.f32 %v718, %v723
  %v728 = vmul.f32 %v719, %v723
  %v729 = vlaneseq
  %v730 = vshrl.u32 %v729, 7
  %v731 = vsub.s32 0, %v730
  %v732 = vrot.slane %v29, %v731
  %v733 = vadd.f32 %v724, %v732
  %v734 = vadd.f32 %v725, %v732
  %v735 = vadd.f32 %v726, %v732
  %v736 = vadd.f32 %v727, %v732
  %v737 = vadd.f32 %v728, %v732
  %v738 = vlaneseq
  %v739 = vshrl.u32 %v738, 7
  %v740 = vsub.s32 0, %v739
  %v741 = vrot.slane %v32, %v740
  %v743 = vsel %vm61, %v733, 0
  %v746 = vsel %vm61, %v734, 0
  %v749 = vsel %vm61, %v735, 0
  %v752 = vsel %vm61, %v736, 0
  %v755 = vsel %vm61, %v737, 0
  %v758 = vsel %vm77, %v31, 0
  %760 = vmatprep.subr.mxu0 0.0
  %761 = vmatpush1.msra.mxu0 %v30
  %762 = vmatprep.subr.mxu0 0.0
  %763 = vmatpush1.msra.mxu0 %v758
  %764 = vmatprep.subr.mxu0 0.0
  %765 = vmatpush1.msra.mxu0 0.0
  %766 = vmatprep.subr.mxu0 0.0
  %767 = vmatpush1.msra.mxu0 0.0
  %768 = vmatprep.subr.mxu0 0.0
  %769 = vmatpush1.msra.mxu0 0.0
  %770 = vmatprep.subr.mxu0 0.0
  %771 = vmatpush1.msra.mxu0 0.0
  %772 = vmatprep.subr.mxu0 0.0
  %773 = vmatpush1.msra.mxu0 0.0
  %774 = vmatprep.subr.mxu0 0.0
  %775 = vmatpush1.msra.mxu0 0.0
  %776 = vmatprep.subr.mxu0 0.0
  %777 = vmatpush1.msra.mxu0 0.0
  %778 = vmatprep.subr.mxu0 0.0
  %779 = vmatpush1.msra.mxu0 0.0
  %780 = vmatprep.subr.mxu0 0.0
  %781 = vmatpush1.msra.mxu0 0.0
  %782 = vmatprep.subr.mxu0 0.0
  %783 = vmatpush1.msra.mxu0 0.0
  %784 = vmatprep.subr.mxu0 0.0
  %785 = vmatpush1.msra.mxu0 0.0
  %786 = vmatprep.subr.mxu0 0.0
  %787 = vmatpush1.msra.mxu0 0.0
  %788 = vmatprep.subr.mxu0 0.0
  %789 = vmatpush1.msra.mxu0 0.0
  %790 = vmatprep.subr.mxu0 0.0
  %791 = vmatpush1.msra.mxu0 0.0
  %792 = vmatprep.subr.mxu0 0.0
  %793 = vmatpush1.msra.mxu0 0.0
  %794 = vmatprep.subr.mxu0 0.0
  %795 = vmatpush1.msra.mxu0 0.0
  %796 = vmatprep.subr.mxu0 0.0
  %797 = vmatpush1.msra.mxu0 0.0
  %798 = vmatprep.subr.mxu0 0.0
  %799 = vmatpush1.msra.mxu0 0.0
  %800 = vmatprep.subr.mxu0 0.0
  %801 = vmatpush1.msra.mxu0 0.0
  %802 = vmatprep.subr.mxu0 0.0
  %803 = vmatpush1.msra.mxu0 0.0
  %804 = vmatprep.subr.mxu0 0.0
  %805 = vmatpush1.msra.mxu0 0.0
  %806 = vmatprep.subr.mxu0 0.0
  %807 = vmatpush1.msra.mxu0 0.0
  %808 = vmatprep.subr.mxu0 0.0
  %809 = vmatpush1.msra.mxu0 0.0
  %810 = vmatprep.subr.mxu0 0.0
  %811 = vmatpush1.msra.mxu0 0.0
  %812 = vmatprep.subr.mxu0 0.0
  %813 = vmatpush1.msra.mxu0 0.0
  %814 = vmatprep.subr.mxu0 0.0
  %815 = vmatpush1.msra.mxu0 0.0
  %816 = vmatprep.subr.mxu0 0.0
  %817 = vmatpush1.msra.mxu0 0.0
  %818 = vmatprep.subr.mxu0 0.0
  %819 = vmatpush1.msra.mxu0 0.0
  %820 = vmatprep.subr.mxu0 0.0
  %821 = vmatpush1.msra.mxu0 0.0
  %822 = vmatprep.subr.mxu0 0.0
  %823 = vmatpush1.msra.mxu0 0.0
  %824 = vmatprep.mubr.f32.mxu0 0.0
  %825 = vmatmul.mubr.f32.gmra.mrb[0].mxu0 %v743
  %v826 = vpop.f32.mrb[0].mxu0
  %v827 = vadd.f32 %v741, %v826
  %v828 = vpop.f32.mrb[0].mxu0
  %829 = vmatprep.mubr.f32.mxu0 0.0
  %830 = vmatmul.mubr.f32.gmra.mrb[0].mxu0 %v746
  %v831 = vpop.f32.mrb[0].mxu0
  %v832 = vadd.f32 %v741, %v831
  %v833 = vpop.f32.mrb[0].mxu0
  %834 = vmatprep.mubr.f32.mxu0 0.0
  %835 = vmatmul.mubr.f32.gmra.mrb[0].mxu0 %v749
  %v836 = vpop.f32.mrb[0].mxu0
  %v837 = vadd.f32 %v741, %v836
  %v838 = vpop.f32.mrb[0].mxu0
  %839 = vmatprep.mubr.f32.mxu0 0.0
  %840 = vmatmul.mubr.f32.gmra.mrb[0].mxu0 %v752
  %v841 = vpop.f32.mrb[0].mxu0
  %v842 = vadd.f32 %v741, %v841
  %v843 = vpop.f32.mrb[0].mxu0
  %844 = vmatprep.mubr.f32.mxu0 0.0
  %845 = vmatmul.mubr.f32.gmra.mrb[0].mxu0 %v755
  %v846 = vpop.f32.mrb[0].mxu0
  %v847 = vadd.f32 %v741, %v846
  %v848 = vpop.f32.mrb[0].mxu0
  %849 = vdwg.mxu0
  %v850 = vadd.f32 %v733, %v827
  %v851 = vadd.f32 %v734, %v832
  %v852 = vadd.f32 %v735, %v837
  %v853 = vadd.f32 %v736, %v842
  %v854 = vadd.f32 %v737, %v847
  %v855 = vsel %vm61, %v850, 0.0
  %856 = vadd.xlane.f32.xlu0 %v855
  %v857 = vpop.xlane.xlu0 %856
  %v858 = vsel %vm61, %v851, 0.0
  %859 = vadd.xlane.f32.xlu0 %v858
  %v860 = vpop.xlane.xlu0 %859
  %v861 = vsel %vm61, %v852, 0.0
  %862 = vadd.xlane.f32.xlu0 %v861
  %v863 = vpop.xlane.xlu0 %862
  %v864 = vsel %vm61, %v853, 0.0
  %865 = vadd.xlane.f32.xlu0 %v864
  %v866 = vpop.xlane.xlu0 %865
  %v867 = vsel %vm61, %v854, 0.0
  %868 = vadd.xlane.f32.xlu0 %v867
  %v869 = vpop.xlane.xlu0 %868
  %v870 = vmul.f32 %v857, %v669
  %v871 = vmul.f32 %v860, %v669
  %v872 = vmul.f32 %v863, %v669
  %v873 = vmul.f32 %v866, %v669
  %v874 = vmul.f32 %v869, %v669
  %v875 = vsub.f32 %v850, %v870
  %v876 = vsub.f32 %v851, %v871
  %v877 = vsub.f32 %v852, %v872
  %v878 = vsub.f32 %v853, %v873
  %v879 = vsub.f32 %v854, %v874
  %v880 = vmul.f32 %v875, %v875
  %v881 = vmul.f32 %v876, %v876
  %v882 = vmul.f32 %v877, %v877
  %v883 = vmul.f32 %v878, %v878
  %v884 = vmul.f32 %v879, %v879
  %v885 = vsel %vm61, %v880, 0.0
  %886 = vadd.xlane.f32.xlu0 %v885
  %v887 = vpop.xlane.xlu0 %886
  %v888 = vsel %vm61, %v881, 0.0
  %889 = vadd.xlane.f32.xlu0 %v888
  %v890 = vpop.xlane.xlu0 %889
  %v891 = vsel %vm61, %v882, 0.0
  %892 = vadd.xlane.f32.xlu0 %v891
  %v893 = vpop.xlane.xlu0 %892
  %v894 = vsel %vm61, %v883, 0.0
  %895 = vadd.xlane.f32.xlu0 %v894
  %v896 = vpop.xlane.xlu0 %895
  %v897 = vsel %vm61, %v884, 0.0
  %898 = vadd.xlane.f32.xlu0 %v897
  %v899 = vpop.xlane.xlu0 %898
  %v900 = vmul.f32 %v887, %v669
  %v901 = vmul.f32 %v890, %v669
  %v902 = vmul.f32 %v893, %v669
  %v903 = vmul.f32 %v896, %v669
  %v904 = vmul.f32 %v899, %v669
  %v905 = vadd.f32 %v900, 1e-05
  %v906 = vadd.f32 %v901, 1e-05
  %v907 = vadd.f32 %v902, 1e-05
  %v908 = vadd.f32 %v903, 1e-05
  %v909 = vadd.f32 %v904, 1e-05
  %v910 = vrsqrt.pop %v905
  %v911 = vrsqrt.pop %v906
  %v912 = vrsqrt.pop %v907
  %v913 = vrsqrt.pop %v908
  %v914 = vrsqrt.pop %v909
  %v915 = vmul.f32 %v875, %v910
  %v916 = vmul.f32 %v876, %v911
  %v917 = vmul.f32 %v877, %v912
  %v918 = vmul.f32 %v878, %v913
  %v919 = vmul.f32 %v879, %v914
  %v920 = vlaneseq
  %v921 = vshrl.u32 %v920, 7
  %v922 = vsub.s32 0, %v921
  %v923 = vrot.slane %v33, %v922
  %v924 = vmul.f32 %v915, %v923
  %v925 = vmul.f32 %v916, %v923
  %v926 = vmul.f32 %v917, %v923
  %v927 = vmul.f32 %v918, %v923
  %v928 = vmul.f32 %v919, %v923
  %v929 = vlaneseq
  %v930 = vshrl.u32 %v929, 7
  %v931 = vsub.s32 0, %v930
  %v932 = vrot.slane %v34, %v931
  %v933 = vadd.f32 %v924, %v932
  %v934 = vadd.f32 %v925, %v932
  %v935 = vadd.f32 %v926, %v932
  %v936 = vadd.f32 %v927, %v932
  %v937 = vadd.f32 %v928, %v932
  %v938 = vlaneseq
  %v939 = vshrl.u32 %v938, 7
  %v940 = vsub.s32 0, %v939
  %v941 = vrot.slane %v37, %v940
  %v943 = vsel %vm61, %v933, 0
  %v946 = vsel %vm61, %v934, 0
  %v949 = vsel %vm61, %v935, 0
  %v952 = vsel %vm61, %v936, 0
  %v955 = vsel %vm61, %v937, 0
  %v958 = vsel %vm77, %v36, 0
  %960 = vmatprep.subr.mxu0 0.0
  %961 = vmatpush1.msra.mxu0 %v35
  %962 = vmatprep.subr.mxu0 0.0
  %963 = vmatpush1.msra.mxu0 %v958
  %964 = vmatprep.subr.mxu0 0.0
  %965 = vmatpush1.msra.mxu0 0.0
  %966 = vmatprep.subr.mxu0 0.0
  %967 = vmatpush1.msra.mxu0 0.0
  %968 = vmatprep.subr.mxu0 0.0
  %969 = vmatpush1.msra.mxu0 0.0
  %970 = vmatprep.subr.mxu0 0.0
  %971 = vmatpush1.msra.mxu0 0.0
  %972 = vmatprep.subr.mxu0 0.0
  %973 = vmatpush1.msra.mxu0 0.0
  %974 = vmatprep.subr.mxu0 0.0
  %975 = vmatpush1.msra.mxu0 0.0
  %976 = vmatprep.subr.mxu0 0.0
  %977 = vmatpush1.msra.mxu0 0.0
  %978 = vmatprep.subr.mxu0 0.0
  %979 = vmatpush1.msra.mxu0 0.0
  %980 = vmatprep.subr.mxu0 0.0
  %981 = vmatpush1.msra.mxu0 0.0
  %982 = vmatprep.subr.mxu0 0.0
  %983 = vmatpush1.msra.mxu0 0.0
  %984 = vmatprep.subr.mxu0 0.0
  %985 = vmatpush1.msra.mxu0 0.0
  %986 = vmatprep.subr.mxu0 0.0
  %987 = vmatpush1.msra.mxu0 0.0
  %988 = vmatprep.subr.mxu0 0.0
  %989 = vmatpush1.msra.mxu0 0.0
  %990 = vmatprep.subr.mxu0 0.0
  %991 = vmatpush1.msra.mxu0 0.0
  %992 = vmatprep.subr.mxu0 0.0
  %993 = vmatpush1.msra.mxu0 0.0
  %994 = vmatprep.subr.mxu0 0.0
  %995 = vmatpush1.msra.mxu0 0.0
  %996 = vmatprep.subr.mxu0 0.0
  %997 = vmatpush1.msra.mxu0 0.0
  %998 = vmatprep.subr.mxu0 0.0
  %999 = vmatpush1.msra.mxu0 0.0
  %1000 = vmatprep.subr.mxu0 0.0
  %1001 = vmatpush1.msra.mxu0 0.0
  %1002 = vmatprep.subr.mxu0 0.0
  %1003 = vmatpush1.msra.mxu0 0.0
  %1004 = vmatprep.subr.mxu0 0.0
  %1005 = vmatpush1.msra.mxu0 0.0
  %1006 = vmatprep.subr.mxu0 0.0
  %1007 = vmatpush1.msra.mxu0 0.0
  %1008 = vmatprep.subr.mxu0 0.0
  %1009 = vmatpush1.msra.mxu0 0.0
  %1010 = vmatprep.subr.mxu0 0.0
  %1011 = vmatpush1.msra.mxu0 0.0
  %1012 = vmatprep.subr.mxu0 0.0
  %1013 = vmatpush1.msra.mxu0 0.0
  %1014 = vmatprep.subr.mxu0 0.0
  %1015 = vmatpush1.msra.mxu0 0.0
  %1016 = vmatprep.subr.mxu0 0.0
  %1017 = vmatpush1.msra.mxu0 0.0
  %1018 = vmatprep.subr.mxu0 0.0
  %1019 = vmatpush1.msra.mxu0 0.0
  %1020 = vmatprep.subr.mxu0 0.0
  %1021 = vmatpush1.msra.mxu0 0.0
  %1022 = vmatprep.subr.mxu0 0.0
  %1023 = vmatpush1.msra.mxu0 0.0
  %1024 = vmatprep.mubr.f32.mxu0 0.0
  %1025 = vmatmul.mubr.f32.gmra.mrb[0].mxu0 %v943
  %v1026 = vpop.f32.mrb[0].mxu0
  %v1027 = vadd.f32 %v941, %v1026
  %v1028 = vpop.f32.mrb[0].mxu0
  %1029 = vmatprep.mubr.f32.mxu0 0.0
  %1030 = vmatmul.mubr.f32.gmra.mrb[0].mxu0 %v946
  %v1031 = vpop.f32.mrb[0].mxu0
  %v1032 = vadd.f32 %v941, %v1031
  %v1033 = vpop.f32.mrb[0].mxu0
  %1034 = vmatprep.mubr.f32.mxu0 0.0
  %1035 = vmatmul.mubr.f32.gmra.mrb[0].mxu0 %v949
  %v1036 = vpop.f32.mrb[0].mxu0
  %v1037 = vadd.f32 %v941, %v1036
  %v1038 = vpop.f32.mrb[0].mxu0
  %1039 = vmatprep.mubr.f32.mxu0 0.0
  %1040 = vmatmul.mubr.f32.gmra.mrb[0].mxu0 %v952
  %v1041 = vpop.f32.mrb[0].mxu0
  %v1042 = vadd.f32 %v941, %v1041
  %v1043 = vpop.f32.mrb[0].mxu0
  %1044 = vmatprep.mubr.f32.mxu0 0.0
  %1045 = vmatmul.mubr.f32.gmra.mrb[0].mxu0 %v955
  %v1046 = vpop.f32.mrb[0].mxu0
  %v1047 = vadd.f32 %v941, %v1046
  %v1048 = vpop.f32.mrb[0].mxu0
  %1049 = vdwg.mxu0
  %1050 = vst [vmem:[#allocation2] sm:$0xff] %v1027
  %1051 = vst [vmem:[#allocation2 + $0x8] sm:$0xff] %v1032
  %1052 = vst [vmem:[#allocation2 + $0x10] sm:$0xff] %v1037
  %1053 = vst [vmem:[#allocation2 + $0x18] sm:$0xff] %v1042
  %1054 = vst [vmem:[#allocation2 + $0x20] sm:$0xff] %v1047
  %v1055 = vld [vmem:[#allocation2] sm:$0x3]
  %vm1056 = vcmask 261120
  %v1058 = vsel %vm1056, 0.0, 0
  %1060 = vmatprep.subr.mxu0 0.0
  %1061 = vmatpush1.msra.mxu0 %v38
  %1062 = vmatprep.subr.mxu0 0.0
  %1063 = vmatpush1.msra.mxu0 %v39
  %1064 = vmatprep.subr.mxu0 0.0
  %1065 = vmatpush1.msra.mxu0 %v40
  %1066 = vmatprep.subr.mxu0 0.0
  %1067 = vmatpush1.msra.mxu0 %v41
  %1068 = vmatprep.subr.mxu0 0.0
  %1069 = vmatpush1.msra.mxu0 0.0
  %1070 = vmatprep.subr.mxu0 0.0
  %1071 = vmatpush1.msra.mxu0 0.0
  %1072 = vmatprep.subr.mxu0 0.0
  %1073 = vmatpush1.msra.mxu0 0.0
  %1074 = vmatprep.subr.mxu0 0.0
  %1075 = vmatpush1.msra.mxu0 0.0
  %1076 = vmatprep.subr.mxu0 0.0
  %1077 = vmatpush1.msra.mxu0 0.0
  %1078 = vmatprep.subr.mxu0 0.0
  %1079 = vmatpush1.msra.mxu0 0.0
  %1080 = vmatprep.subr.mxu0 0.0
  %1081 = vmatpush1.msra.mxu0 0.0
  %1082 = vmatprep.subr.mxu0 0.0
  %1083 = vmatpush1.msra.mxu0 0.0
  %1084 = vmatprep.subr.mxu0 0.0
  %1085 = vmatpush1.msra.mxu0 0.0
  %1086 = vmatprep.subr.mxu0 0.0
  %1087 = vmatpush1.msra.mxu0 0.0
  %1088 = vmatprep.subr.mxu0 0.0
  %1089 = vmatpush1.msra.mxu0 0.0
  %1090 = vmatprep.subr.mxu0 0.0
  %1091 = vmatpush1.msra.mxu0 0.0
  %1092 = vmatprep.subr.mxu0 0.0
  %1093 = vmatpush1.msra.mxu0 0.0
  %1094 = vmatprep.subr.mxu0 0.0
  %1095 = vmatpush1.msra.mxu0 0.0
  %1096 = vmatprep.subr.mxu0 0.0
  %1097 = vmatpush1.msra.mxu0 0.0
  %1098 = vmatprep.subr.mxu0 0.0
  %1099 = vmatpush1.msra.mxu0 0.0
  %1100 = vmatprep.subr.mxu0 0.0
  %1101 = vmatpush1.msra.mxu0 0.0
  %1102 = vmatprep.subr.mxu0 0.0
  %1103 = vmatpush1.msra.mxu0 0.0
  %1104 = vmatprep.subr.mxu0 0.0
  %1105 = vmatpush1.msra.mxu0 0.0
  %1106 = vmatprep.subr.mxu0 0.0
  %1107 = vmatpush1.msra.mxu0 0.0
  %1108 = vmatprep.subr.mxu0 0.0
  %1109 = vmatpush1.msra.mxu0 0.0
  %1110 = vmatprep.subr.mxu0 0.0
  %1111 = vmatpush1.msra.mxu0 0.0
  %1112 = vmatprep.subr.mxu0 0.0
  %1113 = vmatpush1.msra.mxu0 0.0
  %1114 = vmatprep.subr.mxu0 0.0
  %1115 = vmatpush1.msra.mxu0 0.0
  %1116 = vmatprep.subr.mxu0 0.0
  %1117 = vmatpush1.msra.mxu0 0.0
  %1118 = vmatprep.subr.mxu0 0.0
  %1119 = vmatpush1.msra.mxu0 0.0
  %1120 = vmatprep.subr.mxu0 0.0
  %1121 = vmatpush1.msra.mxu0 0.0
  %1122 = vmatprep.subr.mxu0 0.0
  %1123 = vmatpush1.msra.mxu0 0.0
  %1124 = vmatprep.mubr.f32.mxu0 0.0
  %1125 = vmatmul.mubr.f32.gmra.mrb[0].mxu0 %v1058
  %v1126 = vpop.f32.mrb[0].mxu0
  %v1127 = vadd.f32 0.0, %v1126
  %v1128 = vpop.f32.mrb[0].mxu0
  %1129 = vdwg.mxu0
  %v1130 = vadd.f32 %v1055, %v1127
  %v1131 = vxor.u32 %v1130, 2147483648
  %v1132 = vmul.f32 %v1131, 1.442695
  %v1133 = vpow.pop %v1132
  %v1134 = vadd.f32 %v1133, 1.0
  %v1135 = vrcp.pop %v1134
  %v1136 = vmul.f32 1.0, %v1135
  %v1137 = vtanh.pop %v1130
  %v1138 = vmul.f32 %v1136, 0.0
  %1140 = vrot.lane.b32.xlu0 %v1137, 64
  %v1141 = vpop.permute.xlu0 %1140
  %v1143 = vmul.f32 %v1136, %v1141
  %1145 = vrot.lane.b32.xlu0 %v1143, 32
  %v1146 = vpop.permute.xlu0 %1145
  %v1148 = vadd.f32 %v1138, %v1146
  %v1149 = vtanh.pop %v1148
  %1151 = vrot.lane.b32.xlu0 %v1149, 64
  %v1152 = vpop.permute.xlu0 %1151
  %v1154 = vmul.f32 %v1136, %v1152
  %v1155 = vld [vmem:[#allocation2 + $0x2] sm:$0x3]
  %1157 = vrot.lane.b32.xlu0 %v1154, 32
  %v1158 = vpop.permute.xlu0 %1157
  %v1159 = vsel %vm1056, %v1158, 0
  %1161 = vmatprep.subr.mxu0 0.0
  %1162 = vmatpush1.msra.mxu0 %v38
  %1163 = vmatprep.subr.mxu0 0.0
  %1164 = vmatpush1.msra.mxu0 %v39
  %1165 = vmatprep.subr.mxu0 0.0
  %1166 = vmatpush1.msra.mxu0 %v40
  %1167 = vmatprep.subr.mxu0 0.0
  %1168 = vmatpush1.msra.mxu0 %v41
  %1169 = vmatprep.subr.mxu0 0.0
  %1170 = vmatpush1.msra.mxu0 0.0
  %1171 = vmatprep.subr.mxu0 0.0
  %1172 = vmatpush1.msra.mxu0 0.0
  %1173 = vmatprep.subr.mxu0 0.0
  %1174 = vmatpush1.msra.mxu0 0.0
  %1175 = vmatprep.subr.mxu0 0.0
  %1176 = vmatpush1.msra.mxu0 0.0
  %1177 = vmatprep.subr.mxu0 0.0
  %1178 = vmatpush1.msra.mxu0 0.0
  %1179 = vmatprep.subr.mxu0 0.0
  %1180 = vmatpush1.msra.mxu0 0.0
  %1181 = vmatprep.subr.mxu0 0.0
  %1182 = vmatpush1.msra.mxu0 0.0
  %1183 = vmatprep.subr.mxu0 0.0
  %1184 = vmatpush1.msra.mxu0 0.0
  %1185 = vmatprep.subr.mxu0 0.0
  %1186 = vmatpush1.msra.mxu0 0.0
  %1187 = vmatprep.subr.mxu0 0.0
  %1188 = vmatpush1.msra.mxu0 0.0
  %1189 = vmatprep.subr.mxu0 0.0
  %1190 = vmatpush1.msra.mxu0 0.0
  %1191 = vmatprep.subr.mxu0 0.0
  %1192 = vmatpush1.msra.mxu0 0.0
  %1193 = vmatprep.subr.mxu0 0.0
  %1194 = vmatpush1.msra.mxu0 0.0
  %1195 = vmatprep.subr.mxu0 0.0
  %1196 = vmatpush1.msra.mxu0 0.0
  %1197 = vmatprep.subr.mxu0 0.0
  %1198 = vmatpush1.msra.mxu0 0.0
  %1199 = vmatprep.subr.mxu0 0.0
  %1200 = vmatpush1.msra.mxu0 0.0
  %1201 = vmatprep.subr.mxu0 0.0
  %1202 = vmatpush1.msra.mxu0 0.0
  %1203 = vmatprep.subr.mxu0 0.0
  %1204 = vmatpush1.msra.mxu0 0.0
  %1205 = vmatprep.subr.mxu0 0.0
  %1206 = vmatpush1.msra.mxu0 0.0
  %1207 = vmatprep.subr.mxu0 0.0
  %1208 = vmatpush1.msra.mxu0 0.0
  %1209 = vmatprep.subr.mxu0 0.0
  %1210 = vmatpush1.msra.mxu0 0.0
  %1211 = vmatprep.subr.mxu0 0.0
  %1212 = vmatpush1.msra.mxu0 0.0
  %1213 = vmatprep.subr.mxu0 0.0
  %1214 = vmatpush1.msra.mxu0 0.0
  %1215 = vmatprep.subr.mxu0 0.0
  %1216 = vmatpush1.msra.mxu0 0.0
  %1217 = vmatprep.subr.mxu0 0.0
  %1218 = vmatpush1.msra.mxu0 0.0
  %1219 = vmatprep.subr.mxu0 0.0
  %1220 = vmatpush1.msra.mxu0 0.0
  %1221 = vmatprep.subr.mxu0 0.0
  %1222 = vmatpush1.msra.mxu0 0.0
  %1223 = vmatprep.subr.mxu0 0.0
  %1224 = vmatpush1.msra.mxu0 0.0
  %1225 = vmatprep.mubr.f32.mxu0 0.0
  %1226 = vmatmul.mubr.f32.gmra.mrb[0].mxu0 %v1159
  %v1227 = vpop.f32.mrb[0].mxu0
  %v1228 = vadd.f32 0.0, %v1227
  %v1229 = vpop.f32.mrb[0].mxu0
  %1230 = vdwg.mxu0
  %v1231 = vadd.f32 %v1155, %v1228
  %v1232 = vxor.u32 %v1231, 2147483648
  %v1233 = vmul.f32 %v1232, 1.442695
  %v1234 = vpow.pop %v1233
  %v1235 = vadd.f32 %v1234, 1.0
  %v1236 = vrcp.pop %v1235
  %v1237 = vmul.f32 1.0, %v1236
  %v1238 = vtanh.pop %v1231
  %v1239 = vmul.f32 %v1237, %v1148
  %1241 = vrot.lane.b32.xlu0 %v1238, 64
  %v1242 = vpop.permute.xlu0 %1241
  %v1244 = vmul.f32 %v1237, %v1242
  %1246 = vrot.lane.b32.xlu0 %v1244, 32
  %v1247 = vpop.permute.xlu0 %1246
  %v1249 = vadd.f32 %v1239, %v1247
  %v1250 = vtanh.pop %v1249
  %1252 = vrot.lane.b32.xlu0 %v1250, 64
  %v1253 = vpop.permute.xlu0 %1252
  %v1255 = vmul.f32 %v1237, %v1253
  %v1256 = vld [vmem:[#allocation2 + $0x4] sm:$0x3]
  %1258 = vrot.lane.b32.xlu0 %v1255, 32
  %v1259 = vpop.permute.xlu0 %1258
  %v1260 = vsel %vm1056, %v1259, 0
  %1262 = vmatprep.subr.mxu0 0.0
  %1263 = vmatpush1.msra.mxu0 %v38
  %1264 = vmatprep.subr.mxu0 0.0
  %1265 = vmatpush1.msra.mxu0 %v39
  %1266 = vmatprep.subr.mxu0 0.0
  %1267 = vmatpush1.msra.mxu0 %v40
  %1268 = vmatprep.subr.mxu0 0.0
  %1269 = vmatpush1.msra.mxu0 %v41
  %1270 = vmatprep.subr.mxu0 0.0
  %1271 = vmatpush1.msra.mxu0 0.0
  %1272 = vmatprep.subr.mxu0 0.0
  %1273 = vmatpush1.msra.mxu0 0.0
  %1274 = vmatprep.subr.mxu0 0.0
  %1275 = vmatpush1.msra.mxu0 0.0
  %1276 = vmatprep.subr.mxu0 0.0
  %1277 = vmatpush1.msra.mxu0 0.0
  %1278 = vmatprep.subr.mxu0 0.0
  %1279 = vmatpush1.msra.mxu0 0.0
  %1280 = vmatprep.subr.mxu0 0.0
  %1281 = vmatpush1.msra.mxu0 0.0
  %1282 = vmatprep.subr.mxu0 0.0
  %1283 = vmatpush1.msra.mxu0 0.0
  %1284 = vmatprep.subr.mxu0 0.0
  %1285 = vmatpush1.msra.mxu0 0.0
  %1286 = vmatprep.subr.mxu0 0.0
  %1287 = vmatpush1.msra.mxu0 0.0
  %1288 = vmatprep.subr.mxu0 0.0
  %1289 = vmatpush1.msra.mxu0 0.0
  %1290 = vmatprep.subr.mxu0 0.0
  %1291 = vmatpush1.msra.mxu0 0.0
  %1292 = vmatprep.subr.mxu0 0.0
  %1293 = vmatpush1.msra.mxu0 0.0
  %1294 = vmatprep.subr.mxu0 0.0
  %1295 = vmatpush1.msra.mxu0 0.0
  %1296 = vmatprep.subr.mxu0 0.0
  %1297 = vmatpush1.msra.mxu0 0.0
  %1298 = vmatprep.subr.mxu0 0.0
  %1299 = vmatpush1.msra.mxu0 0.0
  %1300 = vmatprep.subr.mxu0 0.0
  %1301 = vmatpush1.msra.mxu0 0.0
  %1302 = vmatprep.subr.mxu0 0.0
  %1303 = vmatpush1.msra.mxu0 0.0
  %1304 = vmatprep.subr.mxu0 0.0
  %1305 = vmatpush1.msra.mxu0 0.0
  %1306 = vmatprep.subr.mxu0 0.0
  %1307 = vmatpush1.msra.mxu0 0.0
  %1308 = vmatprep.subr.mxu0 0.0
  %1309 = vmatpush1.msra.mxu0 0.0
  %1310 = vmatprep.subr.mxu0 0.0
  %1311 = vmatpush1.msra.mxu0 0.0
  %1312 = vmatprep.subr.mxu0 0.0
  %1313 = vmatpush1.msra.mxu0 0.0
  %1314 = vmatprep.subr.mxu0 0.0
  %1315 = vmatpush1.msra.mxu0 0.0
  %1316 = vmatprep.subr.mxu0 0.0
  %1317 = vmatpush1.msra.mxu0 0.0
  %1318 = vmatprep.subr.mxu0 0.0
  %1319 = vmatpush1.msra.mxu0 0.0
  %1320 = vmatprep.subr.mxu0 0.0
  %1321 = vmatpush1.msra.mxu0 0.0
  %1322 = vmatprep.subr.mxu0 0.0
  %1323 = vmatpush1.msra.mxu0 0.0
  %1324 = vmatprep.subr.mxu0 0.0
  %1325 = vmatpush1.msra.mxu0 0.0
  %1326 = vmatprep.mubr.f32.mxu0 0.0
  %1327 = vmatmul.mubr.f32.gmra.mrb[0].mxu0 %v1260
  %v1328 = vpop.f32.mrb[0].mxu0
  %v1329 = vadd.f32 0.0, %v1328
  %v1330 = vpop.f32.mrb[0].mxu0
  %1331 = vdwg.mxu0
  %v1332 = vadd.f32 %v1256, %v1329
  %v1333 = vxor.u32 %v1332, 2147483648
  %v1334 = vmul.f32 %v1333, 1.442695
  %v1335 = vpow.pop %v1334
  %v1336 = vadd.f32 %v1335, 1.0
  %v1337 = vrcp.pop %v1336
  %v1338 = vmul.f32 1.0, %v1337
  %v1339 = vtanh.pop %v1332
  %v1340 = vmul.f32 %v1338, %v1249
  %1342 = vrot.lane.b32.xlu0 %v1339, 64
  %v1343 = vpop.permute.xlu0 %1342
  %v1345 = vmul.f32 %v1338, %v1343
  %1347 = vrot.lane.b32.xlu0 %v1345, 32
  %v1348 = vpop.permute.xlu0 %1347
  %v1350 = vadd.f32 %v1340, %v1348
  %v1351 = vtanh.pop %v1350
  %1353 = vrot.lane.b32.xlu0 %v1351, 64
  %v1354 = vpop.permute.xlu0 %1353
  %v1356 = vmul.f32 %v1338, %v1354
  %v1357 = vld [vmem:[#allocation2 + $0x6] sm:$0x3]
  %1359 = vrot.lane.b32.xlu0 %v1356, 32
  %v1360 = vpop.permute.xlu0 %1359
  %v1361 = vsel %vm1056, %v1360, 0
  %1363 = vmatprep.subr.mxu0 0.0
  %1364 = vmatpush1.msra.mxu0 %v38
  %1365 = vmatprep.subr.mxu0 0.0
  %1366 = vmatpush1.msra.mxu0 %v39
  %1367 = vmatprep.subr.mxu0 0.0
  %1368 = vmatpush1.msra.mxu0 %v40
  %1369 = vmatprep.subr.mxu0 0.0
  %1370 = vmatpush1.msra.mxu0 %v41
  %1371 = vmatprep.subr.mxu0 0.0
  %1372 = vmatpush1.msra.mxu0 0.0
  %1373 = vmatprep.subr.mxu0 0.0
  %1374 = vmatpush1.msra.mxu0 0.0
  %1375 = vmatprep.subr.mxu0 0.0
  %1376 = vmatpush1.msra.mxu0 0.0
  %1377 = vmatprep.subr.mxu0 0.0
  %1378 = vmatpush1.msra.mxu0 0.0
  %1379 = vmatprep.subr.mxu0 0.0
  %1380 = vmatpush1.msra.mxu0 0.0
  %1381 = vmatprep.subr.mxu0 0.0
  %1382 = vmatpush1.msra.mxu0 0.0
  %1383 = vmatprep.subr.mxu0 0.0
  %1384 = vmatpush1.msra.mxu0 0.0
  %1385 = vmatprep.subr.mxu0 0.0
  %1386 = vmatpush1.msra.mxu0 0.0
  %1387 = vmatprep.subr.mxu0 0.0
  %1388 = vmatpush1.msra.mxu0 0.0
  %1389 = vmatprep.subr.mxu0 0.0
  %1390 = vmatpush1.msra.mxu0 0.0
  %1391 = vmatprep.subr.mxu0 0.0
  %1392 = vmatpush1.msra.mxu0 0.0
  %1393 = vmatprep.subr.mxu0 0.0
  %1394 = vmatpush1.msra.mxu0 0.0
  %1395 = vmatprep.subr.mxu0 0.0
  %1396 = vmatpush1.msra.mxu0 0.0
  %1397 = vmatprep.subr.mxu0 0.0
  %1398 = vmatpush1.msra.mxu0 0.0
  %1399 = vmatprep.subr.mxu0 0.0
  %1400 = vmatpush1.msra.mxu0 0.0
  %1401 = vmatprep.subr.mxu0 0.0
  %1402 = vmatpush1.msra.mxu0 0.0
  %1403 = vmatprep.subr.mxu0 0.0
  %1404 = vmatpush1.msra.mxu0 0.0
  %1405 = vmatprep.subr.mxu0 0.0
  %1406 = vmatpush1.msra.mxu0 0.0
  %1407 = vmatprep.subr.mxu0 0.0
  %1408 = vmatpush1.msra.mxu0 0.0
  %1409 = vmatprep.subr.mxu0 0.0
  %1410 = vmatpush1.msra.mxu0 0.0
  %1411 = vmatprep.subr.mxu0 0.0
  %1412 = vmatpush1.msra.mxu0 0.0
  %1413 = vmatprep.subr.mxu0 0.0
  %1414 = vmatpush1.msra.mxu0 0.0
  %1415 = vmatprep.subr.mxu0 0.0
  %1416 = vmatpush1.msra.mxu0 0.0
  %1417 = vmatprep.subr.mxu0 0.0
  %1418 = vmatpush1.msra.mxu0 0.0
  %1419 = vmatprep.subr.mxu0 0.0
  %1420 = vmatpush1.msra.mxu0 0.0
  %1421 = vmatprep.subr.mxu0 0.0
  %1422 = vmatpush1.msra.mxu0 0.0
  %1423 = vmatprep.subr.mxu0 0.0
  %1424 = vmatpush1.msra.mxu0 0.0
  %1425 = vmatprep.subr.mxu0 0.0
  %1426 = vmatpush1.msra.mxu0 0.0
  %1427 = vmatprep.mubr.f32.mxu0 0.0
  %1428 = vmatmul.mubr.f32.gmra.mrb[0].mxu0 %v1361
  %v1429 = vpop.f32.mrb[0].mxu0
  %v1430 = vadd.f32 0.0, %v1429
  %v1431 = vpop.f32.mrb[0].mxu0
  %1432 = vdwg.mxu0
  %v1433 = vadd.f32 %v1357, %v1430
  %v1434 = vxor.u32 %v1433, 2147483648
  %v1435 = vmul.f32 %v1434, 1.442695
  %v1436 = vpow.pop %v1435
  %v1437 = vadd.f32 %v1436, 1.0
  %v1438 = vrcp.pop %v1437
  %v1439 = vmul.f32 1.0, %v1438
  %v1440 = vtanh.pop %v1433
  %v1441 = vmul.f32 %v1439, %v1350
  %1443 = vrot.lane.b32.xlu0 %v1440, 64
  %v1444 = vpop.permute.xlu0 %1443
  %v1446 = vmul.f32 %v1439, %v1444
  %1448 = vrot.lane.b32.xlu0 %v1446, 32
  %v1449 = vpop.permute.xlu0 %1448
  %v1451 = vadd.f32 %v1441, %v1449
  %v1452 = vtanh.pop %v1451
  %1454 = vrot.lane.b32.xlu0 %v1452, 64
  %v1455 = vpop.permute.xlu0 %1454
  %v1457 = vmul.f32 %v1439, %v1455
  %v1458 = vld [vmem:[#allocation2 + $0x8] sm:$0x3]
  %1460 = vrot.lane.b32.xlu0 %v1457, 32
  %v1461 = vpop.permute.xlu0 %1460
  %v1462 = vsel %vm1056, %v1461, 0
  %1464 = vmatprep.subr.mxu0 0.0
  %1465 = vmatpush1.msra.mxu0 %v38
  %1466 = vmatprep.subr.mxu0 0.0
  %1467 = vmatpush1.msra.mxu0 %v39
  %1468 = vmatprep.subr.mxu0 0.0
  %1469 = vmatpush1.msra.mxu0 %v40
  %1470 = vmatprep.subr.mxu0 0.0
  %1471 = vmatpush1.msra.mxu0 %v41
  %1472 = vmatprep.subr.mxu0 0.0
  %1473 = vmatpush1.msra.mxu0 0.0
  %1474 = vmatprep.subr.mxu0 0.0
  %1475 = vmatpush1.msra.mxu0 0.0
  %1476 = vmatprep.subr.mxu0 0.0
  %1477 = vmatpush1.msra.mxu0 0.0
  %1478 = vmatprep.subr.mxu0 0.0
  %1479 = vmatpush1.msra.mxu0 0.0
  %1480 = vmatprep.subr.mxu0 0.0
  %1481 = vmatpush1.msra.mxu0 0.0
  %1482 = vmatprep.subr.mxu0 0.0
  %1483 = vmatpush1.msra.mxu0 0.0
  %1484 = vmatprep.subr.mxu0 0.0
  %1485 = vmatpush1.msra.mxu0 0.0
  %1486 = vmatprep.subr.mxu0 0.0
  %1487 = vmatpush1.msra.mxu0 0.0
  %1488 = vmatprep.subr.mxu0 0.0
  %1489 = vmatpush1.msra.mxu0 0.0
  %1490 = vmatprep.subr.mxu0 0.0
  %1491 = vmatpush1.msra.mxu0 0.0
  %1492 = vmatprep.subr.mxu0 0.0
  %1493 = vmatpush1.msra.mxu0 0.0
  %1494 = vmatprep.subr.mxu0 0.0
  %1495 = vmatpush1.msra.mxu0 0.0
  %1496 = vmatprep.subr.mxu0 0.0
  %1497 = vmatpush1.msra.mxu0 0.0
  %1498 = vmatprep.subr.mxu0 0.0
  %1499 = vmatpush1.msra.mxu0 0.0
  %1500 = vmatprep.subr.mxu0 0.0
  %1501 = vmatpush1.msra.mxu0 0.0
  %1502 = vmatprep.subr.mxu0 0.0
  %1503 = vmatpush1.msra.mxu0 0.0
  %1504 = vmatprep.subr.mxu0 0.0
  %1505 = vmatpush1.msra.mxu0 0.0
  %1506 = vmatprep.subr.mxu0 0.0
  %1507 = vmatpush1.msra.mxu0 0.0
  %1508 = vmatprep.subr.mxu0 0.0
  %1509 = vmatpush1.msra.mxu0 0.0
  %1510 = vmatprep.subr.mxu0 0.0
  %1511 = vmatpush1.msra.mxu0 0.0
  %1512 = vmatprep.subr.mxu0 0.0
  %1513 = vmatpush1.msra.mxu0 0.0
  %1514 = vmatprep.subr.mxu0 0.0
  %1515 = vmatpush1.msra.mxu0 0.0
  %1516 = vmatprep.subr.mxu0 0.0
  %1517 = vmatpush1.msra.mxu0 0.0
  %1518 = vmatprep.subr.mxu0 0.0
  %1519 = vmatpush1.msra.mxu0 0.0
  %1520 = vmatprep.subr.mxu0 0.0
  %1521 = vmatpush1.msra.mxu0 0.0
  %1522 = vmatprep.subr.mxu0 0.0
  %1523 = vmatpush1.msra.mxu0 0.0
  %1524 = vmatprep.subr.mxu0 0.0
  %1525 = vmatpush1.msra.mxu0 0.0
  %1526 = vmatprep.subr.mxu0 0.0
  %1527 = vmatpush1.msra.mxu0 0.0
  %1528 = vmatprep.mubr.f32.mxu0 0.0
  %1529 = vmatmul.mubr.f32.gmra.mrb[0].mxu0 %v1462
  %v1530 = vpop.f32.mrb[0].mxu0
  %v1531 = vadd.f32 0.0, %v1530
  %v1532 = vpop.f32.mrb[0].mxu0
  %1533 = vdwg.mxu0
  %v1534 = vadd.f32 %v1458, %v1531
  %v1535 = vxor.u32 %v1534, 2147483648
  %v1536 = vmul.f32 %v1535, 1.442695
  %v1537 = vpow.pop %v1536
  %v1538 = vadd.f32 %v1537, 1.0
  %v1539 = vrcp.pop %v1538
  %v1540 = vmul.f32 1.0, %v1539
  %v1541 = vtanh.pop %v1534
  %v1542 = vmul.f32 %v1540, %v1451
  %1544 = vrot.lane.b32.xlu0 %v1541, 64
  %v1545 = vpop.permute.xlu0 %1544
  %v1547 = vmul.f32 %v1540, %v1545
  %1549 = vrot.lane.b32.xlu0 %v1547, 32
  %v1550 = vpop.permute.xlu0 %1549
  %v1552 = vadd.f32 %v1542, %v1550
  %v1553 = vtanh.pop %v1552
  %1555 = vrot.lane.b32.xlu0 %v1553, 64
  %v1556 = vpop.permute.xlu0 %1555
  %v1558 = vmul.f32 %v1540, %v1556
  %v1559 = vld [vmem:[#allocation2 + $0xa] sm:$0x3]
  %1561 = vrot.lane.b32.xlu0 %v1558, 32
  %v1562 = vpop.permute.xlu0 %1561
  %v1563 = vsel %vm1056, %v1562, 0
  %1565 = vmatprep.subr.mxu0 0.0
  %1566 = vmatpush1.msra.mxu0 %v38
  %1567 = vmatprep.subr.mxu0 0.0
  %1568 = vmatpush1.msra.mxu0 %v39
  %1569 = vmatprep.subr.mxu0 0.0
  %1570 = vmatpush1.msra.mxu0 %v40
  %1571 = vmatprep.subr.mxu0 0.0
  %1572 = vmatpush1.msra.mxu0 %v41
  %1573 = vmatprep.subr.mxu0 0.0
  %1574 = vmatpush1.msra.mxu0 0.0
  %1575 = vmatprep.subr.mxu0 0.0
  %1576 = vmatpush1.msra.mxu0 0.0
  %1577 = vmatprep.subr.mxu0 0.0
  %1578 = vmatpush1.msra.mxu0 0.0
  %1579 = vmatprep.subr.mxu0 0.0
  %1580 = vmatpush1.msra.mxu0 0.0
  %1581 = vmatprep.subr.mxu0 0.0
  %1582 = vmatpush1.msra.mxu0 0.0
  %1583 = vmatprep.subr.mxu0 0.0
  %1584 = vmatpush1.msra.mxu0 0.0
  %1585 = vmatprep.subr.mxu0 0.0
  %1586 = vmatpush1.msra.mxu0 0.0
  %1587 = vmatprep.subr.mxu0 0.0
  %1588 = vmatpush1.msra.mxu0 0.0
  %1589 = vmatprep.subr.mxu0 0.0
  %1590 = vmatpush1.msra.mxu0 0.0
  %1591 = vmatprep.subr.mxu0 0.0
  %1592 = vmatpush1.msra.mxu0 0.0
  %1593 = vmatprep.subr.mxu0 0.0
  %1594 = vmatpush1.msra.mxu0 0.0
  %1595 = vmatprep.subr.mxu0 0.0
  %1596 = vmatpush1.msra.mxu0 0.0
  %1597 = vmatprep.subr.mxu0 0.0
  %1598 = vmatpush1.msra.mxu0 0.0
  %1599 = vmatprep.subr.mxu0 0.0
  %1600 = vmatpush1.msra.mxu0 0.0
  %1601 = vmatprep.subr.mxu0 0.0
  %1602 = vmatpush1.msra.mxu0 0.0
  %1603 = vmatprep.subr.mxu0 0.0
  %1604 = vmatpush1.msra.mxu0 0.0
  %1605 = vmatprep.subr.mxu0 0.0
  %1606 = vmatpush1.msra.mxu0 0.0
  %1607 = vmatprep.subr.mxu0 0.0
  %1608 = vmatpush1.msra.mxu0 0.0
  %1609 = vmatprep.subr.mxu0 0.0
  %1610 = vmatpush1.msra.mxu0 0.0
  %1611 = vmatprep.subr.mxu0 0.0
  %1612 = vmatpush1.msra.mxu0 0.0
  %1613 = vmatprep.subr.mxu0 0.0
  %1614 = vmatpush1.msra.mxu0 0.0
  %1615 = vmatprep.subr.mxu0 0.0
  %1616 = vmatpush1.msra.mxu0 0.0
  %1617 = vmatprep.subr.mxu0 0.0
  %1618 = vmatpush1.msra.mxu0 0.0
  %1619 = vmatprep.subr.mxu0 0.0
  %1620 = vmatpush1.msra.mxu0 0.0
  %1621 = vmatprep.subr.mxu0 0.0
  %1622 = vmatpush1.msra.mxu0 0.0
  %1623 = vmatprep.subr.mxu0 0.0
  %1624 = vmatpush1.msra.mxu0 0.0
  %1625 = vmatprep.subr.mxu0 0.0
  %1626 = vmatpush1.msra.mxu0 0.0
  %1627 = vmatprep.subr.mxu0 0.0
  %1628 = vmatpush1.msra.mxu0 0.0
  %1629 = vmatprep.mubr.f32.mxu0 0.0
  %1630 = vmatmul.mubr.f32.gmra.mrb[0].mxu0 %v1563
  %v1631 = vpop.f32.mrb[0].mxu0
  %v1632 = vadd.f32 0.0, %v1631
  %v1633 = vpop.f32.mrb[0].mxu0
  %1634 = vdwg.mxu0
  %v1635 = vadd.f32 %v1559, %v1632
  %v1636 = vxor.u32 %v1635, 2147483648
  %v1637 = vmul.f32 %v1636, 1.442695
  %v1638 = vpow.pop %v1637
  %v1639 = vadd.f32 %v1638, 1.0
  %v1640 = vrcp.pop %v1639
  %v1641 = vmul.f32 1.0, %v1640
  %v1642 = vtanh.pop %v1635
  %v1643 = vmul.f32 %v1641, %v1552
  %1645 = vrot.lane.b32.xlu0 %v1642, 64
  %v1646 = vpop.permute.xlu0 %1645
  %v1648 = vmul.f32 %v1641, %v1646
  %1650 = vrot.lane.b32.xlu0 %v1648, 32
  %v1651 = vpop.permute.xlu0 %1650
  %v1653 = vadd.f32 %v1643, %v1651
  %v1654 = vtanh.pop %v1653
  %1656 = vrot.lane.b32.xlu0 %v1654, 64
  %v1657 = vpop.permute.xlu0 %1656
  %v1659 = vmul.f32 %v1641, %v1657
  %v1660 = vld [vmem:[#allocation2 + $0xc] sm:$0x3]
  %1662 = vrot.lane.b32.xlu0 %v1659, 32
  %v1663 = vpop.permute.xlu0 %1662
  %v1664 = vsel %vm1056, %v1663, 0
  %1666 = vmatprep.subr.mxu0 0.0
  %1667 = vmatpush1.msra.mxu0 %v38
  %1668 = vmatprep.subr.mxu0 0.0
  %1669 = vmatpush1.msra.mxu0 %v39
  %1670 = vmatprep.subr.mxu0 0.0
  %1671 = vmatpush1.msra.mxu0 %v40
  %1672 = vmatprep.subr.mxu0 0.0
  %1673 = vmatpush1.msra.mxu0 %v41
  %1674 = vmatprep.subr.mxu0 0.0
  %1675 = vmatpush1.msra.mxu0 0.0
  %1676 = vmatprep.subr.mxu0 0.0
  %1677 = vmatpush1.msra.mxu0 0.0
  %1678 = vmatprep.subr.mxu0 0.0
  %1679 = vmatpush1.msra.mxu0 0.0
  %1680 = vmatprep.subr.mxu0 0.0
  %1681 = vmatpush1.msra.mxu0 0.0
  %1682 = vmatprep.subr.mxu0 0.0
  %1683 = vmatpush1.msra.mxu0 0.0
  %1684 = vmatprep.subr.mxu0 0.0
  %1685 = vmatpush1.msra.mxu0 0.0
  %1686 = vmatprep.subr.mxu0 0.0
  %1687 = vmatpush1.msra.mxu0 0.0
  %1688 = vmatprep.subr.mxu0 0.0
  %1689 = vmatpush1.msra.mxu0 0.0
  %1690 = vmatprep.subr.mxu0 0.0
  %1691 = vmatpush1.msra.mxu0 0.0
  %1692 = vmatprep.subr.mxu0 0.0
  %1693 = vmatpush1.msra.mxu0 0.0
  %1694 = vmatprep.subr.mxu0 0.0
  %1695 = vmatpush1.msra.mxu0 0.0
  %1696 = vmatprep.subr.mxu0 0.0
  %1697 = vmatpush1.msra.mxu0 0.0
  %1698 = vmatprep.subr.mxu0 0.0
  %1699 = vmatpush1.msra.mxu0 0.0
  %1700 = vmatprep.subr.mxu0 0.0
  %1701 = vmatpush1.msra.mxu0 0.0
  %1702 = vmatprep.subr.mxu0 0.0
  %1703 = vmatpush1.msra.mxu0 0.0
  %1704 = vmatprep.subr.mxu0 0.0
  %1705 = vmatpush1.msra.mxu0 0.0
  %1706 = vmatprep.subr.mxu0 0.0
  %1707 = vmatpush1.msra.mxu0 0.0
  %1708 = vmatprep.subr.mxu0 0.0
  %1709 = vmatpush1.msra.mxu0 0.0
  %1710 = vmatprep.subr.mxu0 0.0
  %1711 = vmatpush1.msra.mxu0 0.0
  %1712 = vmatprep.subr.mxu0 0.0
  %1713 = vmatpush1.msra.mxu0 0.0
  %1714 = vmatprep.subr.mxu0 0.0
  %1715 = vmatpush1.msra.mxu0 0.0
  %1716 = vmatprep.subr.mxu0 0.0
  %1717 = vmatpush1.msra.mxu0 0.0
  %1718 = vmatprep.subr.mxu0 0.0
  %1719 = vmatpush1.msra.mxu0 0.0
  %1720 = vmatprep.subr.mxu0 0.0
  %1721 = vmatpush1.msra.mxu0 0.0
  %1722 = vmatprep.subr.mxu0 0.0
  %1723 = vmatpush1.msra.mxu0 0.0
  %1724 = vmatprep.subr.mxu0 0.0
  %1725 = vmatpush1.msra.mxu0 0.0
  %1726 = vmatprep.subr.mxu0 0.0
  %1727 = vmatpush1.msra.mxu0 0.0
  %1728 = vmatprep.subr.mxu0 0.0
  %1729 = vmatpush1.msra.mxu0 0.0
  %1730 = vmatprep.mubr.f32.mxu0 0.0
  %1731 = vmatmul.mubr.f32.gmra.mrb[0].mxu0 %v1664
  %v1732 = vpop.f32.mrb[0].mxu0
  %v1733 = vadd.f32 0.0, %v1732
  %v1734 = vpop.f32.mrb[0].mxu0
  %1735 = vdwg.mxu0
  %v1736 = vadd.f32 %v1660, %v1733
  %v1737 = vxor.u32 %v1736, 2147483648
  %v1738 = vmul.f32 %v1737, 1.442695
  %v1739 = vpow.pop %v1738
  %v1740 = vadd.f32 %v1739, 1.0
  %v1741 = vrcp.pop %v1740
  %v1742 = vmul.f32 1.0, %v1741
  %v1743 = vtanh.pop %v1736
  %v1744 = vmul.f32 %v1742, %v1653
  %1746 = vrot.lane.b32.xlu0 %v1743, 64
  %v1747 = vpop.permute.xlu0 %1746
  %v1749 = vmul.f32 %v1742, %v1747
  %1751 = vrot.lane.b32.xlu0 %v1749, 32
  %v1752 = vpop.permute.xlu0 %1751
  %v1754 = vadd.f32 %v1744, %v1752
  %v1755 = vtanh.pop %v1754
  %1757 = vrot.lane.b32.xlu0 %v1755, 64
  %v1758 = vpop.permute.xlu0 %1757
  %v1760 = vmul.f32 %v1742, %v1758
  %v1761 = vld [vmem:[#allocation2 + $0xe] sm:$0x3]
  %1763 = vrot.lane.b32.xlu0 %v1760, 32
  %v1764 = vpop.permute.xlu0 %1763
  %v1765 = vsel %vm1056, %v1764, 0
  %1767 = vmatprep.subr.mxu0 0.0
  %1768 = vmatpush1.msra.mxu0 %v38
  %1769 = vmatprep.subr.mxu0 0.0
  %1770 = vmatpush1.msra.mxu0 %v39
  %1771 = vmatprep.subr.mxu0 0.0
  %1772 = vmatpush1.msra.mxu0 %v40
  %1773 = vmatprep.subr.mxu0 0.0
  %1774 = vmatpush1.msra.mxu0 %v41
  %1775 = vmatprep.subr.mxu0 0.0
  %1776 = vmatpush1.msra.mxu0 0.0
  %1777 = vmatprep.subr.mxu0 0.0
  %1778 = vmatpush1.msra.mxu0 0.0
  %1779 = vmatprep.subr.mxu0 0.0
  %1780 = vmatpush1.msra.mxu0 0.0
  %1781 = vmatprep.subr.mxu0 0.0
  %1782 = vmatpush1.msra.mxu0 0.0
  %1783 = vmatprep.subr.mxu0 0.0
  %1784 = vmatpush1.msra.mxu0 0.0
  %1785 = vmatprep.subr.mxu0 0.0
  %1786 = vmatpush1.msra.mxu0 0.0
  %1787 = vmatprep.subr.mxu0 0.0
  %1788 = vmatpush1.msra.mxu0 0.0
  %1789 = vmatprep.subr.mxu0 0.0
  %1790 = vmatpush1.msra.mxu0 0.0
  %1791 = vmatprep.subr.mxu0 0.0
  %1792 = vmatpush1.msra.mxu0 0.0
  %1793 = vmatprep.subr.mxu0 0.0
  %1794 = vmatpush1.msra.mxu0 0.0
  %1795 = vmatprep.subr.mxu0 0.0
  %1796 = vmatpush1.msra.mxu0 0.0
  %1797 = vmatprep.subr.mxu0 0.0
  %1798 = vmatpush1.msra.mxu0 0.0
  %1799 = vmatprep.subr.mxu0 0.0
  %1800 = vmatpush1.msra.mxu0 0.0
  %1801 = vmatprep.subr.mxu0 0.0
  %1802 = vmatpush1.msra.mxu0 0.0
  %1803 = vmatprep.subr.mxu0 0.0
  %1804 = vmatpush1.msra.mxu0 0.0
  %1805 = vmatprep.subr.mxu0 0.0
  %1806 = vmatpush1.msra.mxu0 0.0
  %1807 = vmatprep.subr.mxu0 0.0
  %1808 = vmatpush1.msra.mxu0 0.0
  %1809 = vmatprep.subr.mxu0 0.0
  %1810 = vmatpush1.msra.mxu0 0.0
  %1811 = vmatprep.subr.mxu0 0.0
  %1812 = vmatpush1.msra.mxu0 0.0
  %1813 = vmatprep.subr.mxu0 0.0
  %1814 = vmatpush1.msra.mxu0 0.0
  %1815 = vmatprep.subr.mxu0 0.0
  %1816 = vmatpush1.msra.mxu0 0.0
  %1817 = vmatprep.subr.mxu0 0.0
  %1818 = vmatpush1.msra.mxu0 0.0
  %1819 = vmatprep.subr.mxu0 0.0
  %1820 = vmatpush1.msra.mxu0 0.0
  %1821 = vmatprep.subr.mxu0 0.0
  %1822 = vmatpush1.msra.mxu0 0.0
  %1823 = vmatprep.subr.mxu0 0.0
  %1824 = vmatpush1.msra.mxu0 0.0
  %1825 = vmatprep.subr.mxu0 0.0
  %1826 = vmatpush1.msra.mxu0 0.0
  %1827 = vmatprep.subr.mxu0 0.0
  %1828 = vmatpush1.msra.mxu0 0.0
  %1829 = vmatprep.subr.mxu0 0.0
  %1830 = vmatpush1.msra.mxu0 0.0
  %1831 = vmatprep.mubr.f32.mxu0 0.0
  %1832 = vmatmul.mubr.f32.gmra.mrb[0].mxu0 %v1765
  %v1833 = vpop.f32.mrb[0].mxu0
  %v1834 = vadd.f32 0.0, %v1833
  %v1835 = vpop.f32.mrb[0].mxu0
  %1836 = vdwg.mxu0
  %v1837 = vadd.f32 %v1761, %v1834
  %v1838 = vxor.u32 %v1837, 2147483648
  %v1839 = vmul.f32 %v1838, 1.442695
  %v1840 = vpow.pop %v1839
  %v1841 = vadd.f32 %v1840, 1.0
  %v1842 = vrcp.pop %v1841
  %v1843 = vmul.f32 1.0, %v1842
  %v1844 = vtanh.pop %v1837
  %v1845 = vmul.f32 %v1843, %v1754
  %1847 = vrot.lane.b32.xlu0 %v1844, 64
  %v1848 = vpop.permute.xlu0 %1847
  %v1850 = vmul.f32 %v1843, %v1848
  %1852 = vrot.lane.b32.xlu0 %v1850, 32
  %v1853 = vpop.permute.xlu0 %1852
  %v1855 = vadd.f32 %v1845, %v1853
  %v1856 = vtanh.pop %v1855
  %1858 = vrot.lane.b32.xlu0 %v1856, 64
  %v1859 = vpop.permute.xlu0 %1858
  %v1861 = vmul.f32 %v1843, %v1859
  %v1862 = vld [vmem:[#allocation2 + $0x10] sm:$0x3]
  %1864 = vrot.lane.b32.xlu0 %v1861, 32
  %v1865 = vpop.permute.xlu0 %1864
  %v1866 = vsel %vm1056, %v1865, 0
  %1868 = vmatprep.subr.mxu0 0.0
  %1869 = vmatpush1.msra.mxu0 %v38
  %1870 = vmatprep.subr.mxu0 0.0
  %1871 = vmatpush1.msra.mxu0 %v39
  %1872 = vmatprep.subr.mxu0 0.0
  %1873 = vmatpush1.msra.mxu0 %v40
  %1874 = vmatprep.subr.mxu0 0.0
  %1875 = vmatpush1.msra.mxu0 %v41
  %1876 = vmatprep.subr.mxu0 0.0
  %1877 = vmatpush1.msra.mxu0 0.0
  %1878 = vmatprep.subr.mxu0 0.0
  %1879 = vmatpush1.msra.mxu0 0.0
  %1880 = vmatprep.subr.mxu0 0.0
  %1881 = vmatpush1.msra.mxu0 0.0
  %1882 = vmatprep.subr.mxu0 0.0
  %1883 = vmatpush1.msra.mxu0 0.0
  %1884 = vmatprep.subr.mxu0 0.0
  %1885 = vmatpush1.msra.mxu0 0.0
  %1886 = vmatprep.subr.mxu0 0.0
  %1887 = vmatpush1.msra.mxu0 0.0
  %1888 = vmatprep.subr.mxu0 0.0
  %1889 = vmatpush1.msra.mxu0 0.0
  %1890 = vmatprep.subr.mxu0 0.0
  %1891 = vmatpush1.msra.mxu0 0.0
  %1892 = vmatprep.subr.mxu0 0.0
  %1893 = vmatpush1.msra.mxu0 0.0
  %1894 = vmatprep.subr.mxu0 0.0
  %1895 = vmatpush1.msra.mxu0 0.0
  %1896 = vmatprep.subr.mxu0 0.0
  %1897 = vmatpush1.msra.mxu0 0.0
  %1898 = vmatprep.subr.mxu0 0.0
  %1899 = vmatpush1.msra.mxu0 0.0
  %1900 = vmatprep.subr.mxu0 0.0
  %1901 = vmatpush1.msra.mxu0 0.0
  %1902 = vmatprep.subr.mxu0 0.0
  %1903 = vmatpush1.msra.mxu0 0.0
  %1904 = vmatprep.subr.mxu0 0.0
  %1905 = vmatpush1.msra.mxu0 0.0
  %1906 = vmatprep.subr.mxu0 0.0
  %1907 = vmatpush1.msra.mxu0 0.0
  %1908 = vmatprep.subr.mxu0 0.0
  %1909 = vmatpush1.msra.mxu0 0.0
  %1910 = vmatprep.subr.mxu0 0.0
  %1911 = vmatpush1.msra.mxu0 0.0
  %1912 = vmatprep.subr.mxu0 0.0
  %1913 = vmatpush1.msra.mxu0 0.0
  %1914 = vmatprep.subr.mxu0 0.0
  %1915 = vmatpush1.msra.mxu0 0.0
  %1916 = vmatprep.subr.mxu0 0.0
  %1917 = vmatpush1.msra.mxu0 0.0
  %1918 = vmatprep.subr.mxu0 0.0
  %1919 = vmatpush1.msra.mxu0 0.0
  %1920 = vmatprep.subr.mxu0 0.0
  %1921 = vmatpush1.msra.mxu0 0.0
  %1922 = vmatprep.subr.mxu0 0.0
  %1923 = vmatpush1.msra.mxu0 0.0
  %1924 = vmatprep.subr.mxu0 0.0
  %1925 = vmatpush1.msra.mxu0 0.0
  %1926 = vmatprep.subr.mxu0 0.0
  %1927 = vmatpush1.msra.mxu0 0.0
  %1928 = vmatprep.subr.mxu0 0.0
  %1929 = vmatpush1.msra.mxu0 0.0
  %1930 = vmatprep.subr.mxu0 0.0
  %1931 = vmatpush1.msra.mxu0 0.0
  %1932 = vmatprep.mubr.f32.mxu0 0.0
  %1933 = vmatmul.mubr.f32.gmra.mrb[0].mxu0 %v1866
  %v1934 = vpop.f32.mrb[0].mxu0
  %v1935 = vadd.f32 0.0, %v1934
  %v1936 = vpop.f32.mrb[0].mxu0
  %1937 = vdwg.mxu0
  %v1938 = vadd.f32 %v1862, %v1935
  %v1939 = vxor.u32 %v1938, 2147483648
  %v1940 = vmul.f32 %v1939, 1.442695
  %v1941 = vpow.pop %v1940
  %v1942 = vadd.f32 %v1941, 1.0
  %v1943 = vrcp.pop %v1942
  %v1944 = vmul.f32 1.0, %v1943
  %v1945 = vtanh.pop %v1938
  %v1946 = vmul.f32 %v1944, %v1855
  %1948 = vrot.lane.b32.xlu0 %v1945, 64
  %v1949 = vpop.permute.xlu0 %1948
  %v1951 = vmul.f32 %v1944, %v1949
  %1953 = vrot.lane.b32.xlu0 %v1951, 32
  %v1954 = vpop.permute.xlu0 %1953
  %v1956 = vadd.f32 %v1946, %v1954
  %v1957 = vtanh.pop %v1956
  %1959 = vrot.lane.b32.xlu0 %v1957, 64
  %v1960 = vpop.permute.xlu0 %1959
  %v1962 = vmul.f32 %v1944, %v1960
  %v1963 = vld [vmem:[#allocation2 + $0x12] sm:$0x3]
  %1965 = vrot.lane.b32.xlu0 %v1962, 32
  %v1966 = vpop.permute.xlu0 %1965
  %v1967 = vsel %vm1056, %v1966, 0
  %1969 = vmatprep.subr.mxu0 0.0
  %1970 = vmatpush1.msra.mxu0 %v38
  %1971 = vmatprep.subr.mxu0 0.0
  %1972 = vmatpush1.msra.mxu0 %v39
  %1973 = vmatprep.subr.mxu0 0.0
  %1974 = vmatpush1.msra.mxu0 %v40
  %1975 = vmatprep.subr.mxu0 0.0
  %1976 = vmatpush1.msra.mxu0 %v41
  %1977 = vmatprep.subr.mxu0 0.0
  %1978 = vmatpush1.msra.mxu0 0.0
  %1979 = vmatprep.subr.mxu0 0.0
  %1980 = vmatpush1.msra.mxu0 0.0
  %1981 = vmatprep.subr.mxu0 0.0
  %1982 = vmatpush1.msra.mxu0 0.0
  %1983 = vmatprep.subr.mxu0 0.0
  %1984 = vmatpush1.msra.mxu0 0.0
  %1985 = vmatprep.subr.mxu0 0.0
  %1986 = vmatpush1.msra.mxu0 0.0
  %1987 = vmatprep.subr.mxu0 0.0
  %1988 = vmatpush1.msra.mxu0 0.0
  %1989 = vmatprep.subr.mxu0 0.0
  %1990 = vmatpush1.msra.mxu0 0.0
  %1991 = vmatprep.subr.mxu0 0.0
  %1992 = vmatpush1.msra.mxu0 0.0
  %1993 = vmatprep.subr.mxu0 0.0
  %1994 = vmatpush1.msra.mxu0 0.0
  %1995 = vmatprep.subr.mxu0 0.0
  %1996 = vmatpush1.msra.mxu0 0.0
  %1997 = vmatprep.subr.mxu0 0.0
  %1998 = vmatpush1.msra.mxu0 0.0
  %1999 = vmatprep.subr.mxu0 0.0
  %2000 = vmatpush1.msra.mxu0 0.0
  %2001 = vmatprep.subr.mxu0 0.0
  %2002 = vmatpush1.msra.mxu0 0.0
  %2003 = vmatprep.subr.mxu0 0.0
  %2004 = vmatpush1.msra.mxu0 0.0
  %2005 = vmatprep.subr.mxu0 0.0
  %2006 = vmatpush1.msra.mxu0 0.0
  %2007 = vmatprep.subr.mxu0 0.0
  %2008 = vmatpush1.msra.mxu0 0.0
  %2009 = vmatprep.subr.mxu0 0.0
  %2010 = vmatpush1.msra.mxu0 0.0
  %2011 = vmatprep.subr.mxu0 0.0
  %2012 = vmatpush1.msra.mxu0 0.0
  %2013 = vmatprep.subr.mxu0 0.0
  %2014 = vmatpush1.msra.mxu0 0.0
  %2015 = vmatprep.subr.mxu0 0.0
  %2016 = vmatpush1.msra.mxu0 0.0
  %2017 = vmatprep.subr.mxu0 0.0
  %2018 = vmatpush1.msra.mxu0 0.0
  %2019 = vmatprep.subr.mxu0 0.0
  %2020 = vmatpush1.msra.mxu0 0.0
  %2021 = vmatprep.subr.mxu0 0.0
  %2022 = vmatpush1.msra.mxu0 0.0
  %2023 = vmatprep.subr.mxu0 0.0
  %2024 = vmatpush1.msra.mxu0 0.0
  %2025 = vmatprep.subr.mxu0 0.0
  %2026 = vmatpush1.msra.mxu0 0.0
  %2027 = vmatprep.subr.mxu0 0.0
  %2028 = vmatpush1.msra.mxu0 0.0
  %2029 = vmatprep.subr.mxu0 0.0
  %2030 = vmatpush1.msra.mxu0 0.0
  %2031 = vmatprep.subr.mxu0 0.0
  %2032 = vmatpush1.msra.mxu0 0.0
  %2033 = vmatprep.mubr.f32.mxu0 0.0
  %2034 = vmatmul.mubr.f32.gmra.mrb[0].mxu0 %v1967
  %v2035 = vpop.f32.mrb[0].mxu0
  %v2036 = vadd.f32 0.0, %v2035
  %v2037 = vpop.f32.mrb[0].mxu0
  %2038 = vdwg.mxu0
  %v2039 = vadd.f32 %v1963, %v2036
  %v2040 = vxor.u32 %v2039, 2147483648
  %v2041 = vmul.f32 %v2040, 1.442695
  %v2042 = vpow.pop %v2041
  %v2043 = vadd.f32 %v2042, 1.0
  %v2044 = vrcp.pop %v2043
  %v2045 = vmul.f32 1.0, %v2044
  %v2046 = vtanh.pop %v2039
  %v2047 = vmul.f32 %v2045, %v1956
  %2049 = vrot.lane.b32.xlu0 %v2046, 64
  %v2050 = vpop.permute.xlu0 %2049
  %v2052 = vmul.f32 %v2045, %v2050
  %2054 = vrot.lane.b32.xlu0 %v2052, 32
  %v2055 = vpop.permute.xlu0 %2054
  %v2057 = vadd.f32 %v2047, %v2055
  %v2058 = vtanh.pop %v2057
  %2060 = vrot.lane.b32.xlu0 %v2058, 64
  %v2061 = vpop.permute.xlu0 %2060
  %v2063 = vmul.f32 %v2045, %v2061
  %v2064 = vld [vmem:[#allocation2 + $0x14] sm:$0x3]
  %2066 = vrot.lane.b32.xlu0 %v2063, 32
  %v2067 = vpop.permute.xlu0 %2066
  %v2068 = vsel %vm1056, %v2067, 0
  %2070 = vmatprep.subr.mxu0 0.0
  %2071 = vmatpush1.msra.mxu0 %v38
  %2072 = vmatprep.subr.mxu0 0.0
  %2073 = vmatpush1.msra.mxu0 %v39
  %2074 = vmatprep.subr.mxu0 0.0
  %2075 = vmatpush1.msra.mxu0 %v40
  %2076 = vmatprep.subr.mxu0 0.0
  %2077 = vmatpush1.msra.mxu0 %v41
  %2078 = vmatprep.subr.mxu0 0.0
  %2079 = vmatpush1.msra.mxu0 0.0
  %2080 = vmatprep.subr.mxu0 0.0
  %2081 = vmatpush1.msra.mxu0 0.0
  %2082 = vmatprep.subr.mxu0 0.0
  %2083 = vmatpush1.msra.mxu0 0.0
  %2084 = vmatprep.subr.mxu0 0.0
  %2085 = vmatpush1.msra.mxu0 0.0
  %2086 = vmatprep.subr.mxu0 0.0
  %2087 = vmatpush1.msra.mxu0 0.0
  %2088 = vmatprep.subr.mxu0 0.0
  %2089 = vmatpush1.msra.mxu0 0.0
  %2090 = vmatprep.subr.mxu0 0.0
  %2091 = vmatpush1.msra.mxu0 0.0
  %2092 = vmatprep.subr.mxu0 0.0
  %2093 = vmatpush1.msra.mxu0 0.0
  %2094 = vmatprep.subr.mxu0 0.0
  %2095 = vmatpush1.msra.mxu0 0.0
  %2096 = vmatprep.subr.mxu0 0.0
  %2097 = vmatpush1.msra.mxu0 0.0
  %2098 = vmatprep.subr.mxu0 0.0
  %2099 = vmatpush1.msra.mxu0 0.0
  %2100 = vmatprep.subr.mxu0 0.0
  %2101 = vmatpush1.msra.mxu0 0.0
  %2102 = vmatprep.subr.mxu0 0.0
  %2103 = vmatpush1.msra.mxu0 0.0
  %2104 = vmatprep.subr.mxu0 0.0
  %2105 = vmatpush1.msra.mxu0 0.0
  %2106 = vmatprep.subr.mxu0 0.0
  %2107 = vmatpush1.msra.mxu0 0.0
  %2108 = vmatprep.subr.mxu0 0.0
  %2109 = vmatpush1.msra.mxu0 0.0
  %2110 = vmatprep.subr.mxu0 0.0
  %2111 = vmatpush1.msra.mxu0 0.0
  %2112 = vmatprep.subr.mxu0 0.0
  %2113 = vmatpush1.msra.mxu0 0.0
  %2114 = vmatprep.subr.mxu0 0.0
  %2115 = vmatpush1.msra.mxu0 0.0
  %2116 = vmatprep.subr.mxu0 0.0
  %2117 = vmatpush1.msra.mxu0 0.0
  %2118 = vmatprep.subr.mxu0 0.0
  %2119 = vmatpush1.msra.mxu0 0.0
  %2120 = vmatprep.subr.mxu0 0.0
  %2121 = vmatpush1.msra.mxu0 0.0
  %2122 = vmatprep.subr.mxu0 0.0
  %2123 = vmatpush1.msra.mxu0 0.0
  %2124 = vmatprep.subr.mxu0 0.0
  %2125 = vmatpush1.msra.mxu0 0.0
  %2126 = vmatprep.subr.mxu0 0.0
  %2127 = vmatpush1.msra.mxu0 0.0
  %2128 = vmatprep.subr.mxu0 0.0
  %2129 = vmatpush1.msra.mxu0 0.0
  %2130 = vmatprep.subr.mxu0 0.0
  %2131 = vmatpush1.msra.mxu0 0.0
  %2132 = vmatprep.subr.mxu0 0.0
  %2133 = vmatpush1.msra.mxu0 0.0
  %2134 = vmatprep.mubr.f32.mxu0 0.0
  %2135 = vmatmul.mubr.f32.gmra.mrb[0].mxu0 %v2068
  %v2136 = vpop.f32.mrb[0].mxu0
  %v2137 = vadd.f32 0.0, %v2136
  %v2138 = vpop.f32.mrb[0].mxu0
  %2139 = vdwg.mxu0
  %v2140 = vadd.f32 %v2064, %v2137
  %v2141 = vxor.u32 %v2140, 2147483648
  %v2142 = vmul.f32 %v2141, 1.442695
  %v2143 = vpow.pop %v2142
  %v2144 = vadd.f32 %v2143, 1.0
  %v2145 = vrcp.pop %v2144
  %v2146 = vmul.f32 1.0, %v2145
  %v2147 = vtanh.pop %v2140
  %v2148 = vmul.f32 %v2146, %v2057
  %2150 = vrot.lane.b32.xlu0 %v2147, 64
  %v2151 = vpop.permute.xlu0 %2150
  %v2153 = vmul.f32 %v2146, %v2151
  %2155 = vrot.lane.b32.xlu0 %v2153, 32
  %v2156 = vpop.permute.xlu0 %2155
  %v2158 = vadd.f32 %v2148, %v2156
  %v2159 = vtanh.pop %v2158
  %2161 = vrot.lane.b32.xlu0 %v2159, 64
  %v2162 = vpop.permute.xlu0 %2161
  %v2164 = vmul.f32 %v2146, %v2162
  %v2165 = vld [vmem:[#allocation2 + $0x16] sm:$0x3]
  %2167 = vrot.lane.b32.xlu0 %v2164, 32
  %v2168 = vpop.permute.xlu0 %2167
  %v2169 = vsel %vm1056, %v2168, 0
  %2171 = vmatprep.subr.mxu0 0.0
  %2172 = vmatpush1.msra.mxu0 %v38
  %2173 = vmatprep.subr.mxu0 0.0
  %2174 = vmatpush1.msra.mxu0 %v39
  %2175 = vmatprep.subr.mxu0 0.0
  %2176 = vmatpush1.msra.mxu0 %v40
  %2177 = vmatprep.subr.mxu0 0.0
  %2178 = vmatpush1.msra.mxu0 %v41
  %2179 = vmatprep.subr.mxu0 0.0
  %2180 = vmatpush1.msra.mxu0 0.0
  %2181 = vmatprep.subr.mxu0 0.0
  %2182 = vmatpush1.msra.mxu0 0.0
  %2183 = vmatprep.subr.mxu0 0.0
  %2184 = vmatpush1.msra.mxu0 0.0
  %2185 = vmatprep.subr.mxu0 0.0
  %2186 = vmatpush1.msra.mxu0 0.0
  %2187 = vmatprep.subr.mxu0 0.0
  %2188 = vmatpush1.msra.mxu0 0.0
  %2189 = vmatprep.subr.mxu0 0.0
  %2190 = vmatpush1.msra.mxu0 0.0
  %2191 = vmatprep.subr.mxu0 0.0
  %2192 = vmatpush1.msra.mxu0 0.0
  %2193 = vmatprep.subr.mxu0 0.0
  %2194 = vmatpush1.msra.mxu0 0.0
  %2195 = vmatprep.subr.mxu0 0.0
  %2196 = vmatpush1.msra.mxu0 0.0
  %2197 = vmatprep.subr.mxu0 0.0
  %2198 = vmatpush1.msra.mxu0 0.0
  %2199 = vmatprep.subr.mxu0 0.0
  %2200 = vmatpush1.msra.mxu0 0.0
  %2201 = vmatprep.subr.mxu0 0.0
  %2202 = vmatpush1.msra.mxu0 0.0
  %2203 = vmatprep.subr.mxu0 0.0
  %2204 = vmatpush1.msra.mxu0 0.0
  %2205 = vmatprep.subr.mxu0 0.0
  %2206 = vmatpush1.msra.mxu0 0.0
  %2207 = vmatprep.subr.mxu0 0.0
  %2208 = vmatpush1.msra.mxu0 0.0
  %2209 = vmatprep.subr.mxu0 0.0
  %2210 = vmatpush1.msra.mxu0 0.0
  %2211 = vmatprep.subr.mxu0 0.0
  %2212 = vmatpush1.msra.mxu0 0.0
  %2213 = vmatprep.subr.mxu0 0.0
  %2214 = vmatpush1.msra.mxu0 0.0
  %2215 = vmatprep.subr.mxu0 0.0
  %2216 = vmatpush1.msra.mxu0 0.0
  %2217 = vmatprep.subr.mxu0 0.0
  %2218 = vmatpush1.msra.mxu0 0.0
  %2219 = vmatprep.subr.mxu0 0.0
  %2220 = vmatpush1.msra.mxu0 0.0
  %2221 = vmatprep.subr.mxu0 0.0
  %2222 = vmatpush1.msra.mxu0 0.0
  %2223 = vmatprep.subr.mxu0 0.0
  %2224 = vmatpush1.msra.mxu0 0.0
  %2225 = vmatprep.subr.mxu0 0.0
  %2226 = vmatpush1.msra.mxu0 0.0
  %2227 = vmatprep.subr.mxu0 0.0
  %2228 = vmatpush1.msra.mxu0 0.0
  %2229 = vmatprep.subr.mxu0 0.0
  %2230 = vmatpush1.msra.mxu0 0.0
  %2231 = vmatprep.subr.mxu0 0.0
  %2232 = vmatpush1.msra.mxu0 0.0
  %2233 = vmatprep.subr.mxu0 0.0
  %2234 = vmatpush1.msra.mxu0 0.0
  %2235 = vmatprep.mubr.f32.mxu0 0.0
  %2236 = vmatmul.mubr.f32.gmra.mrb[0].mxu0 %v2169
  %v2237 = vpop.f32.mrb[0].mxu0
  %v2238 = vadd.f32 0.0, %v2237
  %v2239 = vpop.f32.mrb[0].mxu0
  %2240 = vdwg.mxu0
  %v2241 = vadd.f32 %v2165, %v2238
  %v2242 = vxor.u32 %v2241, 2147483648
  %v2243 = vmul.f32 %v2242, 1.442695
  %v2244 = vpow.pop %v2243
  %v2245 = vadd.f32 %v2244, 1.0
  %v2246 = vrcp.pop %v2245
  %v2247 = vmul.f32 1.0, %v2246
  %v2248 = vtanh.pop %v2241
  %v2249 = vmul.f32 %v2247, %v2158
  %2251 = vrot.lane.b32.xlu0 %v2248, 64
  %v2252 = vpop.permute.xlu0 %2251
  %v2254 = vmul.f32 %v2247, %v2252
  %2256 = vrot.lane.b32.xlu0 %v2254, 32
  %v2257 = vpop.permute.xlu0 %2256
  %v2259 = vadd.f32 %v2249, %v2257
  %v2260 = vtanh.pop %v2259
  %2262 = vrot.lane.b32.xlu0 %v2260, 64
  %v2263 = vpop.permute.xlu0 %2262
  %v2265 = vmul.f32 %v2247, %v2263
  %v2266 = vld [vmem:[#allocation2 + $0x18] sm:$0x3]
  %2268 = vrot.lane.b32.xlu0 %v2265, 32
  %v2269 = vpop.permute.xlu0 %2268
  %v2270 = vsel %vm1056, %v2269, 0
  %2272 = vmatprep.subr.mxu0 0.0
  %2273 = vmatpush1.msra.mxu0 %v38
  %2274 = vmatprep.subr.mxu0 0.0
  %2275 = vmatpush1.msra.mxu0 %v39
  %2276 = vmatprep.subr.mxu0 0.0
  %2277 = vmatpush1.msra.mxu0 %v40
  %2278 = vmatprep.subr.mxu0 0.0
  %2279 = vmatpush1.msra.mxu0 %v41
  %2280 = vmatprep.subr.mxu0 0.0
  %2281 = vmatpush1.msra.mxu0 0.0
  %2282 = vmatprep.subr.mxu0 0.0
  %2283 = vmatpush1.msra.mxu0 0.0
  %2284 = vmatprep.subr.mxu0 0.0
  %2285 = vmatpush1.msra.mxu0 0.0
  %2286 = vmatprep.subr.mxu0 0.0
  %2287 = vmatpush1.msra.mxu0 0.0
  %2288 = vmatprep.subr.mxu0 0.0
  %2289 = vmatpush1.msra.mxu0 0.0
  %2290 = vmatprep.subr.mxu0 0.0
  %2291 = vmatpush1.msra.mxu0 0.0
  %2292 = vmatprep.subr.mxu0 0.0
  %2293 = vmatpush1.msra.mxu0 0.0
  %2294 = vmatprep.subr.mxu0 0.0
  %2295 = vmatpush1.msra.mxu0 0.0
  %2296 = vmatprep.subr.mxu0 0.0
  %2297 = vmatpush1.msra.mxu0 0.0
  %2298 = vmatprep.subr.mxu0 0.0
  %2299 = vmatpush1.msra.mxu0 0.0
  %2300 = vmatprep.subr.mxu0 0.0
  %2301 = vmatpush1.msra.mxu0 0.0
  %2302 = vmatprep.subr.mxu0 0.0
  %2303 = vmatpush1.msra.mxu0 0.0
  %2304 = vmatprep.subr.mxu0 0.0
  %2305 = vmatpush1.msra.mxu0 0.0
  %2306 = vmatprep.subr.mxu0 0.0
  %2307 = vmatpush1.msra.mxu0 0.0
  %2308 = vmatprep.subr.mxu0 0.0
  %2309 = vmatpush1.msra.mxu0 0.0
  %2310 = vmatprep.subr.mxu0 0.0
  %2311 = vmatpush1.msra.mxu0 0.0
  %2312 = vmatprep.subr.mxu0 0.0
  %2313 = vmatpush1.msra.mxu0 0.0
  %2314 = vmatprep.subr.mxu0 0.0
  %2315 = vmatpush1.msra.mxu0 0.0
  %2316 = vmatprep.subr.mxu0 0.0
  %2317 = vmatpush1.msra.mxu0 0.0
  %2318 = vmatprep.subr.mxu0 0.0
  %2319 = vmatpush1.msra.mxu0 0.0
  %2320 = vmatprep.subr.mxu0 0.0
  %2321 = vmatpush1.msra.mxu0 0.0
  %2322 = vmatprep.subr.mxu0 0.0
  %2323 = vmatpush1.msra.mxu0 0.0
  %2324 = vmatprep.subr.mxu0 0.0
  %2325 = vmatpush1.msra.mxu0 0.0
  %2326 = vmatprep.subr.mxu0 0.0
  %2327 = vmatpush1.msra.mxu0 0.0
  %2328 = vmatprep.subr.mxu0 0.0
  %2329 = vmatpush1.msra.mxu0 0.0
  %2330 = vmatprep.subr.mxu0 0.0
  %2331 = vmatpush1.msra.mxu0 0.0
  %2332 = vmatprep.subr.mxu0 0.0
  %2333 = vmatpush1.msra.mxu0 0.0
  %2334 = vmatprep.subr.mxu0 0.0
  %2335 = vmatpush1.msra.mxu0 0.0
  %2336 = vmatprep.mubr.f32.mxu0 0.0
  %2337 = vmatmul.mubr.f32.gmra.mrb[0].mxu0 %v2270
  %v2338 = vpop.f32.mrb[0].mxu0
  %v2339 = vadd.f32 0.0, %v2338
  %v2340 = vpop.f32.mrb[0].mxu0
  %2341 = vdwg.mxu0
  %v2342 = vadd.f32 %v2266, %v2339
  %v2343 = vxor.u32 %v2342, 2147483648
  %v2344 = vmul.f32 %v2343, 1.442695
  %v2345 = vpow.pop %v2344
  %v2346 = vadd.f32 %v2345, 1.0
  %v2347 = vrcp.pop %v2346
  %v2348 = vmul.f32 1.0, %v2347
  %v2349 = vtanh.pop %v2342
  %v2350 = vmul.f32 %v2348, %v2259
  %2352 = vrot.lane.b32.xlu0 %v2349, 64
  %v2353 = vpop.permute.xlu0 %2352
  %v2355 = vmul.f32 %v2348, %v2353
  %2357 = vrot.lane.b32.xlu0 %v2355, 32
  %v2358 = vpop.permute.xlu0 %2357
  %v2360 = vadd.f32 %v2350, %v2358
  %v2361 = vtanh.pop %v2360
  %2363 = vrot.lane.b32.xlu0 %v2361, 64
  %v2364 = vpop.permute.xlu0 %2363
  %v2366 = vmul.f32 %v2348, %v2364
  %v2367 = vld [vmem:[#allocation2 + $0x1a] sm:$0x3]
  %2369 = vrot.lane.b32.xlu0 %v2366, 32
  %v2370 = vpop.permute.xlu0 %2369
  %v2371 = vsel %vm1056, %v2370, 0
  %2373 = vmatprep.subr.mxu0 0.0
  %2374 = vmatpush1.msra.mxu0 %v38
  %2375 = vmatprep.subr.mxu0 0.0
  %2376 = vmatpush1.msra.mxu0 %v39
  %2377 = vmatprep.subr.mxu0 0.0
  %2378 = vmatpush1.msra.mxu0 %v40
  %2379 = vmatprep.subr.mxu0 0.0
  %2380 = vmatpush1.msra.mxu0 %v41
  %2381 = vmatprep.subr.mxu0 0.0
  %2382 = vmatpush1.msra.mxu0 0.0
  %2383 = vmatprep.subr.mxu0 0.0
  %2384 = vmatpush1.msra.mxu0 0.0
  %2385 = vmatprep.subr.mxu0 0.0
  %2386 = vmatpush1.msra.mxu0 0.0
  %2387 = vmatprep.subr.mxu0 0.0
  %2388 = vmatpush1.msra.mxu0 0.0
  %2389 = vmatprep.subr.mxu0 0.0
  %2390 = vmatpush1.msra.mxu0 0.0
  %2391 = vmatprep.subr.mxu0 0.0
  %2392 = vmatpush1.msra.mxu0 0.0
  %2393 = vmatprep.subr.mxu0 0.0
  %2394 = vmatpush1.msra.mxu0 0.0
  %2395 = vmatprep.subr.mxu0 0.0
  %2396 = vmatpush1.msra.mxu0 0.0
  %2397 = vmatprep.subr.mxu0 0.0
  %2398 = vmatpush1.msra.mxu0 0.0
  %2399 = vmatprep.subr.mxu0 0.0
  %2400 = vmatpush1.msra.mxu0 0.0
  %2401 = vmatprep.subr.mxu0 0.0
  %2402 = vmatpush1.msra.mxu0 0.0
  %2403 = vmatprep.subr.mxu0 0.0
  %2404 = vmatpush1.msra.mxu0 0.0
  %2405 = vmatprep.subr.mxu0 0.0
  %2406 = vmatpush1.msra.mxu0 0.0
  %2407 = vmatprep.subr.mxu0 0.0
  %2408 = vmatpush1.msra.mxu0 0.0
  %2409 = vmatprep.subr.mxu0 0.0
  %2410 = vmatpush1.msra.mxu0 0.0
  %2411 = vmatprep.subr.mxu0 0.0
  %2412 = vmatpush1.msra.mxu0 0.0
  %2413 = vmatprep.subr.mxu0 0.0
  %2414 = vmatpush1.msra.mxu0 0.0
  %2415 = vmatprep.subr.mxu0 0.0
  %2416 = vmatpush1.msra.mxu0 0.0
  %2417 = vmatprep.subr.mxu0 0.0
  %2418 = vmatpush1.msra.mxu0 0.0
  %2419 = vmatprep.subr.mxu0 0.0
  %2420 = vmatpush1.msra.mxu0 0.0
  %2421 = vmatprep.subr.mxu0 0.0
  %2422 = vmatpush1.msra.mxu0 0.0
  %2423 = vmatprep.subr.mxu0 0.0
  %2424 = vmatpush1.msra.mxu0 0.0
  %2425 = vmatprep.subr.mxu0 0.0
  %2426 = vmatpush1.msra.mxu0 0.0
  %2427 = vmatprep.subr.mxu0 0.0
  %2428 = vmatpush1.msra.mxu0 0.0
  %2429 = vmatprep.subr.mxu0 0.0
  %2430 = vmatpush1.msra.mxu0 0.0
  %2431 = vmatprep.subr.mxu0 0.0
  %2432 = vmatpush1.msra.mxu0 0.0
  %2433 = vmatprep.subr.mxu0 0.0
  %2434 = vmatpush1.msra.mxu0 0.0
  %2435 = vmatprep.subr.mxu0 0.0
  %2436 = vmatpush1.msra.mxu0 0.0
  %2437 = vmatprep.mubr.f32.mxu0 0.0
  %2438 = vmatmul.mubr.f32.gmra.mrb[0].mxu0 %v2371
  %v2439 = vpop.f32.mrb[0].mxu0
  %v2440 = vadd.f32 0.0, %v2439
  %v2441 = vpop.f32.mrb[0].mxu0
  %2442 = vdwg.mxu0
  %v2443 = vadd.f32 %v2367, %v2440
  %v2444 = vxor.u32 %v2443, 2147483648
  %v2445 = vmul.f32 %v2444, 1.442695
  %v2446 = vpow.pop %v2445
  %v2447 = vadd.f32 %v2446, 1.0
  %v2448 = vrcp.pop %v2447
  %v2449 = vmul.f32 1.0, %v2448
  %v2450 = vtanh.pop %v2443
  %v2451 = vmul.f32 %v2449, %v2360
  %2453 = vrot.lane.b32.xlu0 %v2450, 64
  %v2454 = vpop.permute.xlu0 %2453
  %v2456 = vmul.f32 %v2449, %v2454
  %2458 = vrot.lane.b32.xlu0 %v2456, 32
  %v2459 = vpop.permute.xlu0 %2458
  %v2461 = vadd.f32 %v2451, %v2459
  %v2462 = vtanh.pop %v2461
  %2464 = vrot.lane.b32.xlu0 %v2462, 64
  %v2465 = vpop.permute.xlu0 %2464
  %v2467 = vmul.f32 %v2449, %v2465
  %v2468 = vld [vmem:[#allocation2 + $0x1c] sm:$0x3]
  %2470 = vrot.lane.b32.xlu0 %v2467, 32
  %v2471 = vpop.permute.xlu0 %2470
  %v2472 = vsel %vm1056, %v2471, 0
  %2474 = vmatprep.subr.mxu0 0.0
  %2475 = vmatpush1.msra.mxu0 %v38
  %2476 = vmatprep.subr.mxu0 0.0
  %2477 = vmatpush1.msra.mxu0 %v39
  %2478 = vmatprep.subr.mxu0 0.0
  %2479 = vmatpush1.msra.mxu0 %v40
  %2480 = vmatprep.subr.mxu0 0.0
  %2481 = vmatpush1.msra.mxu0 %v41
  %2482 = vmatprep.subr.mxu0 0.0
  %2483 = vmatpush1.msra.mxu0 0.0
  %2484 = vmatprep.subr.mxu0 0.0
  %2485 = vmatpush1.msra.mxu0 0.0
  %2486 = vmatprep.subr.mxu0 0.0
  %2487 = vmatpush1.msra.mxu0 0.0
  %2488 = vmatprep.subr.mxu0 0.0
  %2489 = vmatpush1.msra.mxu0 0.0
  %2490 = vmatprep.subr.mxu0 0.0
  %2491 = vmatpush1.msra.mxu0 0.0
  %2492 = vmatprep.subr.mxu0 0.0
  %2493 = vmatpush1.msra.mxu0 0.0
  %2494 = vmatprep.subr.mxu0 0.0
  %2495 = vmatpush1.msra.mxu0 0.0
  %2496 = vmatprep.subr.mxu0 0.0
  %2497 = vmatpush1.msra.mxu0 0.0
  %2498 = vmatprep.subr.mxu0 0.0
  %2499 = vmatpush1.msra.mxu0 0.0
  %2500 = vmatprep.subr.mxu0 0.0
  %2501 = vmatpush1.msra.mxu0 0.0
  %2502 = vmatprep.subr.mxu0 0.0
  %2503 = vmatpush1.msra.mxu0 0.0
  %2504 = vmatprep.subr.mxu0 0.0
  %2505 = vmatpush1.msra.mxu0 0.0
  %2506 = vmatprep.subr.mxu0 0.0
  %2507 = vmatpush1.msra.mxu0 0.0
  %2508 = vmatprep.subr.mxu0 0.0
  %2509 = vmatpush1.msra.mxu0 0.0
  %2510 = vmatprep.subr.mxu0 0.0
  %2511 = vmatpush1.msra.mxu0 0.0
  %2512 = vmatprep.subr.mxu0 0.0
  %2513 = vmatpush1.msra.mxu0 0.0
  %2514 = vmatprep.subr.mxu0 0.0
  %2515 = vmatpush1.msra.mxu0 0.0
  %2516 = vmatprep.subr.mxu0 0.0
  %2517 = vmatpush1.msra.mxu0 0.0
  %2518 = vmatprep.subr.mxu0 0.0
  %2519 = vmatpush1.msra.mxu0 0.0
  %2520 = vmatprep.subr.mxu0 0.0
  %2521 = vmatpush1.msra.mxu0 0.0
  %2522 = vmatprep.subr.mxu0 0.0
  %2523 = vmatpush1.msra.mxu0 0.0
  %2524 = vmatprep.subr.mxu0 0.0
  %2525 = vmatpush1.msra.mxu0 0.0
  %2526 = vmatprep.subr.mxu0 0.0
  %2527 = vmatpush1.msra.mxu0 0.0
  %2528 = vmatprep.subr.mxu0 0.0
  %2529 = vmatpush1.msra.mxu0 0.0
  %2530 = vmatprep.subr.mxu0 0.0
  %2531 = vmatpush1.msra.mxu0 0.0
  %2532 = vmatprep.subr.mxu0 0.0
  %2533 = vmatpush1.msra.mxu0 0.0
  %2534 = vmatprep.subr.mxu0 0.0
  %2535 = vmatpush1.msra.mxu0 0.0
  %2536 = vmatprep.subr.mxu0 0.0
  %2537 = vmatpush1.msra.mxu0 0.0
  %2538 = vmatprep.mubr.f32.mxu0 0.0
  %2539 = vmatmul.mubr.f32.gmra.mrb[0].mxu0 %v2472
  %v2540 = vpop.f32.mrb[0].mxu0
  %v2541 = vadd.f32 0.0, %v2540
  %v2542 = vpop.f32.mrb[0].mxu0
  %2543 = vdwg.mxu0
  %v2544 = vadd.f32 %v2468, %v2541
  %v2545 = vxor.u32 %v2544, 2147483648
  %v2546 = vmul.f32 %v2545, 1.442695
  %v2547 = vpow.pop %v2546
  %v2548 = vadd.f32 %v2547, 1.0
  %v2549 = vrcp.pop %v2548
  %v2550 = vmul.f32 1.0, %v2549
  %v2551 = vtanh.pop %v2544
  %v2552 = vmul.f32 %v2550, %v2461
  %2554 = vrot.lane.b32.xlu0 %v2551, 64
  %v2555 = vpop.permute.xlu0 %2554
  %v2557 = vmul.f32 %v2550, %v2555
  %2559 = vrot.lane.b32.xlu0 %v2557, 32
  %v2560 = vpop.permute.xlu0 %2559
  %v2562 = vadd.f32 %v2552, %v2560
  %v2563 = vtanh.pop %v2562
  %2565 = vrot.lane.b32.xlu0 %v2563, 64
  %v2566 = vpop.permute.xlu0 %2565
  %v2568 = vmul.f32 %v2550, %v2566
  %v2569 = vld [vmem:[#allocation2 + $0x1e] sm:$0x3]
  %2571 = vrot.lane.b32.xlu0 %v2568, 32
  %v2572 = vpop.permute.xlu0 %2571
  %v2573 = vsel %vm1056, %v2572, 0
  %2575 = vmatprep.subr.mxu0 0.0
  %2576 = vmatpush1.msra.mxu0 %v38
  %2577 = vmatprep.subr.mxu0 0.0
  %2578 = vmatpush1.msra.mxu0 %v39
  %2579 = vmatprep.subr.mxu0 0.0
  %2580 = vmatpush1.msra.mxu0 %v40
  %2581 = vmatprep.subr.mxu0 0.0
  %2582 = vmatpush1.msra.mxu0 %v41
  %2583 = vmatprep.subr.mxu0 0.0
  %2584 = vmatpush1.msra.mxu0 0.0
  %2585 = vmatprep.subr.mxu0 0.0
  %2586 = vmatpush1.msra.mxu0 0.0
  %2587 = vmatprep.subr.mxu0 0.0
  %2588 = vmatpush1.msra.mxu0 0.0
  %2589 = vmatprep.subr.mxu0 0.0
  %2590 = vmatpush1.msra.mxu0 0.0
  %2591 = vmatprep.subr.mxu0 0.0
  %2592 = vmatpush1.msra.mxu0 0.0
  %2593 = vmatprep.subr.mxu0 0.0
  %2594 = vmatpush1.msra.mxu0 0.0
  %2595 = vmatprep.subr.mxu0 0.0
  %2596 = vmatpush1.msra.mxu0 0.0
  %2597 = vmatprep.subr.mxu0 0.0
  %2598 = vmatpush1.msra.mxu0 0.0
  %2599 = vmatprep.subr.mxu0 0.0
  %2600 = vmatpush1.msra.mxu0 0.0
  %2601 = vmatprep.subr.mxu0 0.0
  %2602 = vmatpush1.msra.mxu0 0.0
  %2603 = vmatprep.subr.mxu0 0.0
  %2604 = vmatpush1.msra.mxu0 0.0
  %2605 = vmatprep.subr.mxu0 0.0
  %2606 = vmatpush1.msra.mxu0 0.0
  %2607 = vmatprep.subr.mxu0 0.0
  %2608 = vmatpush1.msra.mxu0 0.0
  %2609 = vmatprep.subr.mxu0 0.0
  %2610 = vmatpush1.msra.mxu0 0.0
  %2611 = vmatprep.subr.mxu0 0.0
  %2612 = vmatpush1.msra.mxu0 0.0
  %2613 = vmatprep.subr.mxu0 0.0
  %2614 = vmatpush1.msra.mxu0 0.0
  %2615 = vmatprep.subr.mxu0 0.0
  %2616 = vmatpush1.msra.mxu0 0.0
  %2617 = vmatprep.subr.mxu0 0.0
  %2618 = vmatpush1.msra.mxu0 0.0
  %2619 = vmatprep.subr.mxu0 0.0
  %2620 = vmatpush1.msra.mxu0 0.0
  %2621 = vmatprep.subr.mxu0 0.0
  %2622 = vmatpush1.msra.mxu0 0.0
  %2623 = vmatprep.subr.mxu0 0.0
  %2624 = vmatpush1.msra.mxu0 0.0
  %2625 = vmatprep.subr.mxu0 0.0
  %2626 = vmatpush1.msra.mxu0 0.0
  %2627 = vmatprep.subr.mxu0 0.0
  %2628 = vmatpush1.msra.mxu0 0.0
  %2629 = vmatprep.subr.mxu0 0.0
  %2630 = vmatpush1.msra.mxu0 0.0
  %2631 = vmatprep.subr.mxu0 0.0
  %2632 = vmatpush1.msra.mxu0 0.0
  %2633 = vmatprep.subr.mxu0 0.0
  %2634 = vmatpush1.msra.mxu0 0.0
  %2635 = vmatprep.subr.mxu0 0.0
  %2636 = vmatpush1.msra.mxu0 0.0
  %2637 = vmatprep.subr.mxu0 0.0
  %2638 = vmatpush1.msra.mxu0 0.0
  %2639 = vmatprep.mubr.f32.mxu0 0.0
  %2640 = vmatmul.mubr.f32.gmra.mrb[0].mxu0 %v2573
  %v2641 = vpop.f32.mrb[0].mxu0
  %v2642 = vadd.f32 0.0, %v2641
  %v2643 = vpop.f32.mrb[0].mxu0
  %2644 = vdwg.mxu0
  %v2645 = vadd.f32 %v2569, %v2642
  %v2646 = vxor.u32 %v2645, 2147483648
  %v2647 = vmul.f32 %v2646, 1.442695
  %v2648 = vpow.pop %v2647
  %v2649 = vadd.f32 %v2648, 1.0
  %v2650 = vrcp.pop %v2649
  %v2651 = vmul.f32 1.0, %v2650
  %v2652 = vtanh.pop %v2645
  %v2653 = vmul.f32 %v2651, %v2562
  %2655 = vrot.lane.b32.xlu0 %v2652, 64
  %v2656 = vpop.permute.xlu0 %2655
  %v2658 = vmul.f32 %v2651, %v2656
  %2660 = vrot.lane.b32.xlu0 %v2658, 32
  %v2661 = vpop.permute.xlu0 %2660
  %v2663 = vadd.f32 %v2653, %v2661
  %v2664 = vtanh.pop %v2663
  %2666 = vrot.lane.b32.xlu0 %v2664, 64
  %v2667 = vpop.permute.xlu0 %2666
  %v2669 = vmul.f32 %v2651, %v2667
  %v2670 = vld [vmem:[#allocation2 + $0x20] sm:$0x3]
  %2672 = vrot.lane.b32.xlu0 %v2669, 32
  %v2673 = vpop.permute.xlu0 %2672
  %v2674 = vsel %vm1056, %v2673, 0
  %2676 = vmatprep.subr.mxu0 0.0
  %2677 = vmatpush1.msra.mxu0 %v38
  %2678 = vmatprep.subr.mxu0 0.0
  %2679 = vmatpush1.msra.mxu0 %v39
  %2680 = vmatprep.subr.mxu0 0.0
  %2681 = vmatpush1.msra.mxu0 %v40
  %2682 = vmatprep.subr.mxu0 0.0
  %2683 = vmatpush1.msra.mxu0 %v41
  %2684 = vmatprep.subr.mxu0 0.0
  %2685 = vmatpush1.msra.mxu0 0.0
  %2686 = vmatprep.subr.mxu0 0.0
  %2687 = vmatpush1.msra.mxu0 0.0
  %2688 = vmatprep.subr.mxu0 0.0
  %2689 = vmatpush1.msra.mxu0 0.0
  %2690 = vmatprep.subr.mxu0 0.0
  %2691 = vmatpush1.msra.mxu0 0.0
  %2692 = vmatprep.subr.mxu0 0.0
  %2693 = vmatpush1.msra.mxu0 0.0
  %2694 = vmatprep.subr.mxu0 0.0
  %2695 = vmatpush1.msra.mxu0 0.0
  %2696 = vmatprep.subr.mxu0 0.0
  %2697 = vmatpush1.msra.mxu0 0.0
  %2698 = vmatprep.subr.mxu0 0.0
  %2699 = vmatpush1.msra.mxu0 0.0
  %2700 = vmatprep.subr.mxu0 0.0
  %2701 = vmatpush1.msra.mxu0 0.0
  %2702 = vmatprep.subr.mxu0 0.0
  %2703 = vmatpush1.msra.mxu0 0.0
  %2704 = vmatprep.subr.mxu0 0.0
  %2705 = vmatpush1.msra.mxu0 0.0
  %2706 = vmatprep.subr.mxu0 0.0
  %2707 = vmatpush1.msra.mxu0 0.0
  %2708 = vmatprep.subr.mxu0 0.0
  %2709 = vmatpush1.msra.mxu0 0.0
  %2710 = vmatprep.subr.mxu0 0.0
  %2711 = vmatpush1.msra.mxu0 0.0
  %2712 = vmatprep.subr.mxu0 0.0
  %2713 = vmatpush1.msra.mxu0 0.0
  %2714 = vmatprep.subr.mxu0 0.0
  %2715 = vmatpush1.msra.mxu0 0.0
  %2716 = vmatprep.subr.mxu0 0.0
  %2717 = vmatpush1.msra.mxu0 0.0
  %2718 = vmatprep.subr.mxu0 0.0
  %2719 = vmatpush1.msra.mxu0 0.0
  %2720 = vmatprep.subr.mxu0 0.0
  %2721 = vmatpush1.msra.mxu0 0.0
  %2722 = vmatprep.subr.mxu0 0.0
  %2723 = vmatpush1.msra.mxu0 0.0
  %2724 = vmatprep.subr.mxu0 0.0
  %2725 = vmatpush1.msra.mxu0 0.0
  %2726 = vmatprep.subr.mxu0 0.0
  %2727 = vmatpush1.msra.mxu0 0.0
  %2728 = vmatprep.subr.mxu0 0.0
  %2729 = vmatpush1.msra.mxu0 0.0
  %2730 = vmatprep.subr.mxu0 0.0
  %2731 = vmatpush1.msra.mxu0 0.0
  %2732 = vmatprep.subr.mxu0 0.0
  %2733 = vmatpush1.msra.mxu0 0.0
  %2734 = vmatprep.subr.mxu0 0.0
  %2735 = vmatpush1.msra.mxu0 0.0
  %2736 = vmatprep.subr.mxu0 0.0
  %2737 = vmatpush1.msra.mxu0 0.0
  %2738 = vmatprep.subr.mxu0 0.0
  %2739 = vmatpush1.msra.mxu0 0.0
  %2740 = vmatprep.mubr.f32.mxu0 0.0
  %2741 = vmatmul.mubr.f32.gmra.mrb[0].mxu0 %v2674
  %v2742 = vpop.f32.mrb[0].mxu0
  %v2743 = vadd.f32 0.0, %v2742
  %v2744 = vpop.f32.mrb[0].mxu0
  %2745 = vdwg.mxu0
  %v2746 = vadd.f32 %v2670, %v2743
  %v2747 = vxor.u32 %v2746, 2147483648
  %v2748 = vmul.f32 %v2747, 1.442695
  %v2749 = vpow.pop %v2748
  %v2750 = vadd.f32 %v2749, 1.0
  %v2751 = vrcp.pop %v2750
  %v2752 = vmul.f32 1.0, %v2751
  %v2753 = vtanh.pop %v2746
  %v2754 = vmul.f32 %v2752, %v2663
  %2756 = vrot.lane.b32.xlu0 %v2753, 64
  %v2757 = vpop.permute.xlu0 %2756
  %v2759 = vmul.f32 %v2752, %v2757
  %2761 = vrot.lane.b32.xlu0 %v2759, 32
  %v2762 = vpop.permute.xlu0 %2761
  %v2764 = vadd.f32 %v2754, %v2762
  %v2765 = vtanh.pop %v2764
  %2767 = vrot.lane.b32.xlu0 %v2765, 64
  %v2768 = vpop.permute.xlu0 %2767
  %v2770 = vmul.f32 %v2752, %v2768
  %v2771 = vld [vmem:[#allocation2 + $0x22] sm:$0x3]
  %2773 = vrot.lane.b32.xlu0 %v2770, 32
  %v2774 = vpop.permute.xlu0 %2773
  %v2775 = vsel %vm1056, %v2774, 0
  %2777 = vmatprep.subr.mxu0 0.0
  %2778 = vmatpush1.msra.mxu0 %v38
  %2779 = vmatprep.subr.mxu0 0.0
  %2780 = vmatpush1.msra.mxu0 %v39
  %2781 = vmatprep.subr.mxu0 0.0
  %2782 = vmatpush1.msra.mxu0 %v40
  %2783 = vmatprep.subr.mxu0 0.0
  %2784 = vmatpush1.msra.mxu0 %v41
  %2785 = vmatprep.subr.mxu0 0.0
  %2786 = vmatpush1.msra.mxu0 0.0
  %2787 = vmatprep.subr.mxu0 0.0
  %2788 = vmatpush1.msra.mxu0 0.0
  %2789 = vmatprep.subr.mxu0 0.0
  %2790 = vmatpush1.msra.mxu0 0.0
  %2791 = vmatprep.subr.mxu0 0.0
  %2792 = vmatpush1.msra.mxu0 0.0
  %2793 = vmatprep.subr.mxu0 0.0
  %2794 = vmatpush1.msra.mxu0 0.0
  %2795 = vmatprep.subr.mxu0 0.0
  %2796 = vmatpush1.msra.mxu0 0.0
  %2797 = vmatprep.subr.mxu0 0.0
  %2798 = vmatpush1.msra.mxu0 0.0
  %2799 = vmatprep.subr.mxu0 0.0
  %2800 = vmatpush1.msra.mxu0 0.0
  %2801 = vmatprep.subr.mxu0 0.0
  %2802 = vmatpush1.msra.mxu0 0.0
  %2803 = vmatprep.subr.mxu0 0.0
  %2804 = vmatpush1.msra.mxu0 0.0
  %2805 = vmatprep.subr.mxu0 0.0
  %2806 = vmatpush1.msra.mxu0 0.0
  %2807 = vmatprep.subr.mxu0 0.0
  %2808 = vmatpush1.msra.mxu0 0.0
  %2809 = vmatprep.subr.mxu0 0.0
  %2810 = vmatpush1.msra.mxu0 0.0
  %2811 = vmatprep.subr.mxu0 0.0
  %2812 = vmatpush1.msra.mxu0 0.0
  %2813 = vmatprep.subr.mxu0 0.0
  %2814 = vmatpush1.msra.mxu0 0.0
  %2815 = vmatprep.subr.mxu0 0.0
  %2816 = vmatpush1.msra.mxu0 0.0
  %2817 = vmatprep.subr.mxu0 0.0
  %2818 = vmatpush1.msra.mxu0 0.0
  %2819 = vmatprep.subr.mxu0 0.0
  %2820 = vmatpush1.msra.mxu0 0.0
  %2821 = vmatprep.subr.mxu0 0.0
  %2822 = vmatpush1.msra.mxu0 0.0
  %2823 = vmatprep.subr.mxu0 0.0
  %2824 = vmatpush1.msra.mxu0 0.0
  %2825 = vmatprep.subr.mxu0 0.0
  %2826 = vmatpush1.msra.mxu0 0.0
  %2827 = vmatprep.subr.mxu0 0.0
  %2828 = vmatpush1.msra.mxu0 0.0
  %2829 = vmatprep.subr.mxu0 0.0
  %2830 = vmatpush1.msra.mxu0 0.0
  %2831 = vmatprep.subr.mxu0 0.0
  %2832 = vmatpush1.msra.mxu0 0.0
  %2833 = vmatprep.subr.mxu0 0.0
  %2834 = vmatpush1.msra.mxu0 0.0
  %2835 = vmatprep.subr.mxu0 0.0
  %2836 = vmatpush1.msra.mxu0 0.0
  %2837 = vmatprep.subr.mxu0 0.0
  %2838 = vmatpush1.msra.mxu0 0.0
  %2839 = vmatprep.subr.mxu0 0.0
  %2840 = vmatpush1.msra.mxu0 0.0
  %2841 = vmatprep.mubr.f32.mxu0 0.0
  %2842 = vmatmul.mubr.f32.gmra.mrb[0].mxu0 %v2775
  %v2843 = vpop.f32.mrb[0].mxu0
  %v2844 = vadd.f32 0.0, %v2843
  %v2845 = vpop.f32.mrb[0].mxu0
  %2846 = vdwg.mxu0
  %v2847 = vadd.f32 %v2771, %v2844
  %v2848 = vxor.u32 %v2847, 2147483648
  %v2849 = vmul.f32 %v2848, 1.442695
  %v2850 = vpow.pop %v2849
  %v2851 = vadd.f32 %v2850, 1.0
  %v2852 = vrcp.pop %v2851
  %v2853 = vmul.f32 1.0, %v2852
  %v2854 = vtanh.pop %v2847
  %v2855 = vmul.f32 %v2853, %v2764
  %2857 = vrot.lane.b32.xlu0 %v2854, 64
  %v2858 = vpop.permute.xlu0 %2857
  %v2860 = vmul.f32 %v2853, %v2858
  %2862 = vrot.lane.b32.xlu0 %v2860, 32
  %v2863 = vpop.permute.xlu0 %2862
  %v2865 = vadd.f32 %v2855, %v2863
  %v2866 = vtanh.pop %v2865
  %2868 = vrot.lane.b32.xlu0 %v2866, 64
  %v2869 = vpop.permute.xlu0 %2868
  %v2871 = vmul.f32 %v2853, %v2869
  %v2872 = vld [vmem:[#allocation2 + $0x24] sm:$0x3]
  %2874 = vrot.lane.b32.xlu0 %v2871, 32
  %v2875 = vpop.permute.xlu0 %2874
  %v2876 = vsel %vm1056, %v2875, 0
  %2878 = vmatprep.subr.mxu0 0.0
  %2879 = vmatpush1.msra.mxu0 %v38
  %2880 = vmatprep.subr.mxu0 0.0
  %2881 = vmatpush1.msra.mxu0 %v39
  %2882 = vmatprep.subr.mxu0 0.0
  %2883 = vmatpush1.msra.mxu0 %v40
  %2884 = vmatprep.subr.mxu0 0.0
  %2885 = vmatpush1.msra.mxu0 %v41
  %2886 = vmatprep.subr.mxu0 0.0
  %2887 = vmatpush1.msra.mxu0 0.0
  %2888 = vmatprep.subr.mxu0 0.0
  %2889 = vmatpush1.msra.mxu0 0.0
  %2890 = vmatprep.subr.mxu0 0.0
  %2891 = vmatpush1.msra.mxu0 0.0
  %2892 = vmatprep.subr.mxu0 0.0
  %2893 = vmatpush1.msra.mxu0 0.0
  %2894 = vmatprep.subr.mxu0 0.0
  %2895 = vmatpush1.msra.mxu0 0.0
  %2896 = vmatprep.subr.mxu0 0.0
  %2897 = vmatpush1.msra.mxu0 0.0
  %2898 = vmatprep.subr.mxu0 0.0
  %2899 = vmatpush1.msra.mxu0 0.0
  %2900 = vmatprep.subr.mxu0 0.0
  %2901 = vmatpush1.msra.mxu0 0.0
  %2902 = vmatprep.subr.mxu0 0.0
  %2903 = vmatpush1.msra.mxu0 0.0
  %2904 = vmatprep.subr.mxu0 0.0
  %2905 = vmatpush1.msra.mxu0 0.0
  %2906 = vmatprep.subr.mxu0 0.0
  %2907 = vmatpush1.msra.mxu0 0.0
  %2908 = vmatprep.subr.mxu0 0.0
  %2909 = vmatpush1.msra.mxu0 0.0
  %2910 = vmatprep.subr.mxu0 0.0
  %2911 = vmatpush1.msra.mxu0 0.0
  %2912 = vmatprep.subr.mxu0 0.0
  %2913 = vmatpush1.msra.mxu0 0.0
  %2914 = vmatprep.subr.mxu0 0.0
  %2915 = vmatpush1.msra.mxu0 0.0
  %2916 = vmatprep.subr.mxu0 0.0
  %2917 = vmatpush1.msra.mxu0 0.0
  %2918 = vmatprep.subr.mxu0 0.0
  %2919 = vmatpush1.msra.mxu0 0.0
  %2920 = vmatprep.subr.mxu0 0.0
  %2921 = vmatpush1.msra.mxu0 0.0
  %2922 = vmatprep.subr.mxu0 0.0
  %2923 = vmatpush1.msra.mxu0 0.0
  %2924 = vmatprep.subr.mxu0 0.0
  %2925 = vmatpush1.msra.mxu0 0.0
  %2926 = vmatprep.subr.mxu0 0.0
  %2927 = vmatpush1.msra.mxu0 0.0
  %2928 = vmatprep.subr.mxu0 0.0
  %2929 = vmatpush1.msra.mxu0 0.0
  %2930 = vmatprep.subr.mxu0 0.0
  %2931 = vmatpush1.msra.mxu0 0.0
  %2932 = vmatprep.subr.mxu0 0.0
  %2933 = vmatpush1.msra.mxu0 0.0
  %2934 = vmatprep.subr.mxu0 0.0
  %2935 = vmatpush1.msra.mxu0 0.0
  %2936 = vmatprep.subr.mxu0 0.0
  %2937 = vmatpush1.msra.mxu0 0.0
  %2938 = vmatprep.subr.mxu0 0.0
  %2939 = vmatpush1.msra.mxu0 0.0
  %2940 = vmatprep.subr.mxu0 0.0
  %2941 = vmatpush1.msra.mxu0 0.0
  %2942 = vmatprep.mubr.f32.mxu0 0.0
  %2943 = vmatmul.mubr.f32.gmra.mrb[0].mxu0 %v2876
  %v2944 = vpop.f32.mrb[0].mxu0
  %v2945 = vadd.f32 0.0, %v2944
  %v2946 = vpop.f32.mrb[0].mxu0
  %2947 = vdwg.mxu0
  %v2948 = vadd.f32 %v2872, %v2945
  %v2949 = vxor.u32 %v2948, 2147483648
  %v2950 = vmul.f32 %v2949, 1.442695
  %v2951 = vpow.pop %v2950
  %v2952 = vadd.f32 %v2951, 1.0
  %v2953 = vrcp.pop %v2952
  %v2954 = vmul.f32 1.0, %v2953
  %v2955 = vtanh.pop %v2948
  %v2956 = vmul.f32 %v2954, %v2865
  %2958 = vrot.lane.b32.xlu0 %v2955, 64
  %v2959 = vpop.permute.xlu0 %2958
  %v2961 = vmul.f32 %v2954, %v2959
  %2963 = vrot.lane.b32.xlu0 %v2961, 32
  %v2964 = vpop.permute.xlu0 %2963
  %v2966 = vadd.f32 %v2956, %v2964
  %v2967 = vtanh.pop %v2966
  %2969 = vrot.lane.b32.xlu0 %v2967, 64
  %v2970 = vpop.permute.xlu0 %2969
  %v2972 = vmul.f32 %v2954, %v2970
  %v2973 = vld [vmem:[#allocation2 + $0x26] sm:$0x3]
  %2975 = vrot.lane.b32.xlu0 %v2972, 32
  %v2976 = vpop.permute.xlu0 %2975
  %v2977 = vsel %vm1056, %v2976, 0
  %2979 = vmatprep.subr.mxu0 0.0
  %2980 = vmatpush1.msra.mxu0 %v38
  %2981 = vmatprep.subr.mxu0 0.0
  %2982 = vmatpush1.msra.mxu0 %v39
  %2983 = vmatprep.subr.mxu0 0.0
  %2984 = vmatpush1.msra.mxu0 %v40
  %2985 = vmatprep.subr.mxu0 0.0
  %2986 = vmatpush1.msra.mxu0 %v41
  %2987 = vmatprep.subr.mxu0 0.0
  %2988 = vmatpush1.msra.mxu0 0.0
  %2989 = vmatprep.subr.mxu0 0.0
  %2990 = vmatpush1.msra.mxu0 0.0
  %2991 = vmatprep.subr.mxu0 0.0
  %2992 = vmatpush1.msra.mxu0 0.0
  %2993 = vmatprep.subr.mxu0 0.0
  %2994 = vmatpush1.msra.mxu0 0.0
  %2995 = vmatprep.subr.mxu0 0.0
  %2996 = vmatpush1.msra.mxu0 0.0
  %2997 = vmatprep.subr.mxu0 0.0
  %2998 = vmatpush1.msra.mxu0 0.0
  %2999 = vmatprep.subr.mxu0 0.0
  %3000 = vmatpush1.msra.mxu0 0.0
  %3001 = vmatprep.subr.mxu0 0.0
  %3002 = vmatpush1.msra.mxu0 0.0
  %3003 = vmatprep.subr.mxu0 0.0
  %3004 = vmatpush1.msra.mxu0 0.0
  %3005 = vmatprep.subr.mxu0 0.0
  %3006 = vmatpush1.msra.mxu0 0.0
  %3007 = vmatprep.subr.mxu0 0.0
  %3008 = vmatpush1.msra.mxu0 0.0
  %3009 = vmatprep.subr.mxu0 0.0
  %3010 = vmatpush1.msra.mxu0 0.0
  %3011 = vmatprep.subr.mxu0 0.0
  %3012 = vmatpush1.msra.mxu0 0.0
  %3013 = vmatprep.subr.mxu0 0.0
  %3014 = vmatpush1.msra.mxu0 0.0
  %3015 = vmatprep.subr.mxu0 0.0
  %3016 = vmatpush1.msra.mxu0 0.0
  %3017 = vmatprep.subr.mxu0 0.0
  %3018 = vmatpush1.msra.mxu0 0.0
  %3019 = vmatprep.subr.mxu0 0.0
  %3020 = vmatpush1.msra.mxu0 0.0
  %3021 = vmatprep.subr.mxu0 0.0
  %3022 = vmatpush1.msra.mxu0 0.0
  %3023 = vmatprep.subr.mxu0 0.0
  %3024 = vmatpush1.msra.mxu0 0.0
  %3025 = vmatprep.subr.mxu0 0.0
  %3026 = vmatpush1.msra.mxu0 0.0
  %3027 = vmatprep.subr.mxu0 0.0
  %3028 = vmatpush1.msra.mxu0 0.0
  %3029 = vmatprep.subr.mxu0 0.0
  %3030 = vmatpush1.msra.mxu0 0.0
  %3031 = vmatprep.subr.mxu0 0.0
  %3032 = vmatpush1.msra.mxu0 0.0
  %3033 = vmatprep.subr.mxu0 0.0
  %3034 = vmatpush1.msra.mxu0 0.0
  %3035 = vmatprep.subr.mxu0 0.0
  %3036 = vmatpush1.msra.mxu0 0.0
  %3037 = vmatprep.subr.mxu0 0.0
  %3038 = vmatpush1.msra.mxu0 0.0
  %3039 = vmatprep.subr.mxu0 0.0
  %3040 = vmatpush1.msra.mxu0 0.0
  %3041 = vmatprep.subr.mxu0 0.0
  %3042 = vmatpush1.msra.mxu0 0.0
  %3043 = vmatprep.mubr.f32.mxu0 0.0
  %3044 = vmatmul.mubr.f32.gmra.mrb[0].mxu0 %v2977
  %v3045 = vpop.f32.mrb[0].mxu0
  %v3046 = vadd.f32 0.0, %v3045
  %v3047 = vpop.f32.mrb[0].mxu0
  %3048 = vdwg.mxu0
  %v3049 = vadd.f32 %v2973, %v3046
  %v3050 = vxor.u32 %v3049, 2147483648
  %v3051 = vmul.f32 %v3050, 1.442695
  %v3052 = vpow.pop %v3051
  %v3053 = vadd.f32 %v3052, 1.0
  %v3054 = vrcp.pop %v3053
  %v3055 = vmul.f32 1.0, %v3054
  %v3056 = vtanh.pop %v3049
  %v3057 = vmul.f32 %v3055, %v2966
  %3059 = vrot.lane.b32.xlu0 %v3056, 64
  %v3060 = vpop.permute.xlu0 %3059
  %v3062 = vmul.f32 %v3055, %v3060
  %3064 = vrot.lane.b32.xlu0 %v3062, 32
  %v3065 = vpop.permute.xlu0 %3064
  %v3067 = vadd.f32 %v3057, %v3065
  %v3068 = vtanh.pop %v3067
  %3070 = vrot.lane.b32.xlu0 %v3068, 64
  %v3071 = vpop.permute.xlu0 %3070
  %v3073 = vmul.f32 %v3055, %v3071
  %v3074 = vlaneseq
  %v3075 = vshrl.u32 %v3074, 7
  %v3076 = vsub.s32 0, %v3075
  %v3077 = vrot.slane %v46, %v3076
  %3079 = vrot.lane.b32.xlu0 %v3073, 32
  %v3080 = vpop.permute.xlu0 %3079
  %v3081 = vsel %vm1056, %v3080, 0
  %3083 = vmatprep.subr.mxu0 0.0
  %3084 = vmatpush1.msra.mxu0 %v42
  %3085 = vmatprep.subr.mxu0 0.0
  %3086 = vmatpush1.msra.mxu0 %v43
  %3087 = vmatprep.subr.mxu0 0.0
  %3088 = vmatpush1.msra.mxu0 %v44
  %3089 = vmatprep.subr.mxu0 0.0
  %3090 = vmatpush1.msra.mxu0 %v45
  %3091 = vmatprep.subr.mxu0 0.0
  %3092 = vmatpush1.msra.mxu0 0.0
  %3093 = vmatprep.subr.mxu0 0.0
  %3094 = vmatpush1.msra.mxu0 0.0
  %3095 = vmatprep.subr.mxu0 0.0
  %3096 = vmatpush1.msra.mxu0 0.0
  %3097 = vmatprep.subr.mxu0 0.0
  %3098 = vmatpush1.msra.mxu0 0.0
  %3099 = vmatprep.subr.mxu0 0.0
  %3100 = vmatpush1.msra.mxu0 0.0
  %3101 = vmatprep.subr.mxu0 0.0
  %3102 = vmatpush1.msra.mxu0 0.0
  %3103 = vmatprep.subr.mxu0 0.0
  %3104 = vmatpush1.msra.mxu0 0.0
  %3105 = vmatprep.subr.mxu0 0.0
  %3106 = vmatpush1.msra.mxu0 0.0
  %3107 = vmatprep.subr.mxu0 0.0
  %3108 = vmatpush1.msra.mxu0 0.0
  %3109 = vmatprep.subr.mxu0 0.0
  %3110 = vmatpush1.msra.mxu0 0.0
  %3111 = vmatprep.subr.mxu0 0.0
  %3112 = vmatpush1.msra.mxu0 0.0
  %3113 = vmatprep.subr.mxu0 0.0
  %3114 = vmatpush1.msra.mxu0 0.0
  %3115 = vmatprep.subr.mxu0 0.0
  %3116 = vmatpush1.msra.mxu0 0.0
  %3117 = vmatprep.subr.mxu0 0.0
  %3118 = vmatpush1.msra.mxu0 0.0
  %3119 = vmatprep.subr.mxu0 0.0
  %3120 = vmatpush1.msra.mxu0 0.0
  %3121 = vmatprep.subr.mxu0 0.0
  %3122 = vmatpush1.msra.mxu0 0.0
  %3123 = vmatprep.subr.mxu0 0.0
  %3124 = vmatpush1.msra.mxu0 0.0
  %3125 = vmatprep.subr.mxu0 0.0
  %3126 = vmatpush1.msra.mxu0 0.0
  %3127 = vmatprep.subr.mxu0 0.0
  %3128 = vmatpush1.msra.mxu0 0.0
  %3129 = vmatprep.subr.mxu0 0.0
  %3130 = vmatpush1.msra.mxu0 0.0
  %3131 = vmatprep.subr.mxu0 0.0
  %3132 = vmatpush1.msra.mxu0 0.0
  %3133 = vmatprep.subr.mxu0 0.0
  %3134 = vmatpush1.msra.mxu0 0.0
  %3135 = vmatprep.subr.mxu0 0.0
  %3136 = vmatpush1.msra.mxu0 0.0
  %3137 = vmatprep.subr.mxu0 0.0
  %3138 = vmatpush1.msra.mxu0 0.0
  %3139 = vmatprep.subr.mxu0 0.0
  %3140 = vmatpush1.msra.mxu0 0.0
  %3141 = vmatprep.subr.mxu0 0.0
  %3142 = vmatpush1.msra.mxu0 0.0
  %3143 = vmatprep.subr.mxu0 0.0
  %3144 = vmatpush1.msra.mxu0 0.0
  %3145 = vmatprep.subr.mxu0 0.0
  %3146 = vmatpush1.msra.mxu0 0.0
  %3147 = vmatprep.mubr.f32.mxu0 0.0
  %3148 = vmatmul.mubr.f32.gmra.mrb[0].mxu0 %v3081
  %v3149 = vpop.f32.mrb[0].mxu0
  %v3150 = vadd.f32 %v3077, %v3149
  %v3151 = vpop.f32.mrb[0].mxu0
  %3152 = vdwg.mxu0
  %v3153 = vmax.f32 %v3150, 0.0
  %v3154 = vlaneseq
  %v3155 = vshrl.u32 %v3154, 7
  %v3156 = vsub.s32 0, %v3155
  %v3157 = vrot.slane %v51, %v3156
  %v3159 = vsel %vm1056, %v3153, 0
  %3161 = vmatprep.subr.mxu0 0.0
  %3162 = vmatpush1.msra.mxu0 %v47
  %3163 = vmatprep.subr.mxu0 0.0
  %3164 = vmatpush1.msra.mxu0 %v48
  %3165 = vmatprep.subr.mxu0 0.0
  %3166 = vmatpush1.msra.mxu0 %v49
  %3167 = vmatprep.subr.mxu0 0.0
  %3168 = vmatpush1.msra.mxu0 %v50
  %3169 = vmatprep.subr.mxu0 0.0
  %3170 = vmatpush1.msra.mxu0 0.0
  %3171 = vmatprep.subr.mxu0 0.0
  %3172 = vmatpush1.msra.mxu0 0.0
  %3173 = vmatprep.subr.mxu0 0.0
  %3174 = vmatpush1.msra.mxu0 0.0
  %3175 = vmatprep.subr.mxu0 0.0
  %3176 = vmatpush1.msra.mxu0 0.0
  %3177 = vmatprep.subr.mxu0 0.0
  %3178 = vmatpush1.msra.mxu0 0.0
  %3179 = vmatprep.subr.mxu0 0.0
  %3180 = vmatpush1.msra.mxu0 0.0
  %3181 = vmatprep.subr.mxu0 0.0
  %3182 = vmatpush1.msra.mxu0 0.0
  %3183 = vmatprep.subr.mxu0 0.0
  %3184 = vmatpush1.msra.mxu0 0.0
  %3185 = vmatprep.subr.mxu0 0.0
  %3186 = vmatpush1.msra.mxu0 0.0
  %3187 = vmatprep.subr.mxu0 0.0
  %3188 = vmatpush1.msra.mxu0 0.0
  %3189 = vmatprep.subr.mxu0 0.0
  %3190 = vmatpush1.msra.mxu0 0.0
  %3191 = vmatprep.subr.mxu0 0.0
  %3192 = vmatpush1.msra.mxu0 0.0
  %3193 = vmatprep.subr.mxu0 0.0
  %3194 = vmatpush1.msra.mxu0 0.0
  %3195 = vmatprep.subr.mxu0 0.0
  %3196 = vmatpush1.msra.mxu0 0.0
  %3197 = vmatprep.subr.mxu0 0.0
  %3198 = vmatpush1.msra.mxu0 0.0
  %3199 = vmatprep.subr.mxu0 0.0
  %3200 = vmatpush1.msra.mxu0 0.0
  %3201 = vmatprep.subr.mxu0 0.0
  %3202 = vmatpush1.msra.mxu0 0.0
  %3203 = vmatprep.subr.mxu0 0.0
  %3204 = vmatpush1.msra.mxu0 0.0
  %3205 = vmatprep.subr.mxu0 0.0
  %3206 = vmatpush1.msra.mxu0 0.0
  %3207 = vmatprep.subr.mxu0 0.0
  %3208 = vmatpush1.msra.mxu0 0.0
  %3209 = vmatprep.subr.mxu0 0.0
  %3210 = vmatpush1.msra.mxu0 0.0
  %3211 = vmatprep.subr.mxu0 0.0
  %3212 = vmatpush1.msra.mxu0 0.0
  %3213 = vmatprep.subr.mxu0 0.0
  %3214 = vmatpush1.msra.mxu0 0.0
  %3215 = vmatprep.subr.mxu0 0.0
  %3216 = vmatpush1.msra.mxu0 0.0
  %3217 = vmatprep.subr.mxu0 0.0
  %3218 = vmatpush1.msra.mxu0 0.0
  %3219 = vmatprep.subr.mxu0 0.0
  %3220 = vmatpush1.msra.mxu0 0.0
  %3221 = vmatprep.subr.mxu0 0.0
  %3222 = vmatpush1.msra.mxu0 0.0
  %3223 = vmatprep.subr.mxu0 0.0
  %3224 = vmatpush1.msra.mxu0 0.0
  %3225 = vmatprep.mubr.f32.mxu0 0.0
  %3226 = vmatmul.mubr.f32.gmra.mrb[0].mxu0 %v3159
  %v3227 = vpop.f32.mrb[0].mxu0
  %v3228 = vadd.f32 %v3157, %v3227
  %v3229 = vpop.f32.mrb[0].mxu0
  %3230 = vdwg.mxu0
  %v3231 = vmax.f32 %v3228, 0.0
  %v3232 = vlaneseq
  %v3233 = vshrl.u32 %v3232, 7
  %v3234 = vsub.s32 0, %v3233
  %v3235 = vrot.slane %v56, %v3234
  %v3237 = vsel %vm1056, %v3231, 0
  %3239 = vmatprep.subr.mxu0 0.0
  %3240 = vmatpush1.msra.mxu0 %v52
  %3241 = vmatprep.subr.mxu0 0.0
  %3242 = vmatpush1.msra.mxu0 %v53
  %3243 = vmatprep.subr.mxu0 0.0
  %3244 = vmatpush1.msra.mxu0 %v54
  %3245 = vmatprep.subr.mxu0 0.0
  %3246 = vmatpush1.msra.mxu0 %v55
  %3247 = vmatprep.subr.mxu0 0.0
  %3248 = vmatpush1.msra.mxu0 0.0
  %3249 = vmatprep.subr.mxu0 0.0
  %3250 = vmatpush1.msra.mxu0 0.0
  %3251 = vmatprep.subr.mxu0 0.0
  %3252 = vmatpush1.msra.mxu0 0.0
  %3253 = vmatprep.subr.mxu0 0.0
  %3254 = vmatpush1.msra.mxu0 0.0
  %3255 = vmatprep.subr.mxu0 0.0
  %3256 = vmatpush1.msra.mxu0 0.0
  %3257 = vmatprep.subr.mxu0 0.0
  %3258 = vmatpush1.msra.mxu0 0.0
  %3259 = vmatprep.subr.mxu0 0.0
  %3260 = vmatpush1.msra.mxu0 0.0
  %3261 = vmatprep.subr.mxu0 0.0
  %3262 = vmatpush1.msra.mxu0 0.0
  %3263 = vmatprep.subr.mxu0 0.0
  %3264 = vmatpush1.msra.mxu0 0.0
  %3265 = vmatprep.subr.mxu0 0.0
  %3266 = vmatpush1.msra.mxu0 0.0
  %3267 = vmatprep.subr.mxu0 0.0
  %3268 = vmatpush1.msra.mxu0 0.0
  %3269 = vmatprep.subr.mxu0 0.0
  %3270 = vmatpush1.msra.mxu0 0.0
  %3271 = vmatprep.subr.mxu0 0.0
  %3272 = vmatpush1.msra.mxu0 0.0
  %3273 = vmatprep.subr.mxu0 0.0
  %3274 = vmatpush1.msra.mxu0 0.0
  %3275 = vmatprep.subr.mxu0 0.0
  %3276 = vmatpush1.msra.mxu0 0.0
  %3277 = vmatprep.subr.mxu0 0.0
  %3278 = vmatpush1.msra.mxu0 0.0
  %3279 = vmatprep.subr.mxu0 0.0
  %3280 = vmatpush1.msra.mxu0 0.0
  %3281 = vmatprep.subr.mxu0 0.0
  %3282 = vmatpush1.msra.mxu0 0.0
  %3283 = vmatprep.subr.mxu0 0.0
  %3284 = vmatpush1.msra.mxu0 0.0
  %3285 = vmatprep.subr.mxu0 0.0
  %3286 = vmatpush1.msra.mxu0 0.0
  %3287 = vmatprep.subr.mxu0 0.0
  %3288 = vmatpush1.msra.mxu0 0.0
  %3289 = vmatprep.subr.mxu0 0.0
  %3290 = vmatpush1.msra.mxu0 0.0
  %3291 = vmatprep.subr.mxu0 0.0
  %3292 = vmatpush1.msra.mxu0 0.0
  %3293 = vmatprep.subr.mxu0 0.0
  %3294 = vmatpush1.msra.mxu0 0.0
  %3295 = vmatprep.subr.mxu0 0.0
  %3296 = vmatpush1.msra.mxu0 0.0
  %3297 = vmatprep.subr.mxu0 0.0
  %3298 = vmatpush1.msra.mxu0 0.0
  %3299 = vmatprep.subr.mxu0 0.0
  %3300 = vmatpush1.msra.mxu0 0.0
  %3301 = vmatprep.subr.mxu0 0.0
  %3302 = vmatpush1.msra.mxu0 0.0
  %3303 = vmatprep.mubr.f32.mxu0 0.0
  %3304 = vmatmul.mubr.f32.gmra.mrb[0].mxu0 %v3237
  %v3305 = vpop.f32.mrb[0].mxu0
  %v3306 = vadd.f32 %v3235, %v3305
  %v3307 = vpop.f32.mrb[0].mxu0
  %3308 = vdwg.mxu0
  %v3309 = vmax.f32 %v3306, -20.0
  %v3310 = vmin.f32 %v3309, 2.0
  %v3311 = vmul.f32 %v3310, 1.442695
  %v3312 = vpow.pop %v3311
  %vm3313 = vcmp.ge.s32.totalorder %v308, 4
  %v3314 = vsel %vm3313, %v3312, %v3306
  %vm3315 = vcmask 58368
  %3316 = vst.msk [vmem:[%s4] sm:$0x3] %vm3315, %v3314
  // Predicated region
  $region18: #{policy_forward.1} parent=0 // pred_check
    _
  $region19: #{policy_forward.1} parent=0 // pred_check_branch
    %3318 = sbr.rel (0) target = $region21
  $region20: #{policy_forward.1} parent=0 // pred_region
    _
  $region21: #{policy_forward.1} parent=0 // pred_fallthru
    _
  // Predicated region
  $region22: #{policy_forward.1} parent=0 // pred_check
    _
  $region23: #{policy_forward.1} parent=0 // pred_check_branch
    %3320 = sbr.rel (0) target = $region25
  $region24: #{policy_forward.1} parent=0 // pred_region
    _
  $region25: #{policy_forward.1} parent=0 // pred_fallthru
    _

</llo_original>
